<compile_context>
chip_gen: v7x
topology: tpu7x:2x2x1
jax: 0.10.0
libtpu: 0.0.40
codegen_flags: <defaults>
</compile_context>

<pallas_src>
import jax
import jax.numpy as jnp
from jax import lax
from jax.experimental import pallas as pl
from jax.experimental.pallas import tpu as pltpu

K = 3  # conv kernel size


# ----------------------------------------------------------------------------
# Trace-time weight expansion: (K, K, Cin, Cout) HWIO conv weight ->
# (K, W*Cin, W*Cout) banded matmul weights with
#   M[dy, w_in*Cin+ci, w_out*Cout+co] = wk[dy, w_in - w_out + 1, ci, co]
# (zero where the horizontal tap falls outside the kernel => SAME pad in W).
# ----------------------------------------------------------------------------
def _expand_conv_weight(wk, W):
    k, _, cin, cout = wk.shape
    w_in = jnp.arange(W)[:, None]
    w_out = jnp.arange(W)[None, :]
    dx = w_in - w_out + (k // 2)                            # (W, W)
    valid = (dx >= 0) & (dx < k)
    m = wk[:, jnp.clip(dx, 0, k - 1)]                       # (K, W, W, Cin, Cout)
    m = m * valid[None, :, :, None, None].astype(wk.dtype)
    # -> (K, w_in, ci, w_out, co) -> (K, W*Cin, W*Cout)
    return m.transpose(0, 1, 3, 2, 4).reshape(k, W * cin, W * cout)


# ----------------------------------------------------------------------------
# Fused fractIn2 kernel: B images per grid step, all 6 convs in one body.
# ----------------------------------------------------------------------------
def _make_kernel(H, BH, WC):
    f32 = jnp.float32
    bf16 = jnp.bfloat16

    def kernel(x_ref, mw_ref, b_ref, out_ref):
        # Per-image row masks: SAME pad along H and no leakage between the B
        # images stacked along the sublane axis.
        row = jax.lax.broadcasted_iota(jnp.int32, (BH, WC), 0) % H
        not_top = row != 0          # rows whose dy=0 tap is inside the image
        not_bot = row != H - 1      # rows whose dy=2 tap is inside the image

        def conv(a, layer, relu):
            # Vertical taps via XLU roll + VPU mask (no MXU shift matmuls).
            up = jnp.where(not_top, pltpu.roll(a, 1, axis=0), 0.0)       # a[i-1]
            dn = jnp.where(not_bot, pltpu.roll(a, BH - 1, axis=0), 0.0)  # a[i+1]
            # Horizontal taps + channel mix: one fat bf16 MXU contraction per
            # vertical tap, f32 accumulation, bias folded into the init.
            acc = jnp.dot(a.astype(bf16), mw_ref[layer, 1],
                          preferred_element_type=f32) + b_ref[layer]
            acc = acc + jnp.dot(up.astype(bf16), mw_ref[layer, 0],
                                preferred_element_type=f32)
            acc = acc + jnp.dot(dn.astype(bf16), mw_ref[layer, 2],
                                preferred_element_type=f32)
            return jnp.maximum(acc, 0.0) if relu else acc

        x0 = x_ref[...].astype(f32)
        # fract1 -> fract2 chain
        h1 = conv(x0, 0, True)
        r1 = conv(h1, 1, False) + x0                        # RCAB1(x)
        h2 = conv(r1, 2, True)
        r2 = conv(h2, 3, False) + r1                        # RCAB2(RCAB1(x))
        # fract3 branch
        h3 = conv(x0, 4, True)
        o3 = conv(h3, 5, False) + x0                        # RCAB3(x)
        # concat([res + x, out], channel dim): two halves of one output block
        out_ref[0] = (r2 + x0).astype(out_ref.dtype)        # channels [0, C)
        out_ref[1] = o3.astype(out_ref.dtype)               # channels [C, 2C)

    return kernel


def _pick_image_batch(N, H, target_rows):
    """Largest B | N with B*H <= target_rows, keeping grid length >= 2 when
    possible so both TensorCores get work on v7x."""
    best = 1
    for b in range(1, N + 1):
        if N % b or b * H > target_rows:
            continue
        if N // b >= 2 or N == 1:
            best = b
    return best


def fractin2_pallas_nchw(x_nchw, params, *, target_rows=256):
    N, C, H, W = x_nchw.shape
    WC = W * C
    if H % 8 or WC % 128:
        raise ValueError("need H % 8 == 0 and W*C % 128 == 0 for aligned tiles")
    B = _pick_image_batch(N, H, target_rows)
    BH = B * H
    grid = (N // B,)

    # NCHW -> NHWC -> lane-dense row slab: (N*H, W*C)
    x = jnp.transpose(x_nchw, (0, 2, 3, 1)).reshape(N * H, WC)

    ws, bs = [], []
    for name in ("f1", "f2", "f3"):
        w1, b1, w2, b2 = params[name]
        ws += [w1, w2]
        bs += [b1, b2]
    # bf16 weights -> native-rate MXU; bias stays f32 (added post-accumulation).
    mw = jnp.stack([_expand_conv_weight(w, W) for w in ws]).astype(jnp.bfloat16)
    bf = jnp.stack([jnp.tile(b, W).reshape(1, WC) for b in bs])   # (6, 1, WC)

    out = pl.pallas_call(
        _make_kernel(H, BH, WC),
        grid=grid,
        in_specs=[
            pl.BlockSpec((BH, WC), lambda n: (n, 0)),
            pl.BlockSpec((6, K, WC, WC), lambda n: (0, 0, 0, 0)),  # resident
            pl.BlockSpec((6, 1, WC), lambda n: (0, 0, 0)),         # resident
        ],
        out_specs=pl.BlockSpec((2, BH, WC), lambda n: (0, n, 0)),
        out_shape=jax.ShapeDtypeStruct((2, N * H, WC), x_nchw.dtype),
        compiler_params=pltpu.CompilerParams(
            dimension_semantics=("parallel",)),
    )(x, mw, bf)

    # (2, N*H, W*C) -> (N, 2C, H, W) == torch.cat([res + x, out], dim=1) NCHW
    return out.reshape(2, N, H, W, C).transpose(1, 0, 4, 2, 3).reshape(
        N, 2 * C, H, W)


# ----------------------------------------------------------------------------
# Pure-JAX references (for correctness check)
# ----------------------------------------------------------------------------
def _conv_ref(x, w, b, quantize):
    if quantize:  # mimic the kernel's bf16 MXU inputs (f32 accumulation)
        x = x.astype(jnp.bfloat16).astype(jnp.float32)
        w = w.astype(jnp.bfloat16).astype(jnp.float32)
    y = lax.conv_general_dilated(
        x, w, window_strides=(1, 1), padding="SAME",
        dimension_numbers=("NHWC", "HWIO", "NHWC"),
        precision=lax.Precision.HIGHEST)
    return y + b


def _rcab_ref(x, w1, b1, w2, b2, quantize):
    h = jnp.maximum(_conv_ref(x, w1, b1, quantize), 0.0)
    return _conv_ref(h, w2, b2, quantize) + x


def fractin2_ref_nchw(x_nchw, params, quantize=False):
    x = jnp.transpose(x_nchw, (0, 2, 3, 1))
    res = _rcab_ref(_rcab_ref(x, *params["f1"], quantize=quantize),
                    *params["f2"], quantize=quantize)
    out = _rcab_ref(x, *params["f3"], quantize=quantize)
    y = jnp.concatenate([res + x, out], axis=-1)
    return jnp.transpose(y, (0, 3, 1, 2))


# ----------------------------------------------------------------------------
if __name__ == "__main__":
    N, C, H, W = 16, 8, 16, 16        # n_feats = 8, kernel_size = 3; W*C = 128

    key = jax.random.PRNGKey(0)
    keys = jax.random.split(key, 13)
    x_nchw = jax.random.normal(keys[0], (N, C, H, W), jnp.float32)

    def make_rcab_params(k0, k1, k2, k3):
        w1 = 0.1 * jax.random.normal(k0, (K, K, C, C), jnp.float32)   # HWIO
        b1 = 0.1 * jax.random.normal(k1, (C,), jnp.float32)
        w2 = 0.1 * jax.random.normal(k2, (K, K, C, C), jnp.float32)
        b2 = 0.1 * jax.random.normal(k3, (C,), jnp.float32)
        return (w1, b1, w2, b2)

    params = {
        "f1": make_rcab_params(*keys[1:5]),
        "f2": make_rcab_params(*keys[5:9]),
        "f3": make_rcab_params(*keys[9:13]),
    }

    fwd = jax.jit(fractin2_pallas_nchw)
    y = jax.block_until_ready(fwd(x_nchw, params))
    assert y.shape == (N, 2 * C, H, W), y.shape

    # Tight check vs a reference that applies the same bf16 rounding the MXU
    # path uses (isolates quantization error from kernel bugs).
    y_bf = fractin2_ref_nchw(x_nchw, params, quantize=True)
    err_bf = float(jnp.max(jnp.abs(y - y_bf)))
    assert jnp.allclose(y, y_bf, rtol=1e-2, atol=1e-2), err_bf

    # Loose check vs the full-f32 reference: drift comes only from the bf16
    # MXU inputs (f32 accumulation) requested by the perf review.
    y_f32 = fractin2_ref_nchw(x_nchw, params, quantize=False)
    err_f32 = float(jnp.max(jnp.abs(y - y_f32)))
    assert jnp.allclose(y, y_f32, rtol=5e-2, atol=5e-2), err_f32

    print("KERNEL_OK")
</pallas_src>

<mosaic_0001>
module attributes {stable_mosaic.version = 11 : i64} {
  func.func @kernel(%arg0: i32, %arg1: memref<128x128xf32, #tpu.memory_space<vmem>>, %arg2: memref<6x3x128x128xbf16, #tpu.memory_space<vmem>>, %arg3: memref<6x1x128xf32, #tpu.memory_space<vmem>>, %arg4: memref<2x128x128xf32, #tpu.memory_space<vmem>>) attributes {dimension_semantics = [#tpu.dimension_semantics<parallel>], iteration_bounds = array<i64: 2>, scalar_prefetch = 0 : i64, scratch_operands = 0 : i64, tpu.core_type = #tpu.core_type<tc>, window_params = [{transform_indices = @transform_0, window_bounds = array<i64: 128, 128>}, {pipeline_mode = #tpu.pipeline_mode<synchronous>, transform_indices = @transform_1, window_bounds = array<i64: 6, 3, 128, 128>}, {pipeline_mode = #tpu.pipeline_mode<synchronous>, transform_indices = @transform_2, window_bounds = array<i64: 6, 1, 128>}, {transform_indices = @transform_3, window_bounds = array<i64: 2, 128, 128>}]} {
    %0 = tpu.iota {dimensions = array<i32: 0>} : vector<128x128xi32>
    %c16_i32 = arith.constant 16 : i32
    %c0_i32 = arith.constant 0 : i32
    %1 = arith.cmpi eq, %c16_i32, %c0_i32 : i32
    %c1_i32 = arith.constant 1 : i32
    %2 = arith.select %1, %c1_i32, %c16_i32 : i32
    %3 = vector.broadcast %2 : i32 to vector<128x128xi32>
    %4 = arith.remsi %0, %3 : vector<128x128xi32>
    %c0_i32_0 = arith.constant 0 : i32
    %5 = vector.broadcast %c0_i32_0 : i32 to vector<128x128xi32>
    %6 = arith.cmpi ne, %4, %5 : vector<128x128xi32>
    %c0_i32_1 = arith.constant 0 : i32
    %7 = vector.broadcast %c0_i32_1 : i32 to vector<128x128xi32>
    %8 = arith.cmpi slt, %4, %7 : vector<128x128xi32>
    %c0_i32_2 = arith.constant 0 : i32
    %9 = arith.cmpi slt, %2, %c0_i32_2 : i32
    %10 = vector.broadcast %9 : i1 to vector<128x128xi1>
    %11 = vector.broadcast %10 : vector<128x128xi1> to vector<128x128xi1>
    %12 = arith.xori %8, %11 : vector<128x128xi1>
    %13 = arith.andi %12, %6 : vector<128x128xi1>
    %14 = vector.broadcast %2 : i32 to vector<128x128xi32>
    %15 = arith.addi %4, %14 : vector<128x128xi32>
    %16 = arith.select %13, %15, %4 : vector<128x128xi1>, vector<128x128xi32>
    %c0_i32_3 = arith.constant 0 : i32
    %17 = vector.broadcast %c0_i32_3 : i32 to vector<128x128xi32>
    %18 = arith.cmpi ne, %16, %17 : vector<128x128xi32>
    %c15_i32 = arith.constant 15 : i32
    %19 = vector.broadcast %c15_i32 : i32 to vector<128x128xi32>
    %20 = arith.cmpi ne, %16, %19 : vector<128x128xi32>
    %c0 = arith.constant 0 : index
    %c0_4 = arith.constant 0 : index
    %21 = vector.load %arg1[%c0, %c0_4] : memref<128x128xf32, #tpu.memory_space<vmem>>, vector<128x128xf32>
    %c1_i32_5 = arith.constant 1 : i32
    %22 = tpu.dynamic_rotate %21 by %c1_i32_5 dim 0 : vector<128x128xf32>, i32 -> vector<128x128xf32>
    %cst = arith.constant 0.000000e+00 : f32
    %23 = vector.broadcast %cst : f32 to vector<128x128xf32>
    %24 = arith.select %18, %22, %23 : vector<128x128xi1>, vector<128x128xf32>
    %c127_i32 = arith.constant 127 : i32
    %25 = tpu.dynamic_rotate %21 by %c127_i32 dim 0 : vector<128x128xf32>, i32 -> vector<128x128xf32>
    %cst_6 = arith.constant 0.000000e+00 : f32
    %26 = vector.broadcast %cst_6 : f32 to vector<128x128xf32>
    %27 = arith.select %20, %25, %26 : vector<128x128xi1>, vector<128x128xf32>
    %28 = arith.truncf %21 : vector<128x128xf32> to vector<128x128xbf16>
    %c0_7 = arith.constant 0 : index
    %c1 = arith.constant 1 : index
    %c0_8 = arith.constant 0 : index
    %c0_9 = arith.constant 0 : index
    %29 = vector.load %arg2[%c0_7, %c1, %c0_8, %c0_9] : memref<6x3x128x128xbf16, #tpu.memory_space<vmem>>, vector<1x1x128x128xbf16>
    %30 = vector.shape_cast %29 : vector<1x1x128x128xbf16> to vector<128x128xbf16>
    %cst_10 = arith.constant dense<0.000000e+00> : vector<128x128xf32>
    %31 = tpu.matmul %28, %30, %cst_10 {dimension_numbers = #tpu.dot_dimension_numbers<[1], [0], [0], [1], [0, 0, 1, 1], [], []>} : vector<128x128xbf16>, vector<128x128xbf16>, vector<128x128xf32> -> vector<128x128xf32>
    %c0_11 = arith.constant 0 : index
    %c0_12 = arith.constant 0 : index
    %c0_13 = arith.constant 0 : index
    %32 = vector.load %arg3[%c0_11, %c0_12, %c0_13] : memref<6x1x128xf32, #tpu.memory_space<vmem>>, vector<1x1x128xf32>
    %33 = vector.shape_cast %32 : vector<1x1x128xf32> to vector<1x128xf32>
    %34 = vector.broadcast %33 : vector<1x128xf32> to vector<128x128xf32>
    %35 = arith.addf %31, %34 : vector<128x128xf32>
    %36 = arith.truncf %24 : vector<128x128xf32> to vector<128x128xbf16>
    %c0_14 = arith.constant 0 : index
    %c0_15 = arith.constant 0 : index
    %c0_16 = arith.constant 0 : index
    %c0_17 = arith.constant 0 : index
    %37 = vector.load %arg2[%c0_14, %c0_15, %c0_16, %c0_17] : memref<6x3x128x128xbf16, #tpu.memory_space<vmem>>, vector<1x1x128x128xbf16>
    %38 = vector.shape_cast %37 : vector<1x1x128x128xbf16> to vector<128x128xbf16>
    %cst_18 = arith.constant dense<0.000000e+00> : vector<128x128xf32>
    %39 = tpu.matmul %36, %38, %cst_18 {dimension_numbers = #tpu.dot_dimension_numbers<[1], [0], [0], [1], [0, 0, 1, 1], [], []>} : vector<128x128xbf16>, vector<128x128xbf16>, vector<128x128xf32> -> vector<128x128xf32>
    %40 = arith.addf %35, %39 : vector<128x128xf32>
    %41 = arith.truncf %27 : vector<128x128xf32> to vector<128x128xbf16>
    %c0_19 = arith.constant 0 : index
    %c2 = arith.constant 2 : index
    %c0_20 = arith.constant 0 : index
    %c0_21 = arith.constant 0 : index
    %42 = vector.load %arg2[%c0_19, %c2, %c0_20, %c0_21] : memref<6x3x128x128xbf16, #tpu.memory_space<vmem>>, vector<1x1x128x128xbf16>
    %43 = vector.shape_cast %42 : vector<1x1x128x128xbf16> to vector<128x128xbf16>
    %cst_22 = arith.constant dense<0.000000e+00> : vector<128x128xf32>
    %44 = tpu.matmul %41, %43, %cst_22 {dimension_numbers = #tpu.dot_dimension_numbers<[1], [0], [0], [1], [0, 0, 1, 1], [], []>} : vector<128x128xbf16>, vector<128x128xbf16>, vector<128x128xf32> -> vector<128x128xf32>
    %45 = arith.addf %40, %44 : vector<128x128xf32>
    %cst_23 = arith.constant 0.000000e+00 : f32
    %46 = vector.broadcast %cst_23 : f32 to vector<128x128xf32>
    %47 = arith.maximumf %45, %46 : vector<128x128xf32>
    %c1_i32_24 = arith.constant 1 : i32
    %48 = tpu.dynamic_rotate %47 by %c1_i32_24 dim 0 : vector<128x128xf32>, i32 -> vector<128x128xf32>
    %cst_25 = arith.constant 0.000000e+00 : f32
    %49 = vector.broadcast %cst_25 : f32 to vector<128x128xf32>
    %50 = arith.select %18, %48, %49 : vector<128x128xi1>, vector<128x128xf32>
    %c127_i32_26 = arith.constant 127 : i32
    %51 = tpu.dynamic_rotate %47 by %c127_i32_26 dim 0 : vector<128x128xf32>, i32 -> vector<128x128xf32>
    %cst_27 = arith.constant 0.000000e+00 : f32
    %52 = vector.broadcast %cst_27 : f32 to vector<128x128xf32>
    %53 = arith.select %20, %51, %52 : vector<128x128xi1>, vector<128x128xf32>
    %54 = arith.truncf %47 : vector<128x128xf32> to vector<128x128xbf16>
    %c1_28 = arith.constant 1 : index
    %c1_29 = arith.constant 1 : index
    %c0_30 = arith.constant 0 : index
    %c0_31 = arith.constant 0 : index
    %55 = vector.load %arg2[%c1_28, %c1_29, %c0_30, %c0_31] : memref<6x3x128x128xbf16, #tpu.memory_space<vmem>>, vector<1x1x128x128xbf16>
    %56 = vector.shape_cast %55 : vector<1x1x128x128xbf16> to vector<128x128xbf16>
    %cst_32 = arith.constant dense<0.000000e+00> : vector<128x128xf32>
    %57 = tpu.matmul %54, %56, %cst_32 {dimension_numbers = #tpu.dot_dimension_numbers<[1], [0], [0], [1], [0, 0, 1, 1], [], []>} : vector<128x128xbf16>, vector<128x128xbf16>, vector<128x128xf32> -> vector<128x128xf32>
    %c1_33 = arith.constant 1 : index
    %c0_34 = arith.constant 0 : index
    %c0_35 = arith.constant 0 : index
    %58 = vector.load %arg3[%c1_33, %c0_34, %c0_35] : memref<6x1x128xf32, #tpu.memory_space<vmem>>, vector<1x1x128xf32>
    %59 = vector.shape_cast %58 : vector<1x1x128xf32> to vector<1x128xf32>
    %60 = vector.broadcast %59 : vector<1x128xf32> to vector<128x128xf32>
    %61 = arith.addf %57, %60 : vector<128x128xf32>
    %62 = arith.truncf %50 : vector<128x128xf32> to vector<128x128xbf16>
    %c1_36 = arith.constant 1 : index
    %c0_37 = arith.constant 0 : index
    %c0_38 = arith.constant 0 : index
    %c0_39 = arith.constant 0 : index
    %63 = vector.load %arg2[%c1_36, %c0_37, %c0_38, %c0_39] : memref<6x3x128x128xbf16, #tpu.memory_space<vmem>>, vector<1x1x128x128xbf16>
    %64 = vector.shape_cast %63 : vector<1x1x128x128xbf16> to vector<128x128xbf16>
    %cst_40 = arith.constant dense<0.000000e+00> : vector<128x128xf32>
    %65 = tpu.matmul %62, %64, %cst_40 {dimension_numbers = #tpu.dot_dimension_numbers<[1], [0], [0], [1], [0, 0, 1, 1], [], []>} : vector<128x128xbf16>, vector<128x128xbf16>, vector<128x128xf32> -> vector<128x128xf32>
    %66 = arith.addf %61, %65 : vector<128x128xf32>
    %67 = arith.truncf %53 : vector<128x128xf32> to vector<128x128xbf16>
    %c1_41 = arith.constant 1 : index
    %c2_42 = arith.constant 2 : index
    %c0_43 = arith.constant 0 : index
    %c0_44 = arith.constant 0 : index
    %68 = vector.load %arg2[%c1_41, %c2_42, %c0_43, %c0_44] : memref<6x3x128x128xbf16, #tpu.memory_space<vmem>>, vector<1x1x128x128xbf16>
    %69 = vector.shape_cast %68 : vector<1x1x128x128xbf16> to vector<128x128xbf16>
    %cst_45 = arith.constant dense<0.000000e+00> : vector<128x128xf32>
    %70 = tpu.matmul %67, %69, %cst_45 {dimension_numbers = #tpu.dot_dimension_numbers<[1], [0], [0], [1], [0, 0, 1, 1], [], []>} : vector<128x128xbf16>, vector<128x128xbf16>, vector<128x128xf32> -> vector<128x128xf32>
    %71 = arith.addf %66, %70 : vector<128x128xf32>
    %72 = arith.addf %71, %21 : vector<128x128xf32>
    %c1_i32_46 = arith.constant 1 : i32
    %73 = tpu.dynamic_rotate %72 by %c1_i32_46 dim 0 : vector<128x128xf32>, i32 -> vector<128x128xf32>
    %cst_47 = arith.constant 0.000000e+00 : f32
    %74 = vector.broadcast %cst_47 : f32 to vector<128x128xf32>
    %75 = arith.select %18, %73, %74 : vector<128x128xi1>, vector<128x128xf32>
    %c127_i32_48 = arith.constant 127 : i32
    %76 = tpu.dynamic_rotate %72 by %c127_i32_48 dim 0 : vector<128x128xf32>, i32 -> vector<128x128xf32>
    %cst_49 = arith.constant 0.000000e+00 : f32
    %77 = vector.broadcast %cst_49 : f32 to vector<128x128xf32>
    %78 = arith.select %20, %76, %77 : vector<128x128xi1>, vector<128x128xf32>
    %79 = arith.truncf %72 : vector<128x128xf32> to vector<128x128xbf16>
    %c2_50 = arith.constant 2 : index
    %c1_51 = arith.constant 1 : index
    %c0_52 = arith.constant 0 : index
    %c0_53 = arith.constant 0 : index
    %80 = vector.load %arg2[%c2_50, %c1_51, %c0_52, %c0_53] : memref<6x3x128x128xbf16, #tpu.memory_space<vmem>>, vector<1x1x128x128xbf16>
    %81 = vector.shape_cast %80 : vector<1x1x128x128xbf16> to vector<128x128xbf16>
    %cst_54 = arith.constant dense<0.000000e+00> : vector<128x128xf32>
    %82 = tpu.matmul %79, %81, %cst_54 {dimension_numbers = #tpu.dot_dimension_numbers<[1], [0], [0], [1], [0, 0, 1, 1], [], []>} : vector<128x128xbf16>, vector<128x128xbf16>, vector<128x128xf32> -> vector<128x128xf32>
    %c2_55 = arith.constant 2 : index
    %c0_56 = arith.constant 0 : index
    %c0_57 = arith.constant 0 : index
    %83 = vector.load %arg3[%c2_55, %c0_56, %c0_57] : memref<6x1x128xf32, #tpu.memory_space<vmem>>, vector<1x1x128xf32>
    %84 = vector.shape_cast %83 : vector<1x1x128xf32> to vector<1x128xf32>
    %85 = vector.broadcast %84 : vector<1x128xf32> to vector<128x128xf32>
    %86 = arith.addf %82, %85 : vector<128x128xf32>
    %87 = arith.truncf %75 : vector<128x128xf32> to vector<128x128xbf16>
    %c2_58 = arith.constant 2 : index
    %c0_59 = arith.constant 0 : index
    %c0_60 = arith.constant 0 : index
    %c0_61 = arith.constant 0 : index
    %88 = vector.load %arg2[%c2_58, %c0_59, %c0_60, %c0_61] : memref<6x3x128x128xbf16, #tpu.memory_space<vmem>>, vector<1x1x128x128xbf16>
    %89 = vector.shape_cast %88 : vector<1x1x128x128xbf16> to vector<128x128xbf16>
    %cst_62 = arith.constant dense<0.000000e+00> : vector<128x128xf32>
    %90 = tpu.matmul %87, %89, %cst_62 {dimension_numbers = #tpu.dot_dimension_numbers<[1], [0], [0], [1], [0, 0, 1, 1], [], []>} : vector<128x128xbf16>, vector<128x128xbf16>, vector<128x128xf32> -> vector<128x128xf32>
    %91 = arith.addf %86, %90 : vector<128x128xf32>
    %92 = arith.truncf %78 : vector<128x128xf32> to vector<128x128xbf16>
    %c2_63 = arith.constant 2 : index
    %c2_64 = arith.constant 2 : index
    %c0_65 = arith.constant 0 : index
    %c0_66 = arith.constant 0 : index
    %93 = vector.load %arg2[%c2_63, %c2_64, %c0_65, %c0_66] : memref<6x3x128x128xbf16, #tpu.memory_space<vmem>>, vector<1x1x128x128xbf16>
    %94 = vector.shape_cast %93 : vector<1x1x128x128xbf16> to vector<128x128xbf16>
    %cst_67 = arith.constant dense<0.000000e+00> : vector<128x128xf32>
    %95 = tpu.matmul %92, %94, %cst_67 {dimension_numbers = #tpu.dot_dimension_numbers<[1], [0], [0], [1], [0, 0, 1, 1], [], []>} : vector<128x128xbf16>, vector<128x128xbf16>, vector<128x128xf32> -> vector<128x128xf32>
    %96 = arith.addf %91, %95 : vector<128x128xf32>
    %cst_68 = arith.constant 0.000000e+00 : f32
    %97 = vector.broadcast %cst_68 : f32 to vector<128x128xf32>
    %98 = arith.maximumf %96, %97 : vector<128x128xf32>
    %c1_i32_69 = arith.constant 1 : i32
    %99 = tpu.dynamic_rotate %98 by %c1_i32_69 dim 0 : vector<128x128xf32>, i32 -> vector<128x128xf32>
    %cst_70 = arith.constant 0.000000e+00 : f32
    %100 = vector.broadcast %cst_70 : f32 to vector<128x128xf32>
    %101 = arith.select %18, %99, %100 : vector<128x128xi1>, vector<128x128xf32>
    %c127_i32_71 = arith.constant 127 : i32
    %102 = tpu.dynamic_rotate %98 by %c127_i32_71 dim 0 : vector<128x128xf32>, i32 -> vector<128x128xf32>
    %cst_72 = arith.constant 0.000000e+00 : f32
    %103 = vector.broadcast %cst_72 : f32 to vector<128x128xf32>
    %104 = arith.select %20, %102, %103 : vector<128x128xi1>, vector<128x128xf32>
    %105 = arith.truncf %98 : vector<128x128xf32> to vector<128x128xbf16>
    %c3 = arith.constant 3 : index
    %c1_73 = arith.constant 1 : index
    %c0_74 = arith.constant 0 : index
    %c0_75 = arith.constant 0 : index
    %106 = vector.load %arg2[%c3, %c1_73, %c0_74, %c0_75] : memref<6x3x128x128xbf16, #tpu.memory_space<vmem>>, vector<1x1x128x128xbf16>
    %107 = vector.shape_cast %106 : vector<1x1x128x128xbf16> to vector<128x128xbf16>
    %cst_76 = arith.constant dense<0.000000e+00> : vector<128x128xf32>
    %108 = tpu.matmul %105, %107, %cst_76 {dimension_numbers = #tpu.dot_dimension_numbers<[1], [0], [0], [1], [0, 0, 1, 1], [], []>} : vector<128x128xbf16>, vector<128x128xbf16>, vector<128x128xf32> -> vector<128x128xf32>
    %c3_77 = arith.constant 3 : index
    %c0_78 = arith.constant 0 : index
    %c0_79 = arith.constant 0 : index
    %109 = vector.load %arg3[%c3_77, %c0_78, %c0_79] : memref<6x1x128xf32, #tpu.memory_space<vmem>>, vector<1x1x128xf32>
    %110 = vector.shape_cast %109 : vector<1x1x128xf32> to vector<1x128xf32>
    %111 = vector.broadcast %110 : vector<1x128xf32> to vector<128x128xf32>
    %112 = arith.addf %108, %111 : vector<128x128xf32>
    %113 = arith.truncf %101 : vector<128x128xf32> to vector<128x128xbf16>
    %c3_80 = arith.constant 3 : index
    %c0_81 = arith.constant 0 : index
    %c0_82 = arith.constant 0 : index
    %c0_83 = arith.constant 0 : index
    %114 = vector.load %arg2[%c3_80, %c0_81, %c0_82, %c0_83] : memref<6x3x128x128xbf16, #tpu.memory_space<vmem>>, vector<1x1x128x128xbf16>
    %115 = vector.shape_cast %114 : vector<1x1x128x128xbf16> to vector<128x128xbf16>
    %cst_84 = arith.constant dense<0.000000e+00> : vector<128x128xf32>
    %116 = tpu.matmul %113, %115, %cst_84 {dimension_numbers = #tpu.dot_dimension_numbers<[1], [0], [0], [1], [0, 0, 1, 1], [], []>} : vector<128x128xbf16>, vector<128x128xbf16>, vector<128x128xf32> -> vector<128x128xf32>
    %117 = arith.addf %112, %116 : vector<128x128xf32>
    %118 = arith.truncf %104 : vector<128x128xf32> to vector<128x128xbf16>
    %c3_85 = arith.constant 3 : index
    %c2_86 = arith.constant 2 : index
    %c0_87 = arith.constant 0 : index
    %c0_88 = arith.constant 0 : index
    %119 = vector.load %arg2[%c3_85, %c2_86, %c0_87, %c0_88] : memref<6x3x128x128xbf16, #tpu.memory_space<vmem>>, vector<1x1x128x128xbf16>
    %120 = vector.shape_cast %119 : vector<1x1x128x128xbf16> to vector<128x128xbf16>
    %cst_89 = arith.constant dense<0.000000e+00> : vector<128x128xf32>
    %121 = tpu.matmul %118, %120, %cst_89 {dimension_numbers = #tpu.dot_dimension_numbers<[1], [0], [0], [1], [0, 0, 1, 1], [], []>} : vector<128x128xbf16>, vector<128x128xbf16>, vector<128x128xf32> -> vector<128x128xf32>
    %122 = arith.addf %117, %121 : vector<128x128xf32>
    %123 = arith.addf %122, %72 : vector<128x128xf32>
    %c1_i32_90 = arith.constant 1 : i32
    %124 = tpu.dynamic_rotate %21 by %c1_i32_90 dim 0 : vector<128x128xf32>, i32 -> vector<128x128xf32>
    %cst_91 = arith.constant 0.000000e+00 : f32
    %125 = vector.broadcast %cst_91 : f32 to vector<128x128xf32>
    %126 = arith.select %18, %124, %125 : vector<128x128xi1>, vector<128x128xf32>
    %c127_i32_92 = arith.constant 127 : i32
    %127 = tpu.dynamic_rotate %21 by %c127_i32_92 dim 0 : vector<128x128xf32>, i32 -> vector<128x128xf32>
    %cst_93 = arith.constant 0.000000e+00 : f32
    %128 = vector.broadcast %cst_93 : f32 to vector<128x128xf32>
    %129 = arith.select %20, %127, %128 : vector<128x128xi1>, vector<128x128xf32>
    %130 = arith.truncf %21 : vector<128x128xf32> to vector<128x128xbf16>
    %c4 = arith.constant 4 : index
    %c1_94 = arith.constant 1 : index
    %c0_95 = arith.constant 0 : index
    %c0_96 = arith.constant 0 : index
    %131 = vector.load %arg2[%c4, %c1_94, %c0_95, %c0_96] : memref<6x3x128x128xbf16, #tpu.memory_space<vmem>>, vector<1x1x128x128xbf16>
    %132 = vector.shape_cast %131 : vector<1x1x128x128xbf16> to vector<128x128xbf16>
    %cst_97 = arith.constant dense<0.000000e+00> : vector<128x128xf32>
    %133 = tpu.matmul %130, %132, %cst_97 {dimension_numbers = #tpu.dot_dimension_numbers<[1], [0], [0], [1], [0, 0, 1, 1], [], []>} : vector<128x128xbf16>, vector<128x128xbf16>, vector<128x128xf32> -> vector<128x128xf32>
    %c4_98 = arith.constant 4 : index
    %c0_99 = arith.constant 0 : index
    %c0_100 = arith.constant 0 : index
    %134 = vector.load %arg3[%c4_98, %c0_99, %c0_100] : memref<6x1x128xf32, #tpu.memory_space<vmem>>, vector<1x1x128xf32>
    %135 = vector.shape_cast %134 : vector<1x1x128xf32> to vector<1x128xf32>
    %136 = vector.broadcast %135 : vector<1x128xf32> to vector<128x128xf32>
    %137 = arith.addf %133, %136 : vector<128x128xf32>
    %138 = arith.truncf %126 : vector<128x128xf32> to vector<128x128xbf16>
    %c4_101 = arith.constant 4 : index
    %c0_102 = arith.constant 0 : index
    %c0_103 = arith.constant 0 : index
    %c0_104 = arith.constant 0 : index
    %139 = vector.load %arg2[%c4_101, %c0_102, %c0_103, %c0_104] : memref<6x3x128x128xbf16, #tpu.memory_space<vmem>>, vector<1x1x128x128xbf16>
    %140 = vector.shape_cast %139 : vector<1x1x128x128xbf16> to vector<128x128xbf16>
    %cst_105 = arith.constant dense<0.000000e+00> : vector<128x128xf32>
    %141 = tpu.matmul %138, %140, %cst_105 {dimension_numbers = #tpu.dot_dimension_numbers<[1], [0], [0], [1], [0, 0, 1, 1], [], []>} : vector<128x128xbf16>, vector<128x128xbf16>, vector<128x128xf32> -> vector<128x128xf32>
    %142 = arith.addf %137, %141 : vector<128x128xf32>
    %143 = arith.truncf %129 : vector<128x128xf32> to vector<128x128xbf16>
    %c4_106 = arith.constant 4 : index
    %c2_107 = arith.constant 2 : index
    %c0_108 = arith.constant 0 : index
    %c0_109 = arith.constant 0 : index
    %144 = vector.load %arg2[%c4_106, %c2_107, %c0_108, %c0_109] : memref<6x3x128x128xbf16, #tpu.memory_space<vmem>>, vector<1x1x128x128xbf16>
    %145 = vector.shape_cast %144 : vector<1x1x128x128xbf16> to vector<128x128xbf16>
    %cst_110 = arith.constant dense<0.000000e+00> : vector<128x128xf32>
    %146 = tpu.matmul %143, %145, %cst_110 {dimension_numbers = #tpu.dot_dimension_numbers<[1], [0], [0], [1], [0, 0, 1, 1], [], []>} : vector<128x128xbf16>, vector<128x128xbf16>, vector<128x128xf32> -> vector<128x128xf32>
    %147 = arith.addf %142, %146 : vector<128x128xf32>
    %cst_111 = arith.constant 0.000000e+00 : f32
    %148 = vector.broadcast %cst_111 : f32 to vector<128x128xf32>
    %149 = arith.maximumf %147, %148 : vector<128x128xf32>
    %c1_i32_112 = arith.constant 1 : i32
    %150 = tpu.dynamic_rotate %149 by %c1_i32_112 dim 0 : vector<128x128xf32>, i32 -> vector<128x128xf32>
    %cst_113 = arith.constant 0.000000e+00 : f32
    %151 = vector.broadcast %cst_113 : f32 to vector<128x128xf32>
    %152 = arith.select %18, %150, %151 : vector<128x128xi1>, vector<128x128xf32>
    %c127_i32_114 = arith.constant 127 : i32
    %153 = tpu.dynamic_rotate %149 by %c127_i32_114 dim 0 : vector<128x128xf32>, i32 -> vector<128x128xf32>
    %cst_115 = arith.constant 0.000000e+00 : f32
    %154 = vector.broadcast %cst_115 : f32 to vector<128x128xf32>
    %155 = arith.select %20, %153, %154 : vector<128x128xi1>, vector<128x128xf32>
    %156 = arith.truncf %149 : vector<128x128xf32> to vector<128x128xbf16>
    %c5 = arith.constant 5 : index
    %c1_116 = arith.constant 1 : index
    %c0_117 = arith.constant 0 : index
    %c0_118 = arith.constant 0 : index
    %157 = vector.load %arg2[%c5, %c1_116, %c0_117, %c0_118] : memref<6x3x128x128xbf16, #tpu.memory_space<vmem>>, vector<1x1x128x128xbf16>
    %158 = vector.shape_cast %157 : vector<1x1x128x128xbf16> to vector<128x128xbf16>
    %cst_119 = arith.constant dense<0.000000e+00> : vector<128x128xf32>
    %159 = tpu.matmul %156, %158, %cst_119 {dimension_numbers = #tpu.dot_dimension_numbers<[1], [0], [0], [1], [0, 0, 1, 1], [], []>} : vector<128x128xbf16>, vector<128x128xbf16>, vector<128x128xf32> -> vector<128x128xf32>
    %c5_120 = arith.constant 5 : index
    %c0_121 = arith.constant 0 : index
    %c0_122 = arith.constant 0 : index
    %160 = vector.load %arg3[%c5_120, %c0_121, %c0_122] : memref<6x1x128xf32, #tpu.memory_space<vmem>>, vector<1x1x128xf32>
    %161 = vector.shape_cast %160 : vector<1x1x128xf32> to vector<1x128xf32>
    %162 = vector.broadcast %161 : vector<1x128xf32> to vector<128x128xf32>
    %163 = arith.addf %159, %162 : vector<128x128xf32>
    %164 = arith.truncf %152 : vector<128x128xf32> to vector<128x128xbf16>
    %c5_123 = arith.constant 5 : index
    %c0_124 = arith.constant 0 : index
    %c0_125 = arith.constant 0 : index
    %c0_126 = arith.constant 0 : index
    %165 = vector.load %arg2[%c5_123, %c0_124, %c0_125, %c0_126] : memref<6x3x128x128xbf16, #tpu.memory_space<vmem>>, vector<1x1x128x128xbf16>
    %166 = vector.shape_cast %165 : vector<1x1x128x128xbf16> to vector<128x128xbf16>
    %cst_127 = arith.constant dense<0.000000e+00> : vector<128x128xf32>
    %167 = tpu.matmul %164, %166, %cst_127 {dimension_numbers = #tpu.dot_dimension_numbers<[1], [0], [0], [1], [0, 0, 1, 1], [], []>} : vector<128x128xbf16>, vector<128x128xbf16>, vector<128x128xf32> -> vector<128x128xf32>
    %168 = arith.addf %163, %167 : vector<128x128xf32>
    %169 = arith.truncf %155 : vector<128x128xf32> to vector<128x128xbf16>
    %c5_128 = arith.constant 5 : index
    %c2_129 = arith.constant 2 : index
    %c0_130 = arith.constant 0 : index
    %c0_131 = arith.constant 0 : index
    %170 = vector.load %arg2[%c5_128, %c2_129, %c0_130, %c0_131] : memref<6x3x128x128xbf16, #tpu.memory_space<vmem>>, vector<1x1x128x128xbf16>
    %171 = vector.shape_cast %170 : vector<1x1x128x128xbf16> to vector<128x128xbf16>
    %cst_132 = arith.constant dense<0.000000e+00> : vector<128x128xf32>
    %172 = tpu.matmul %169, %171, %cst_132 {dimension_numbers = #tpu.dot_dimension_numbers<[1], [0], [0], [1], [0, 0, 1, 1], [], []>} : vector<128x128xbf16>, vector<128x128xbf16>, vector<128x128xf32> -> vector<128x128xf32>
    %173 = arith.addf %168, %172 : vector<128x128xf32>
    %174 = arith.addf %173, %21 : vector<128x128xf32>
    %175 = arith.addf %123, %21 : vector<128x128xf32>
    %c0_133 = arith.constant 0 : index
    %c0_134 = arith.constant 0 : index
    %c0_135 = arith.constant 0 : index
    %176 = vector.load %arg4[%c0_133, %c0_134, %c0_135] : memref<2x128x128xf32, #tpu.memory_space<vmem>>, vector<1x128x128xf32>
    %177 = vector.shape_cast %176 : vector<1x128x128xf32> to vector<128x128xf32>
    %178 = vector.shape_cast %175 : vector<128x128xf32> to vector<1x128x128xf32>
    tpu.vector_store %arg4[%c0_133, %c0_134, %c0_135], %178 {strides = array<i32>} : memref<2x128x128xf32, #tpu.memory_space<vmem>>, vector<1x128x128xf32>,
    %c1_136 = arith.constant 1 : index
    %c0_137 = arith.constant 0 : index
    %c0_138 = arith.constant 0 : index
    %179 = vector.load %arg4[%c1_136, %c0_137, %c0_138] : memref<2x128x128xf32, #tpu.memory_space<vmem>>, vector<1x128x128xf32>
    %180 = vector.shape_cast %179 : vector<1x128x128xf32> to vector<128x128xf32>
    %181 = vector.shape_cast %174 : vector<128x128xf32> to vector<1x128x128xf32>
    tpu.vector_store %arg4[%c1_136, %c0_137, %c0_138], %181 {strides = array<i32>} : memref<2x128x128xf32, #tpu.memory_space<vmem>>, vector<1x128x128xf32>,
    return
  }
  func.func @transform_0(%arg0: i32) -> (i32, i32) {
    %c0_i32 = arith.constant 0 : i32
    %c0_i32_0 = arith.constant 0 : i32
    return %arg0, %c0_i32 : i32, i32
  }
  func.func @transform_1(%arg0: i32) -> (i32, i32, i32, i32) {
    %c0_i32 = arith.constant 0 : i32
    %c0_i32_0 = arith.constant 0 : i32
    %c0_i32_1 = arith.constant 0 : i32
    %c0_i32_2 = arith.constant 0 : i32
    %c0_i32_3 = arith.constant 0 : i32
    return %c0_i32, %c0_i32_0, %c0_i32_1, %c0_i32_2 : i32, i32, i32, i32
  }
  func.func @transform_2(%arg0: i32) -> (i32, i32, i32) {
    %c0_i32 = arith.constant 0 : i32
    %c0_i32_0 = arith.constant 0 : i32
    %c0_i32_1 = arith.constant 0 : i32
    %c0_i32_2 = arith.constant 0 : i32
    return %c0_i32, %c0_i32_0, %c0_i32_1 : i32, i32, i32
  }
  func.func @transform_3(%arg0: i32) -> (i32, i32, i32) {
    %c0_i32 = arith.constant 0 : i32
    %c0_i32_0 = arith.constant 0 : i32
    %c0_i32_1 = arith.constant 0 : i32
    return %c0_i32, %arg0, %c0_i32_0 : i32, i32, i32
  }
}

</mosaic_0001>

<llo_original>
// kernel: tile.33
$region0: #{tile.33}
  #allocation0 [shape = 's32[1]{0}', space=sflag, size = 0x4, scoped, tag = 'scoped memory for tile.33']
  %s0 = inlined_call_operand.vmem [shape: f32[8], index: 0, kind: input, shape index: {}]
  %s1 = inlined_call_operand.vmem [shape: f32[16,8], index: 1, kind: output, shape index: {}]
  // Predicated region
  $region2: #{tile.33} parent=0 // pred_check
    _
  $region3: #{tile.33} parent=0 // pred_check_branch
    %3 = sbr.rel (0) target = $region5
  $region4: #{tile.33} parent=0 // pred_region
    _
  $region5: #{tile.33} parent=0 // pred_fallthru
    _
  %v4 = vld [vmem:[%s0] ss:$0 sm:$0xff]
  %5 = vst [vmem:[%s1] sm:$0xff] %v4
  %s6 = scalar_lea.vmem %s1, 8
  %7 = vst [vmem:[%s6] sm:$0xff] %v4

// kernel: tile.54
$region0: #{tile.54}
  %s0 = inlined_call_operand.vmem [shape: f32[16,8], index: 0, kind: input, shape index: {}]
  %s1 = inlined_call_operand.vmem [shape: f32[1,1,128], index: 1, kind: output, shape index: {}]
  $region1: #{tile.54} parent=0
    #allocation0 [shape = 'u8[4096]{0}', space=vmem, size = 0x1000, scoped, tag = 'scoped mem for output reshape']
    %v2 = vld [vmem:[%s0] sm:$0x1]
    %vm3 = vcmask 64512
    %4 = vst.msk [vmem:[#allocation0] sm:$0x1] %vm3, %v2
    %s5 = scalar_lea.vmem %s0, 15
    %v6 = vld [vmem:[%s5] sm:$0x1]
    %7 = vrot.lane.b32.xlu0 %v6, 120
    %v8 = vpop.permute.xlu0 %7
    %vm9 = vcmask 1048512
    %10 = vst.msk [vmem:[#allocation0] sm:$0x1] %vm9, %v8
    %s11 = scalar_lea.vmem %s0, 14
    %v12 = vld [vmem:[%s11] sm:$0x1]
    %13 = vrot.lane.b32.xlu0 %v12, 112
    %v14 = vpop.permute.xlu0 %13
    %vm15 = vcmask 982912
    %16 = vst.msk [vmem:[#allocation0] sm:$0x1] %vm15, %v14
    %s17 = scalar_lea.vmem %s0, 13
    %v18 = vld [vmem:[%s17] sm:$0x1]
    %19 = vrot.lane.b32.xlu0 %v18, 104
    %v20 = vpop.permute.xlu0 %19
    %vm21 = vcmask 917312
    %22 = vst.msk [vmem:[#allocation0] sm:$0x1] %vm21, %v20
    %s23 = scalar_lea.vmem %s0, 12
    %v24 = vld [vmem:[%s23] sm:$0x1]
    %25 = vrot.lane.b32.xlu0 %v24, 96
    %v26 = vpop.permute.xlu0 %25
    %vm27 = vcmask 851712
    %28 = vst.msk [vmem:[#allocation0] sm:$0x1] %vm27, %v26
    %s29 = scalar_lea.vmem %s0, 11
    %v30 = vld [vmem:[%s29] sm:$0x1]
    %31 = vrot.lane.b32.xlu0 %v30, 88
    %v32 = vpop.permute.xlu0 %31
    %vm33 = vcmask 786112
    %34 = vst.msk [vmem:[#allocation0] sm:$0x1] %vm33, %v32
    %s35 = scalar_lea.vmem %s0, 10
    %v36 = vld [vmem:[%s35] sm:$0x1]
    %37 = vrot.lane.b32.xlu0 %v36, 80
    %v38 = vpop.permute.xlu0 %37
    %vm39 = vcmask 720512
    %40 = vst.msk [vmem:[#allocation0] sm:$0x1] %vm39, %v38
    %s41 = scalar_lea.vmem %s0, 9
    %v42 = vld [vmem:[%s41] sm:$0x1]
    %43 = vrot.lane.b32.xlu0 %v42, 72
    %v44 = vpop.permute.xlu0 %43
    %vm45 = vcmask 654912
    %46 = vst.msk [vmem:[#allocation0] sm:$0x1] %vm45, %v44
    %s47 = scalar_lea.vmem %s0, 8
    %v48 = vld [vmem:[%s47] sm:$0x1]
    %49 = vrot.lane.b32.xlu0 %v48, 64
    %v50 = vpop.permute.xlu0 %49
    %vm51 = vcmask 589312
    %52 = vst.msk [vmem:[#allocation0] sm:$0x1] %vm51, %v50
    %s53 = scalar_lea.vmem %s0, 7
    %v54 = vld [vmem:[%s53] sm:$0x1]
    %55 = vrot.lane.b32.xlu0 %v54, 56
    %v56 = vpop.permute.xlu0 %55
    %vm57 = vcmask 523712
    %58 = vst.msk [vmem:[#allocation0] sm:$0x1] %vm57, %v56
    %s59 = scalar_lea.vmem %s0, 6
    %v60 = vld [vmem:[%s59] sm:$0x1]
    %61 = vrot.lane.b32.xlu0 %v60, 48
    %v62 = vpop.permute.xlu0 %61
    %vm63 = vcmask 458112
    %64 = vst.msk [vmem:[#allocation0] sm:$0x1] %vm63, %v62
    %s65 = scalar_lea.vmem %s0, 5
    %v66 = vld [vmem:[%s65] sm:$0x1]
    %67 = vrot.lane.b32.xlu0 %v66, 40
    %v68 = vpop.permute.xlu0 %67
    %vm69 = vcmask 392512
    %70 = vst.msk [vmem:[#allocation0] sm:$0x1] %vm69, %v68
    %s71 = scalar_lea.vmem %s0, 4
    %v72 = vld [vmem:[%s71] sm:$0x1]
    %73 = vrot.lane.b32.xlu0 %v72, 32
    %v74 = vpop.permute.xlu0 %73
    %vm75 = vcmask 326912
    %76 = vst.msk [vmem:[#allocation0] sm:$0x1] %vm75, %v74
    %s77 = scalar_lea.vmem %s0, 3
    %v78 = vld [vmem:[%s77] sm:$0x1]
    %79 = vrot.lane.b32.xlu0 %v78, 24
    %v80 = vpop.permute.xlu0 %79
    %vm81 = vcmask 261312
    %82 = vst.msk [vmem:[#allocation0] sm:$0x1] %vm81, %v80
    %s83 = scalar_lea.vmem %s0, 2
    %v84 = vld [vmem:[%s83] sm:$0x1]
    %85 = vrot.lane.b32.xlu0 %v84, 16
    %v86 = vpop.permute.xlu0 %85
    %vm87 = vcmask 195712
    %88 = vst.msk [vmem:[#allocation0] sm:$0x1] %vm87, %v86
    %s89 = scalar_lea.vmem %s0, 1
    %v90 = vld [vmem:[%s89] sm:$0x1]
    %91 = vrot.lane.b32.xlu0 %v90, 8
    %v92 = vpop.permute.xlu0 %91
    %vm93 = vcmask 130112
    %94 = vst.msk [vmem:[#allocation0] sm:$0x1] %vm93, %v92
    %s96 = sshllo.u32 0, 1
    %v98 = vld [vmem:[#allocation0] sm:%s96]
    %s99 = sshllo.u32 0, 1
    %100 = vst [vmem:[%s1] sm:%s99] %v98

// kernel: fractin2_pallas_nchw.1
$region0: #{fractin2_pallas_nchw.1}
  #allocation0 [shape = 'u32[]', space=smem, size = 0x4, offset = 0x4, fixed_abs, tag = 'smem constant byte address 0x4 - core index']
  #allocation1 [shape = 'u32[144,128]{1,0:T(1,128)}', space=vmem, size = 0x12000, scoped, tag = 'internal scratch']
  %s0 = inlined_call_operand.vmem [shape: f32[256,128], index: 0, kind: input, shape index: {}]
  %s1 = inlined_call_operand.vmem [shape: bf16[6,3,128,128], index: 1, kind: input, shape index: {}]
  %s2 = inlined_call_operand.vmem [shape: f32[6,1,128], index: 2, kind: input, shape index: {}]
  %s3 = inlined_call_operand.vmem [shape: f32[2,256,128], index: 3, kind: output, shape index: {}]
  %s4 = sld [smem:[#allocation0]]
  $region79: #{fractin2_pallas_nchw.1} parent=0
    _
  %s6 = ssub.s32 1, %s4
  %s7 = scalar_select 0, %s6, %s4
  $region1: #{fractin2_pallas_nchw.1} parent=0
    #allocation2 [shape = 'u8[262144]{0}', space=vmem, size = 0x40000, scoped, tag = 'output window, operand 0']
    loop: start=0, step=1, limit=4
    $region2: #{fractin2_pallas_nchw.1} parent=1 // loop_pre_header
      _
    $region3: #{fractin2_pallas_nchw.1} parent=1 // loop_header
      %s9 = sphi 0, %s13
      %p10 = scmp.ge.s32.totalorder %s9, 4
      %s19 = sphi 0, %s21
      %s22 = sphi 0, %s19
      %s23 = sphi 0, %s22
      %s39 = sphi 0, %s23
      %s43 = sphi 0, %s43
      %s45 = sphi 0, %s43
      %s46 = sphi 0, %s45
      %s60 = sphi 0, %s46
      %s64 = sphi 0, %s64
      %s66 = sphi 0, %s64
      %s67 = sphi 0, %s66
      %s81 = sphi 0, %s67
      %s87 = sphi 0, %s89
      %s90 = sphi 0, %s87
      %s91 = sphi 0, %s90
      %s107 = sphi 0, %s91
    $region4: #{fractin2_pallas_nchw.1} parent=1 // loop_header_branch
      %12 = sbr.rel (%p10) target = $region8
    $region5: #{fractin2_pallas_nchw.1} parent=1 // loop_body
      %s14 = ssub.s32 %s9, 1
      %s15 = ssub.s32 %s9, 2
      %s16 = sadd.s32 %s9, 1
      %s17 = ssub.s32 %s9, %s16
      %p18 = scmp.eq.s32.totalorder %s17, 0
      %s20 = sadd.s32 %s19, 1
      %s21 = scalar_select %p18, %s19, %s20
      %p24 = pneg %p18
      %p25 = scmp.eq.s32.totalorder %s9, 1
      %p26 = por %p24, %p25
      %p27 = scmp.ne.s32.totalorder %s19, %s22
      %p28 = scmp.eq.s32.totalorder %s9, 0
      %p29 = por %p27, %p28
      %p30 = scmp.ne.s32.totalorder %s19, %s22
      %p31 = scmp.eq.s32.totalorder %s14, 1
      %p32 = por %p30, %p31
      %p33 = scmp.ne.s32.totalorder %s22, %s23
      %p34 = scmp.eq.s32.totalorder %s14, 0
      %p35 = por %p33, %p34
      %p36 = scmp.ne.s32.totalorder %s22, %s23
      %p37 = scmp.eq.s32.totalorder %s15, 1
      %p38 = por %p36, %p37
      %p40 = scmp.ne.s32.totalorder %s23, %s39
      %p41 = scmp.eq.s32.totalorder %s15, 0
      %p42 = por %p40, %p41
      %s44 = sadd.s32 %s43, 1
      %p47 = scmp.eq.s32.totalorder %s9, 1
      %p48 = scmp.ne.s32.totalorder %s43, %s45
      %p49 = scmp.eq.s32.totalorder %s9, 0
      %p50 = por %p48, %p49
      %p51 = scmp.ne.s32.totalorder %s43, %s45
      %p52 = scmp.eq.s32.totalorder %s14, 1
      %p53 = por %p51, %p52
      %p54 = scmp.ne.s32.totalorder %s45, %s46
      %p55 = scmp.eq.s32.totalorder %s14, 0
      %p56 = por %p54, %p55
      %p57 = scmp.ne.s32.totalorder %s45, %s46
      %p58 = scmp.eq.s32.totalorder %s15, 1
      %p59 = por %p57, %p58
      %p61 = scmp.ne.s32.totalorder %s46, %s60
      %p62 = scmp.eq.s32.totalorder %s15, 0
      %p63 = por %p61, %p62
      %s65 = sadd.s32 %s64, 1
      %p68 = scmp.eq.s32.totalorder %s9, 1
      %p69 = scmp.ne.s32.totalorder %s64, %s66
      %p70 = scmp.eq.s32.totalorder %s9, 0
      %p71 = por %p69, %p70
      %p72 = scmp.ne.s32.totalorder %s64, %s66
      %p73 = scmp.eq.s32.totalorder %s14, 1
      %p74 = por %p72, %p73
      %p75 = scmp.ne.s32.totalorder %s66, %s67
      %p76 = scmp.eq.s32.totalorder %s14, 0
      %p77 = por %p75, %p76
      %p78 = scmp.ne.s32.totalorder %s66, %s67
      %p79 = scmp.eq.s32.totalorder %s15, 1
      %p80 = por %p78, %p79
      %p82 = scmp.ne.s32.totalorder %s67, %s81
      %p83 = scmp.eq.s32.totalorder %s15, 0
      %p84 = por %p82, %p83
      %s85 = ssub.s32 %s9, %s16
      %p86 = scmp.eq.s32.totalorder %s85, 0
      %s88 = sadd.s32 %s87, 1
      %s89 = scalar_select %p86, %s87, %s88
      %p92 = pneg %p86
      %p93 = scmp.eq.s32.totalorder %s9, 1
      %p94 = por %p92, %p93
      %p95 = scmp.ne.s32.totalorder %s87, %s90
      %p96 = scmp.eq.s32.totalorder %s9, 0
      %p97 = por %p95, %p96
      %p98 = scmp.ne.s32.totalorder %s87, %s90
      %p99 = scmp.eq.s32.totalorder %s14, 1
      %p100 = por %p98, %p99
      %p101 = scmp.ne.s32.totalorder %s90, %s91
      %p102 = scmp.eq.s32.totalorder %s14, 0
      %p103 = por %p101, %p102
      %p104 = scmp.ne.s32.totalorder %s90, %s91
      %p105 = scmp.eq.s32.totalorder %s15, 1
      %p106 = por %p104, %p105
      %p108 = scmp.ne.s32.totalorder %s91, %s107
      %p109 = scmp.eq.s32.totalorder %s15, 0
      %p110 = por %p108, %p109
      %p111 = scmp.le.s32.totalorder 1, %s9
      %p112 = scmp.lt.s32.totalorder %s9, 3
      %p113 = pnand %p111, %p112
      %p114 = pneg %p113
      // Predicated region
      $region9: #{fractin2_pallas_nchw.1} parent=5 // pred_check
        _
      $region10: #{fractin2_pallas_nchw.1} parent=5 // pred_check_branch
        %116 = sbr.rel (%p113) target = $region12
      $region11: #{fractin2_pallas_nchw.1} parent=5 // pred_region
        %s117 = ssub.s32 %s9, 1
        // Predicated region
        $region13: #{fractin2_pallas_nchw.1} parent=11 // pred_check
          %p118 = pneg %p56
        $region14: #{fractin2_pallas_nchw.1} parent=11 // pred_check_branch
          %120 = sbr.rel (%p118) target = $region16
        $region15: #{fractin2_pallas_nchw.1} parent=11 // pred_region
          _
        $region16: #{fractin2_pallas_nchw.1} parent=11 // pred_fallthru
          _
        // Predicated region
        $region17: #{fractin2_pallas_nchw.1} parent=11 // pred_check
          %p121 = pneg %p77
        $region18: #{fractin2_pallas_nchw.1} parent=11 // pred_check_branch
          %123 = sbr.rel (%p121) target = $region20
        $region19: #{fractin2_pallas_nchw.1} parent=11 // pred_region
          _
        $region20: #{fractin2_pallas_nchw.1} parent=11 // pred_fallthru
          _
      $region12: #{fractin2_pallas_nchw.1} parent=5 // pred_fallthru
        _
      %p124 = scmp.lt.s32.totalorder %s9, 2
      // Predicated region
      $region21: #{fractin2_pallas_nchw.1} parent=5 // pred_check
        %p125 = pneg %p124
      $region22: #{fractin2_pallas_nchw.1} parent=5 // pred_check_branch
        %127 = sbr.rel (%p125) target = $region24
      $region23: #{fractin2_pallas_nchw.1} parent=5 // pred_region
        // Predicated region
        $region25: #{fractin2_pallas_nchw.1} parent=23 // pred_check
          %p128 = pneg %p29
        $region26: #{fractin2_pallas_nchw.1} parent=23 // pred_check_branch
          %130 = sbr.rel (%p128) target = $region28
        $region27: #{fractin2_pallas_nchw.1} parent=23 // pred_region
          %s131 = smul.u32 16, %s9
          %p132 = scmp.lt.s32.totalorder %s131, 31
          %s133 = scalar_select %p132, %s131, 31
          %s134 = smul.addr %s133, 8
          %s135 = scalar_lea.vmem %s0, %s134
          %s136 = smul.u32 16, %s9
        $region28: #{fractin2_pallas_nchw.1} parent=23 // pred_fallthru
          _
      $region24: #{fractin2_pallas_nchw.1} parent=5 // pred_fallthru
        _
      %p137 = scmp.le.s32.totalorder 1, %s9
      %p138 = scmp.lt.s32.totalorder %s9, 3
      %p139 = pnand %p137, %p138
      %p140 = pneg %p139
      // Predicated region
      $region29: #{fractin2_pallas_nchw.1} parent=5 // pred_check
        _
      $region30: #{fractin2_pallas_nchw.1} parent=5 // pred_check_branch
        %142 = sbr.rel (%p139) target = $region32
      $region31: #{fractin2_pallas_nchw.1} parent=5 // pred_region
        %s143 = ssub.s32 %s9, 1
        %s144 = smul.u32 16, %s14
        %p145 = scmp.lt.s32.totalorder %s144, 31
        %s146 = scalar_select %p145, %s144, 31
        %s147 = smul.addr %s146, 8
        %s148 = scalar_lea.vmem %s0, %s147
        %p149 = pneg %p35
        %p150 = pneg %p32
        %p151 = pneg %p56
        %p152 = pneg %p53
        %p153 = pneg %p77
        %p154 = pneg %p74
        %p155 = pneg %p103
        %p156 = pneg %p100
        %s157 = sand.u32 %s90, 1
        %s158 = sand.u32 %s90, 1
        %s159 = smul.addr %s158, 256
        %s160 = scalar_lea.vmem [#allocation2], %s159
        %s161 = smul.u32 16, %s14
        %p162 = scmp.lt.s32.totalorder %s161, 31
        %s163 = scalar_select %p162, %s161, 31
        %s164 = smul.addr %s163, 8
        %s165 = scalar_lea.vmem %s0, %s164
        %s166 = smul.u32 16, %s14
        %s167 = smul.u32 16, %s14
        %v169 = vlaneseq
        %v170 = vshrl.u32 %v169, 7
        %v171 = vadd.s32 %v170, 8
        %v172 = vadd.s32 %v170, 16
        %v173 = vadd.s32 %v170, 24
        %v174 = vadd.s32 %v170, 32
        %v175 = vadd.s32 %v170, 40
        %v176 = vadd.s32 %v170, 48
        %v177 = vadd.s32 %v170, 56
        %v178 = vadd.s32 %v170, 64
        %v179 = vadd.s32 %v170, 72
        %v180 = vadd.s32 %v170, 80
        %v181 = vadd.s32 %v170, 88
        %v182 = vadd.s32 %v170, 96
        %v183 = vadd.s32 %v170, 104
        %v184 = vadd.s32 %v170, 112
        %v185 = vadd.s32 %v170, 120
        %vm186 = vcmp.lt.s32.totalorder %v170, 0
        %v187 = vsub.s32 0, %v170
        %v188 = vsel %vm186, %v187, %v170
        %v189 = vshrl.u32 %v188, 4
        %v190 = vand.u32 %v188, 15
        %v191 = vsub.s32 0, %v190
        %v192 = vsel %vm186, %v191, %v190
        %vm193 = vcmp.lt.s32.totalorder %v171, 0
        %v194 = vsub.s32 0, %v171
        %v195 = vsel %vm193, %v194, %v171
        %v196 = vshrl.u32 %v195, 4
        %v197 = vand.u32 %v195, 15
        %v198 = vsub.s32 0, %v197
        %v199 = vsel %vm193, %v198, %v197
        %vm200 = vcmp.lt.s32.totalorder %v172, 0
        %v201 = vsub.s32 0, %v172
        %v202 = vsel %vm200, %v201, %v172
        %v203 = vshrl.u32 %v202, 4
        %v204 = vand.u32 %v202, 15
        %v205 = vsub.s32 0, %v204
        %v206 = vsel %vm200, %v205, %v204
        %vm207 = vcmp.lt.s32.totalorder %v173, 0
        %v208 = vsub.s32 0, %v173
        %v209 = vsel %vm207, %v208, %v173
        %v210 = vshrl.u32 %v209, 4
        %v211 = vand.u32 %v209, 15
        %v212 = vsub.s32 0, %v211
        %v213 = vsel %vm207, %v212, %v211
        %vm214 = vcmp.lt.s32.totalorder %v174, 0
        %v215 = vsub.s32 0, %v174
        %v216 = vsel %vm214, %v215, %v174
        %v217 = vshrl.u32 %v216, 4
        %v218 = vand.u32 %v216, 15
        %v219 = vsub.s32 0, %v218
        %v220 = vsel %vm214, %v219, %v218
        %vm221 = vcmp.lt.s32.totalorder %v175, 0
        %v222 = vsub.s32 0, %v175
        %v223 = vsel %vm221, %v222, %v175
        %v224 = vshrl.u32 %v223, 4
        %v225 = vand.u32 %v223, 15
        %v226 = vsub.s32 0, %v225
        %v227 = vsel %vm221, %v226, %v225
        %vm228 = vcmp.lt.s32.totalorder %v176, 0
        %v229 = vsub.s32 0, %v176
        %v230 = vsel %vm228, %v229, %v176
        %v231 = vshrl.u32 %v230, 4
        %v232 = vand.u32 %v230, 15
        %v233 = vsub.s32 0, %v232
        %v234 = vsel %vm228, %v233, %v232
        %vm235 = vcmp.lt.s32.totalorder %v177, 0
        %v236 = vsub.s32 0, %v177
        %v237 = vsel %vm235, %v236, %v177
        %v238 = vshrl.u32 %v237, 4
        %v239 = vand.u32 %v237, 15
        %v240 = vsub.s32 0, %v239
        %v241 = vsel %vm235, %v240, %v239
        %vm242 = vcmp.lt.s32.totalorder %v178, 0
        %v243 = vsub.s32 0, %v178
        %v244 = vsel %vm242, %v243, %v178
        %v245 = vshrl.u32 %v244, 4
        %v246 = vand.u32 %v244, 15
        %v247 = vsub.s32 0, %v246
        %v248 = vsel %vm242, %v247, %v246
        %vm249 = vcmp.lt.s32.totalorder %v179, 0
        %v250 = vsub.s32 0, %v179
        %v251 = vsel %vm249, %v250, %v179
        %v252 = vshrl.u32 %v251, 4
        %v253 = vand.u32 %v251, 15
        %v254 = vsub.s32 0, %v253
        %v255 = vsel %vm249, %v254, %v253
        %vm256 = vcmp.lt.s32.totalorder %v180, 0
        %v257 = vsub.s32 0, %v180
        %v258 = vsel %vm256, %v257, %v180
        %v259 = vshrl.u32 %v258, 4
        %v260 = vand.u32 %v258, 15
        %v261 = vsub.s32 0, %v260
        %v262 = vsel %vm256, %v261, %v260
        %vm263 = vcmp.lt.s32.totalorder %v181, 0
        %v264 = vsub.s32 0, %v181
        %v265 = vsel %vm263, %v264, %v181
        %v266 = vshrl.u32 %v265, 4
        %v267 = vand.u32 %v265, 15
        %v268 = vsub.s32 0, %v267
        %v269 = vsel %vm263, %v268, %v267
        %vm270 = vcmp.lt.s32.totalorder %v182, 0
        %v271 = vsub.s32 0, %v182
        %v272 = vsel %vm270, %v271, %v182
        %v273 = vshrl.u32 %v272, 4
        %v274 = vand.u32 %v272, 15
        %v275 = vsub.s32 0, %v274
        %v276 = vsel %vm270, %v275, %v274
        %vm277 = vcmp.lt.s32.totalorder %v183, 0
        %v278 = vsub.s32 0, %v183
        %v279 = vsel %vm277, %v278, %v183
        %v280 = vshrl.u32 %v279, 4
        %v281 = vand.u32 %v279, 15
        %v282 = vsub.s32 0, %v281
        %v283 = vsel %vm277, %v282, %v281
        %vm284 = vcmp.lt.s32.totalorder %v184, 0
        %v285 = vsub.s32 0, %v184
        %v286 = vsel %vm284, %v285, %v184
        %v287 = vshrl.u32 %v286, 4
        %v288 = vand.u32 %v286, 15
        %v289 = vsub.s32 0, %v288
        %v290 = vsel %vm284, %v289, %v288
        %vm291 = vcmp.lt.s32.totalorder %v185, 0
        %v292 = vsub.s32 0, %v185
        %v293 = vsel %vm291, %v292, %v185
        %v294 = vshrl.u32 %v293, 4
        %v295 = vand.u32 %v293, 15
        %v296 = vsub.s32 0, %v295
        %v297 = vsel %vm291, %v296, %v295
        %vm298 = vcmp.ne.s32.totalorder %v192, 0
        %vm299 = vcmp.ne.s32.totalorder %v199, 0
        %vm300 = vcmp.ne.s32.totalorder %v206, 0
        %vm301 = vcmp.ne.s32.totalorder %v213, 0
        %vm302 = vcmp.ne.s32.totalorder %v220, 0
        %vm303 = vcmp.ne.s32.totalorder %v227, 0
        %vm304 = vcmp.ne.s32.totalorder %v234, 0
        %vm305 = vcmp.ne.s32.totalorder %v241, 0
        %vm306 = vcmp.ne.s32.totalorder %v248, 0
        %vm307 = vcmp.ne.s32.totalorder %v255, 0
        %vm308 = vcmp.ne.s32.totalorder %v262, 0
        %vm309 = vcmp.ne.s32.totalorder %v269, 0
        %vm310 = vcmp.ne.s32.totalorder %v276, 0
        %vm311 = vcmp.ne.s32.totalorder %v283, 0
        %vm312 = vcmp.ne.s32.totalorder %v290, 0
        %vm313 = vcmp.ne.s32.totalorder %v297, 0
        %vm314 = vcmp.lt.s32.totalorder %v192, 0
        %vm315 = vcmp.lt.s32.totalorder %v199, 0
        %vm316 = vcmp.lt.s32.totalorder %v206, 0
        %vm317 = vcmp.lt.s32.totalorder %v213, 0
        %vm318 = vcmp.lt.s32.totalorder %v220, 0
        %vm319 = vcmp.lt.s32.totalorder %v227, 0
        %vm320 = vcmp.lt.s32.totalorder %v234, 0
        %vm321 = vcmp.lt.s32.totalorder %v241, 0
        %vm322 = vcmp.lt.s32.totalorder %v248, 0
        %vm323 = vcmp.lt.s32.totalorder %v255, 0
        %vm324 = vcmp.lt.s32.totalorder %v262, 0
        %vm325 = vcmp.lt.s32.totalorder %v269, 0
        %vm326 = vcmp.lt.s32.totalorder %v276, 0
        %vm327 = vcmp.lt.s32.totalorder %v283, 0
        %vm328 = vcmp.lt.s32.totalorder %v290, 0
        %vm329 = vcmp.lt.s32.totalorder %v297, 0
        %vm330 = vmand %vm314, %vm298
        %vm331 = vmand %vm315, %vm299
        %vm332 = vmand %vm316, %vm300
        %vm333 = vmand %vm317, %vm301
        %vm334 = vmand %vm318, %vm302
        %vm335 = vmand %vm319, %vm303
        %vm336 = vmand %vm320, %vm304
        %vm337 = vmand %vm321, %vm305
        %vm338 = vmand %vm322, %vm306
        %vm339 = vmand %vm323, %vm307
        %vm340 = vmand %vm324, %vm308
        %vm341 = vmand %vm325, %vm309
        %vm342 = vmand %vm326, %vm310
        %vm343 = vmand %vm327, %vm311
        %vm344 = vmand %vm328, %vm312
        %vm345 = vmand %vm329, %vm313
        %v346 = vadd.s32 %v192, 16
        %v347 = vadd.s32 %v199, 16
        %v348 = vadd.s32 %v206, 16
        %v349 = vadd.s32 %v213, 16
        %v350 = vadd.s32 %v220, 16
        %v351 = vadd.s32 %v227, 16
        %v352 = vadd.s32 %v234, 16
        %v353 = vadd.s32 %v241, 16
        %v354 = vadd.s32 %v248, 16
        %v355 = vadd.s32 %v255, 16
        %v356 = vadd.s32 %v262, 16
        %v357 = vadd.s32 %v269, 16
        %v358 = vadd.s32 %v276, 16
        %v359 = vadd.s32 %v283, 16
        %v360 = vadd.s32 %v290, 16
        %v361 = vadd.s32 %v297, 16
        %v362 = vsel %vm330, %v346, %v192
        %v363 = vsel %vm331, %v347, %v199
        %v364 = vsel %vm332, %v348, %v206
        %v365 = vsel %vm333, %v349, %v213
        %v366 = vsel %vm334, %v350, %v220
        %v367 = vsel %vm335, %v351, %v227
        %v368 = vsel %vm336, %v352, %v234
        %v369 = vsel %vm337, %v353, %v241
        %v370 = vsel %vm338, %v354, %v248
        %v371 = vsel %vm339, %v355, %v255
        %v372 = vsel %vm340, %v356, %v262
        %v373 = vsel %vm341, %v357, %v269
        %v374 = vsel %vm342, %v358, %v276
        %v375 = vsel %vm343, %v359, %v283
        %v376 = vsel %vm344, %v360, %v290
        %v377 = vsel %vm345, %v361, %v297
        %vm378 = vcmp.ne.s32.totalorder %v362, 0
        %vm379 = vcmp.ne.s32.totalorder %v363, 0
        %vm380 = vcmp.ne.s32.totalorder %v364, 0
        %vm381 = vcmp.ne.s32.totalorder %v365, 0
        %vm382 = vcmp.ne.s32.totalorder %v366, 0
        %vm383 = vcmp.ne.s32.totalorder %v367, 0
        %vm384 = vcmp.ne.s32.totalorder %v368, 0
        %vm385 = vcmp.ne.s32.totalorder %v369, 0
        %vm386 = vcmp.ne.s32.totalorder %v370, 0
        %vm387 = vcmp.ne.s32.totalorder %v371, 0
        %vm388 = vcmp.ne.s32.totalorder %v372, 0
        %vm389 = vcmp.ne.s32.totalorder %v373, 0
        %vm390 = vcmp.ne.s32.totalorder %v374, 0
        %vm391 = vcmp.ne.s32.totalorder %v375, 0
        %vm392 = vcmp.ne.s32.totalorder %v376, 0
        %vm393 = vcmp.ne.s32.totalorder %v377, 0
        %vm394 = vcmp.ne.s32.totalorder %v362, 15
        %vm395 = vcmp.ne.s32.totalorder %v363, 15
        %vm396 = vcmp.ne.s32.totalorder %v364, 15
        %vm397 = vcmp.ne.s32.totalorder %v365, 15
        %vm398 = vcmp.ne.s32.totalorder %v366, 15
        %vm399 = vcmp.ne.s32.totalorder %v367, 15
        %vm400 = vcmp.ne.s32.totalorder %v368, 15
        %vm401 = vcmp.ne.s32.totalorder %v369, 15
        %vm402 = vcmp.ne.s32.totalorder %v370, 15
        %vm403 = vcmp.ne.s32.totalorder %v371, 15
        %vm404 = vcmp.ne.s32.totalorder %v372, 15
        %vm405 = vcmp.ne.s32.totalorder %v373, 15
        %vm406 = vcmp.ne.s32.totalorder %v374, 15
        %vm407 = vcmp.ne.s32.totalorder %v375, 15
        %vm408 = vcmp.ne.s32.totalorder %v376, 15
        %vm409 = vcmp.ne.s32.totalorder %v377, 15
        %v410 = vld [vmem:[%s165] sm:$0xff]
        %v411 = vld [vmem:[%s165 + $0x8] sm:$0xff]
        %v412 = vld [vmem:[%s165 + $0x10] sm:$0xff]
        %v413 = vld [vmem:[%s165 + $0x18] sm:$0xff]
        %v414 = vld [vmem:[%s165 + $0x20] sm:$0xff]
        %v415 = vld [vmem:[%s165 + $0x28] sm:$0xff]
        %v416 = vld [vmem:[%s165 + $0x30] sm:$0xff]
        %v417 = vld [vmem:[%s165 + $0x38] sm:$0xff]
        %v418 = vld [vmem:[%s165 + $0x40] sm:$0xff]
        %v419 = vld [vmem:[%s165 + $0x48] sm:$0xff]
        %v420 = vld [vmem:[%s165 + $0x50] sm:$0xff]
        %v421 = vld [vmem:[%s165 + $0x58] sm:$0xff]
        %v422 = vld [vmem:[%s165 + $0x60] sm:$0xff]
        %v423 = vld [vmem:[%s165 + $0x68] sm:$0xff]
        %v424 = vld [vmem:[%s165 + $0x70] sm:$0xff]
        %v425 = vld [vmem:[%s165 + $0x78] sm:$0xff]
        %v426 = vrot.slane %v410, 7
        %v427 = vrot.slane %v411, 7
        %v428 = vrot.slane %v412, 7
        %v429 = vrot.slane %v413, 7
        %v430 = vrot.slane %v414, 7
        %v431 = vrot.slane %v415, 7
        %v432 = vrot.slane %v416, 7
        %v433 = vrot.slane %v417, 7
        %v434 = vrot.slane %v418, 7
        %v435 = vrot.slane %v419, 7
        %v436 = vrot.slane %v420, 7
        %v437 = vrot.slane %v421, 7
        %v438 = vrot.slane %v422, 7
        %v439 = vrot.slane %v423, 7
        %v440 = vrot.slane %v424, 7
        %v441 = vrot.slane %v425, 7
        %vm442 = vcmp.lt.s32.totalorder %v170, 1
        %v443 = vsel %vm442, %v440, %v441
        %v444 = vsel %vm442, %v439, %v440
        %v445 = vsel %vm442, %v438, %v439
        %v446 = vsel %vm442, %v437, %v438
        %v447 = vsel %vm442, %v436, %v437
        %v448 = vsel %vm442, %v435, %v436
        %v449 = vsel %vm442, %v434, %v435
        %v450 = vsel %vm442, %v433, %v434
        %v451 = vsel %vm442, %v432, %v433
        %v452 = vsel %vm442, %v431, %v432
        %v453 = vsel %vm442, %v430, %v431
        %v454 = vsel %vm442, %v429, %v430
        %v455 = vsel %vm442, %v428, %v429
        %v456 = vsel %vm442, %v427, %v428
        %v457 = vsel %vm442, %v426, %v427
        %v458 = vsel %vm442, %v441, %v426
        %v459 = vsel %vm378, %v458, 0.0
        %v460 = vsel %vm379, %v457, 0.0
        %v461 = vsel %vm380, %v456, 0.0
        %v462 = vsel %vm381, %v455, 0.0
        %v463 = vsel %vm382, %v454, 0.0
        %v464 = vsel %vm383, %v453, 0.0
        %v465 = vsel %vm384, %v452, 0.0
        %v466 = vsel %vm385, %v451, 0.0
        %v467 = vsel %vm386, %v450, 0.0
        %v468 = vsel %vm387, %v449, 0.0
        %v469 = vsel %vm388, %v448, 0.0
        %v470 = vsel %vm389, %v447, 0.0
        %v471 = vsel %vm390, %v446, 0.0
        %v472 = vsel %vm391, %v445, 0.0
        %v473 = vsel %vm392, %v444, 0.0
        %v474 = vsel %vm393, %v443, 0.0
        %v475 = vrot.slane %v410, 1
        %v476 = vrot.slane %v411, 1
        %v477 = vrot.slane %v412, 1
        %v478 = vrot.slane %v413, 1
        %v479 = vrot.slane %v414, 1
        %v480 = vrot.slane %v415, 1
        %v481 = vrot.slane %v416, 1
        %v482 = vrot.slane %v417, 1
        %v483 = vrot.slane %v418, 1
        %v484 = vrot.slane %v419, 1
        %v485 = vrot.slane %v420, 1
        %v486 = vrot.slane %v421, 1
        %v487 = vrot.slane %v422, 1
        %v488 = vrot.slane %v423, 1
        %v489 = vrot.slane %v424, 1
        %v490 = vrot.slane %v425, 1
        %vm491 = vcmp.lt.s32.totalorder %v170, 7
        %v492 = vsel %vm491, %v489, %v490
        %v493 = vsel %vm491, %v488, %v489
        %v494 = vsel %vm491, %v487, %v488
        %v495 = vsel %vm491, %v486, %v487
        %v496 = vsel %vm491, %v485, %v486
        %v497 = vsel %vm491, %v484, %v485
        %v498 = vsel %vm491, %v483, %v484
        %v499 = vsel %vm491, %v482, %v483
        %v500 = vsel %vm491, %v481, %v482
        %v501 = vsel %vm491, %v480, %v481
        %v502 = vsel %vm491, %v479, %v480
        %v503 = vsel %vm491, %v478, %v479
        %v504 = vsel %vm491, %v477, %v478
        %v505 = vsel %vm491, %v476, %v477
        %v506 = vsel %vm491, %v475, %v476
        %v507 = vsel %vm491, %v490, %v475
        %v508 = vsel %vm394, %v506, 0.0
        %v509 = vsel %vm395, %v505, 0.0
        %v510 = vsel %vm396, %v504, 0.0
        %v511 = vsel %vm397, %v503, 0.0
        %v512 = vsel %vm398, %v502, 0.0
        %v513 = vsel %vm399, %v501, 0.0
        %v514 = vsel %vm400, %v500, 0.0
        %v515 = vsel %vm401, %v499, 0.0
        %v516 = vsel %vm402, %v498, 0.0
        %v517 = vsel %vm403, %v497, 0.0
        %v518 = vsel %vm404, %v496, 0.0
        %v519 = vsel %vm405, %v495, 0.0
        %v520 = vsel %vm406, %v494, 0.0
        %v521 = vsel %vm407, %v493, 0.0
        %v522 = vsel %vm408, %v492, 0.0
        %v523 = vsel %vm409, %v507, 0.0
        %v524 = vpack.c.bf16 %v411, %v410
        %v525 = vpack.c.bf16 %v413, %v412
        %v526 = vpack.c.bf16 %v415, %v414
        %v527 = vpack.c.bf16 %v417, %v416
        %v528 = vpack.c.bf16 %v419, %v418
        %v529 = vpack.c.bf16 %v421, %v420
        %v530 = vpack.c.bf16 %v423, %v422
        %v531 = vpack.c.bf16 %v425, %v424
        %s532 = scalar_lea.vmem %s1, 64
        %v533 = vld [vmem:[%s532] sm:$0xf]
        %v534 = vld [vmem:[%s532 + $0x4] sm:$0xf]
        %v535 = vld [vmem:[%s532 + $0x8] sm:$0xf]
        %v536 = vld [vmem:[%s532 + $0xc] sm:$0xf]
        %v537 = vld [vmem:[%s532 + $0x10] sm:$0xf]
        %v538 = vld [vmem:[%s532 + $0x14] sm:$0xf]
        %v539 = vld [vmem:[%s532 + $0x18] sm:$0xf]
        %v540 = vld [vmem:[%s532 + $0x1c] sm:$0xf]
        %v541 = vld [vmem:[%s532 + $0x20] sm:$0xf]
        %v542 = vld [vmem:[%s532 + $0x24] sm:$0xf]
        %v543 = vld [vmem:[%s532 + $0x28] sm:$0xf]
        %v544 = vld [vmem:[%s532 + $0x2c] sm:$0xf]
        %v545 = vld [vmem:[%s532 + $0x30] sm:$0xf]
        %v546 = vld [vmem:[%s532 + $0x34] sm:$0xf]
        %v547 = vld [vmem:[%s532 + $0x38] sm:$0xf]
        %v548 = vld [vmem:[%s532 + $0x3c] sm:$0xf]
        %v549 = vld [vmem:[%s2] sm:$0x1]
        %v551 = vlaneseq
        %v552 = vshrl.u32 %v551, 7
        %v553 = vsub.s32 0, %v552
        %v554 = vrot.slane %v549, %v553
        %v572 = vunpack.c.l.b16 %v533
        %v573 = vunpack.c.l.b16 %v534
        %v574 = vunpack.c.l.b16 %v535
        %v575 = vunpack.c.l.b16 %v536
        %v576 = vunpack.c.l.b16 %v537
        %v577 = vunpack.c.l.b16 %v538
        %v578 = vunpack.c.l.b16 %v539
        %v579 = vunpack.c.l.b16 %v540
        %v580 = vunpack.c.l.b16 %v541
        %v581 = vunpack.c.l.b16 %v542
        %v582 = vunpack.c.l.b16 %v543
        %v583 = vunpack.c.l.b16 %v544
        %v584 = vunpack.c.l.b16 %v545
        %v585 = vunpack.c.l.b16 %v546
        %v586 = vunpack.c.l.b16 %v547
        %v587 = vunpack.c.l.b16 %v548
        %v588 = vpack.c.b16 %v573, %v572
        %v589 = vpack.c.b16 %v575, %v574
        %v590 = vpack.c.b16 %v577, %v576
        %v591 = vpack.c.b16 %v579, %v578
        %v592 = vpack.c.b16 %v581, %v580
        %v593 = vpack.c.b16 %v583, %v582
        %v594 = vpack.c.b16 %v585, %v584
        %v595 = vpack.c.b16 %v587, %v586
        %604 = vmatprep.subr.bf16.mxu0 0
        %605 = vmatpush1.bf16.msra.mxu0 %v588
        %606 = vmatprep.subr.bf16.mxu0 0
        %607 = vmatpush1.bf16.msra.mxu0 %v589
        %608 = vmatprep.subr.bf16.mxu0 0
        %609 = vmatpush1.bf16.msra.mxu0 %v590
        %610 = vmatprep.subr.bf16.mxu0 0
        %611 = vmatpush1.bf16.msra.mxu0 %v591
        %612 = vmatprep.subr.bf16.mxu0 0
        %613 = vmatpush1.bf16.msra.mxu0 %v592
        %614 = vmatprep.subr.bf16.mxu0 0
        %615 = vmatpush1.bf16.msra.mxu0 %v593
        %616 = vmatprep.subr.bf16.mxu0 0
        %617 = vmatpush1.bf16.msra.mxu0 %v594
        %618 = vmatprep.subr.bf16.mxu0 0
        %619 = vmatpush1.bf16.msra.mxu0 %v595
        %620 = vmatprep.subr.bf16.mxu0 0
        %621 = vmatpush1.bf16.msra.mxu0 0
        %622 = vmatprep.subr.bf16.mxu0 0
        %623 = vmatpush1.bf16.msra.mxu0 0
        %624 = vmatprep.subr.bf16.mxu0 0
        %625 = vmatpush1.bf16.msra.mxu0 0
        %626 = vmatprep.subr.bf16.mxu0 0
        %627 = vmatpush1.bf16.msra.mxu0 0
        %628 = vmatprep.subr.bf16.mxu0 0
        %629 = vmatpush1.bf16.msra.mxu0 0
        %630 = vmatprep.subr.bf16.mxu0 0
        %631 = vmatpush1.bf16.msra.mxu0 0
        %632 = vmatprep.subr.bf16.mxu0 0
        %633 = vmatpush1.bf16.msra.mxu0 0
        %634 = vmatprep.subr.bf16.mxu0 0
        %635 = vmatpush1.bf16.msra.mxu0 0
        %636 = vmatprep.mubr.bf16.mxu0 0
        %637 = vmatmul.mubr.bf16.gmra.mrb[0].mxu0 %v524
        %v638 = vpop.f32.mrb[0].mxu0
        %v639 = vadd.f32 %v554, %v638
        %v640 = vpop.f32.mrb[0].mxu0
        %v641 = vpop.f32.mrb[0].mxu0
        %v642 = vadd.f32 %v554, %v641
        %v643 = vpop.f32.mrb[0].mxu0
        %644 = vmatprep.mubr.bf16.mxu0 0
        %645 = vmatmul.mubr.bf16.gmra.mrb[0].mxu0 %v525
        %v646 = vpop.f32.mrb[0].mxu0
        %v647 = vadd.f32 %v554, %v646
        %v648 = vpop.f32.mrb[0].mxu0
        %v649 = vpop.f32.mrb[0].mxu0
        %v650 = vadd.f32 %v554, %v649
        %v651 = vpop.f32.mrb[0].mxu0
        %652 = vmatprep.mubr.bf16.mxu0 0
        %653 = vmatmul.mubr.bf16.gmra.mrb[0].mxu0 %v526
        %v654 = vpop.f32.mrb[0].mxu0
        %v655 = vadd.f32 %v554, %v654
        %v656 = vpop.f32.mrb[0].mxu0
        %v657 = vpop.f32.mrb[0].mxu0
        %v658 = vadd.f32 %v554, %v657
        %v659 = vpop.f32.mrb[0].mxu0
        %660 = vmatprep.mubr.bf16.mxu0 0
        %661 = vmatmul.mubr.bf16.gmra.mrb[0].mxu0 %v527
        %v662 = vpop.f32.mrb[0].mxu0
        %v663 = vadd.f32 %v554, %v662
        %v664 = vpop.f32.mrb[0].mxu0
        %v665 = vpop.f32.mrb[0].mxu0
        %v666 = vadd.f32 %v554, %v665
        %v667 = vpop.f32.mrb[0].mxu0
        %668 = vmatprep.mubr.bf16.mxu0 0
        %669 = vmatmul.mubr.bf16.gmra.mrb[0].mxu0 %v528
        %v670 = vpop.f32.mrb[0].mxu0
        %v671 = vadd.f32 %v554, %v670
        %v672 = vpop.f32.mrb[0].mxu0
        %v673 = vpop.f32.mrb[0].mxu0
        %v674 = vadd.f32 %v554, %v673
        %v675 = vpop.f32.mrb[0].mxu0
        %676 = vmatprep.mubr.bf16.mxu0 0
        %677 = vmatmul.mubr.bf16.gmra.mrb[0].mxu0 %v529
        %v678 = vpop.f32.mrb[0].mxu0
        %v679 = vadd.f32 %v554, %v678
        %v680 = vpop.f32.mrb[0].mxu0
        %v681 = vpop.f32.mrb[0].mxu0
        %v682 = vadd.f32 %v554, %v681
        %v683 = vpop.f32.mrb[0].mxu0
        %684 = vmatprep.mubr.bf16.mxu0 0
        %685 = vmatmul.mubr.bf16.gmra.mrb[0].mxu0 %v530
        %v686 = vpop.f32.mrb[0].mxu0
        %v687 = vadd.f32 %v554, %v686
        %v688 = vpop.f32.mrb[0].mxu0
        %v689 = vpop.f32.mrb[0].mxu0
        %v690 = vadd.f32 %v554, %v689
        %v691 = vpop.f32.mrb[0].mxu0
        %692 = vmatprep.mubr.bf16.mxu0 0
        %693 = vmatmul.mubr.bf16.gmra.mrb[0].mxu0 %v531
        %v694 = vpop.f32.mrb[0].mxu0
        %v695 = vadd.f32 %v554, %v694
        %v696 = vpop.f32.mrb[0].mxu0
        %v697 = vpop.f32.mrb[0].mxu0
        %v698 = vadd.f32 %v554, %v697
        %v699 = vpop.f32.mrb[0].mxu0
        %700 = vdwg.mxu0
        %v701 = vpack.c.bf16 %v460, %v459
        %v702 = vpack.c.bf16 %v462, %v461
        %v703 = vpack.c.bf16 %v464, %v463
        %v704 = vpack.c.bf16 %v466, %v465
        %v705 = vpack.c.bf16 %v468, %v467
        %v706 = vpack.c.bf16 %v470, %v469
        %v707 = vpack.c.bf16 %v472, %v471
        %v708 = vpack.c.bf16 %v474, %v473
        %v709 = vld [vmem:[%s1] sm:$0xf]
        %v710 = vld [vmem:[%s1 + $0x4] sm:$0xf]
        %v711 = vld [vmem:[%s1 + $0x8] sm:$0xf]
        %v712 = vld [vmem:[%s1 + $0xc] sm:$0xf]
        %v713 = vld [vmem:[%s1 + $0x10] sm:$0xf]
        %v714 = vld [vmem:[%s1 + $0x14] sm:$0xf]
        %v715 = vld [vmem:[%s1 + $0x18] sm:$0xf]
        %v716 = vld [vmem:[%s1 + $0x1c] sm:$0xf]
        %v717 = vld [vmem:[%s1 + $0x20] sm:$0xf]
        %v718 = vld [vmem:[%s1 + $0x24] sm:$0xf]
        %v719 = vld [vmem:[%s1 + $0x28] sm:$0xf]
        %v720 = vld [vmem:[%s1 + $0x2c] sm:$0xf]
        %v721 = vld [vmem:[%s1 + $0x30] sm:$0xf]
        %v722 = vld [vmem:[%s1 + $0x34] sm:$0xf]
        %v723 = vld [vmem:[%s1 + $0x38] sm:$0xf]
        %v724 = vld [vmem:[%s1 + $0x3c] sm:$0xf]
        %v741 = vunpack.c.l.b16 %v709
        %v742 = vunpack.c.l.b16 %v710
        %v743 = vunpack.c.l.b16 %v711
        %v744 = vunpack.c.l.b16 %v712
        %v745 = vunpack.c.l.b16 %v713
        %v746 = vunpack.c.l.b16 %v714
        %v747 = vunpack.c.l.b16 %v715
        %v748 = vunpack.c.l.b16 %v716
        %v749 = vunpack.c.l.b16 %v717
        %v750 = vunpack.c.l.b16 %v718
        %v751 = vunpack.c.l.b16 %v719
        %v752 = vunpack.c.l.b16 %v720
        %v753 = vunpack.c.l.b16 %v721
        %v754 = vunpack.c.l.b16 %v722
        %v755 = vunpack.c.l.b16 %v723
        %v756 = vunpack.c.l.b16 %v724
        %v757 = vpack.c.b16 %v742, %v741
        %v758 = vpack.c.b16 %v744, %v743
        %v759 = vpack.c.b16 %v746, %v745
        %v760 = vpack.c.b16 %v748, %v747
        %v761 = vpack.c.b16 %v750, %v749
        %v762 = vpack.c.b16 %v752, %v751
        %v763 = vpack.c.b16 %v754, %v753
        %v764 = vpack.c.b16 %v756, %v755
        %773 = vmatprep.subr.bf16.mxu0 0
        %774 = vmatpush1.bf16.msra.mxu0 %v757
        %775 = vmatprep.subr.bf16.mxu0 0
        %776 = vmatpush1.bf16.msra.mxu0 %v758
        %777 = vmatprep.subr.bf16.mxu0 0
        %778 = vmatpush1.bf16.msra.mxu0 %v759
        %779 = vmatprep.subr.bf16.mxu0 0
        %780 = vmatpush1.bf16.msra.mxu0 %v760
        %781 = vmatprep.subr.bf16.mxu0 0
        %782 = vmatpush1.bf16.msra.mxu0 %v761
        %783 = vmatprep.subr.bf16.mxu0 0
        %784 = vmatpush1.bf16.msra.mxu0 %v762
        %785 = vmatprep.subr.bf16.mxu0 0
        %786 = vmatpush1.bf16.msra.mxu0 %v763
        %787 = vmatprep.subr.bf16.mxu0 0
        %788 = vmatpush1.bf16.msra.mxu0 %v764
        %789 = vmatprep.subr.bf16.mxu0 0
        %790 = vmatpush1.bf16.msra.mxu0 0
        %791 = vmatprep.subr.bf16.mxu0 0
        %792 = vmatpush1.bf16.msra.mxu0 0
        %793 = vmatprep.subr.bf16.mxu0 0
        %794 = vmatpush1.bf16.msra.mxu0 0
        %795 = vmatprep.subr.bf16.mxu0 0
        %796 = vmatpush1.bf16.msra.mxu0 0
        %797 = vmatprep.subr.bf16.mxu0 0
        %798 = vmatpush1.bf16.msra.mxu0 0
        %799 = vmatprep.subr.bf16.mxu0 0
        %800 = vmatpush1.bf16.msra.mxu0 0
        %801 = vmatprep.subr.bf16.mxu0 0
        %802 = vmatpush1.bf16.msra.mxu0 0
        %803 = vmatprep.subr.bf16.mxu0 0
        %804 = vmatpush1.bf16.msra.mxu0 0
        %805 = vmatprep.mubr.bf16.mxu0 0
        %806 = vmatmul.mubr.bf16.gmra.mrb[0].mxu0 %v701
        %v807 = vpop.f32.mrb[0].mxu0
        %v808 = vadd.f32 0.0, %v807
        %v809 = vpop.f32.mrb[0].mxu0
        %v810 = vpop.f32.mrb[0].mxu0
        %v811 = vadd.f32 0.0, %v810
        %v812 = vpop.f32.mrb[0].mxu0
        %813 = vmatprep.mubr.bf16.mxu0 0
        %814 = vmatmul.mubr.bf16.gmra.mrb[0].mxu0 %v702
        %v815 = vpop.f32.mrb[0].mxu0
        %v816 = vadd.f32 0.0, %v815
        %v817 = vpop.f32.mrb[0].mxu0
        %v818 = vpop.f32.mrb[0].mxu0
        %v819 = vadd.f32 0.0, %v818
        %v820 = vpop.f32.mrb[0].mxu0
        %821 = vmatprep.mubr.bf16.mxu0 0
        %822 = vmatmul.mubr.bf16.gmra.mrb[0].mxu0 %v703
        %v823 = vpop.f32.mrb[0].mxu0
        %v824 = vadd.f32 0.0, %v823
        %v825 = vpop.f32.mrb[0].mxu0
        %v826 = vpop.f32.mrb[0].mxu0
        %v827 = vadd.f32 0.0, %v826
        %v828 = vpop.f32.mrb[0].mxu0
        %829 = vmatprep.mubr.bf16.mxu0 0
        %830 = vmatmul.mubr.bf16.gmra.mrb[0].mxu0 %v704
        %v831 = vpop.f32.mrb[0].mxu0
        %v832 = vadd.f32 0.0, %v831
        %v833 = vpop.f32.mrb[0].mxu0
        %v834 = vpop.f32.mrb[0].mxu0
        %v835 = vadd.f32 0.0, %v834
        %v836 = vpop.f32.mrb[0].mxu0
        %837 = vmatprep.mubr.bf16.mxu0 0
        %838 = vmatmul.mubr.bf16.gmra.mrb[0].mxu0 %v705
        %v839 = vpop.f32.mrb[0].mxu0
        %v840 = vadd.f32 0.0, %v839
        %v841 = vpop.f32.mrb[0].mxu0
        %v842 = vpop.f32.mrb[0].mxu0
        %v843 = vadd.f32 0.0, %v842
        %v844 = vpop.f32.mrb[0].mxu0
        %845 = vmatprep.mubr.bf16.mxu0 0
        %846 = vmatmul.mubr.bf16.gmra.mrb[0].mxu0 %v706
        %v847 = vpop.f32.mrb[0].mxu0
        %v848 = vadd.f32 0.0, %v847
        %v849 = vpop.f32.mrb[0].mxu0
        %v850 = vpop.f32.mrb[0].mxu0
        %v851 = vadd.f32 0.0, %v850
        %v852 = vpop.f32.mrb[0].mxu0
        %853 = vmatprep.mubr.bf16.mxu0 0
        %854 = vmatmul.mubr.bf16.gmra.mrb[0].mxu0 %v707
        %v855 = vpop.f32.mrb[0].mxu0
        %v856 = vadd.f32 0.0, %v855
        %v857 = vpop.f32.mrb[0].mxu0
        %v858 = vpop.f32.mrb[0].mxu0
        %v859 = vadd.f32 0.0, %v858
        %v860 = vpop.f32.mrb[0].mxu0
        %861 = vmatprep.mubr.bf16.mxu0 0
        %862 = vmatmul.mubr.bf16.gmra.mrb[0].mxu0 %v708
        %v863 = vpop.f32.mrb[0].mxu0
        %v864 = vadd.f32 0.0, %v863
        %v865 = vpop.f32.mrb[0].mxu0
        %v866 = vpop.f32.mrb[0].mxu0
        %v867 = vadd.f32 0.0, %v866
        %v868 = vpop.f32.mrb[0].mxu0
        %869 = vdwg.mxu0
        %v870 = vadd.f32 %v639, %v808
        %v871 = vadd.f32 %v642, %v811
        %v872 = vadd.f32 %v647, %v816
        %v873 = vadd.f32 %v650, %v819
        %v874 = vadd.f32 %v655, %v824
        %v875 = vadd.f32 %v658, %v827
        %v876 = vadd.f32 %v663, %v832
        %v877 = vadd.f32 %v666, %v835
        %v878 = vadd.f32 %v671, %v840
        %v879 = vadd.f32 %v674, %v843
        %v880 = vadd.f32 %v679, %v848
        %v881 = vadd.f32 %v682, %v851
        %v882 = vadd.f32 %v687, %v856
        %v883 = vadd.f32 %v690, %v859
        %v884 = vadd.f32 %v695, %v864
        %v885 = vadd.f32 %v698, %v867
        %v886 = vpack.c.bf16 %v509, %v508
        %v887 = vpack.c.bf16 %v511, %v510
        %v888 = vpack.c.bf16 %v513, %v512
        %v889 = vpack.c.bf16 %v515, %v514
        %v890 = vpack.c.bf16 %v517, %v516
        %v891 = vpack.c.bf16 %v519, %v518
        %v892 = vpack.c.bf16 %v521, %v520
        %v893 = vpack.c.bf16 %v523, %v522
        %s894 = scalar_lea.vmem %s1, 128
        %v895 = vld [vmem:[%s894] sm:$0xf]
        %v896 = vld [vmem:[%s894 + $0x4] sm:$0xf]
        %v897 = vld [vmem:[%s894 + $0x8] sm:$0xf]
        %v898 = vld [vmem:[%s894 + $0xc] sm:$0xf]
        %v899 = vld [vmem:[%s894 + $0x10] sm:$0xf]
        %v900 = vld [vmem:[%s894 + $0x14] sm:$0xf]
        %v901 = vld [vmem:[%s894 + $0x18] sm:$0xf]
        %v902 = vld [vmem:[%s894 + $0x1c] sm:$0xf]
        %v903 = vld [vmem:[%s894 + $0x20] sm:$0xf]
        %v904 = vld [vmem:[%s894 + $0x24] sm:$0xf]
        %v905 = vld [vmem:[%s894 + $0x28] sm:$0xf]
        %v906 = vld [vmem:[%s894 + $0x2c] sm:$0xf]
        %v907 = vld [vmem:[%s894 + $0x30] sm:$0xf]
        %v908 = vld [vmem:[%s894 + $0x34] sm:$0xf]
        %v909 = vld [vmem:[%s894 + $0x38] sm:$0xf]
        %v910 = vld [vmem:[%s894 + $0x3c] sm:$0xf]
        %v927 = vunpack.c.l.b16 %v895
        %v928 = vunpack.c.l.b16 %v896
        %v929 = vunpack.c.l.b16 %v897
        %v930 = vunpack.c.l.b16 %v898
        %v931 = vunpack.c.l.b16 %v899
        %v932 = vunpack.c.l.b16 %v900
        %v933 = vunpack.c.l.b16 %v901
        %v934 = vunpack.c.l.b16 %v902
        %v935 = vunpack.c.l.b16 %v903
        %v936 = vunpack.c.l.b16 %v904
        %v937 = vunpack.c.l.b16 %v905
        %v938 = vunpack.c.l.b16 %v906
        %v939 = vunpack.c.l.b16 %v907
        %v940 = vunpack.c.l.b16 %v908
        %v941 = vunpack.c.l.b16 %v909
        %v942 = vunpack.c.l.b16 %v910
        %v943 = vpack.c.b16 %v928, %v927
        %v944 = vpack.c.b16 %v930, %v929
        %v945 = vpack.c.b16 %v932, %v931
        %v946 = vpack.c.b16 %v934, %v933
        %v947 = vpack.c.b16 %v936, %v935
        %v948 = vpack.c.b16 %v938, %v937
        %v949 = vpack.c.b16 %v940, %v939
        %v950 = vpack.c.b16 %v942, %v941
        %959 = vmatprep.subr.bf16.mxu0 0
        %960 = vmatpush1.bf16.msra.mxu0 %v943
        %961 = vmatprep.subr.bf16.mxu0 0
        %962 = vmatpush1.bf16.msra.mxu0 %v944
        %963 = vmatprep.subr.bf16.mxu0 0
        %964 = vmatpush1.bf16.msra.mxu0 %v945
        %965 = vmatprep.subr.bf16.mxu0 0
        %966 = vmatpush1.bf16.msra.mxu0 %v946
        %967 = vmatprep.subr.bf16.mxu0 0
        %968 = vmatpush1.bf16.msra.mxu0 %v947
        %969 = vmatprep.subr.bf16.mxu0 0
        %970 = vmatpush1.bf16.msra.mxu0 %v948
        %971 = vmatprep.subr.bf16.mxu0 0
        %972 = vmatpush1.bf16.msra.mxu0 %v949
        %973 = vmatprep.subr.bf16.mxu0 0
        %974 = vmatpush1.bf16.msra.mxu0 %v950
        %975 = vmatprep.subr.bf16.mxu0 0
        %976 = vmatpush1.bf16.msra.mxu0 0
        %977 = vmatprep.subr.bf16.mxu0 0
        %978 = vmatpush1.bf16.msra.mxu0 0
        %979 = vmatprep.subr.bf16.mxu0 0
        %980 = vmatpush1.bf16.msra.mxu0 0
        %981 = vmatprep.subr.bf16.mxu0 0
        %982 = vmatpush1.bf16.msra.mxu0 0
        %983 = vmatprep.subr.bf16.mxu0 0
        %984 = vmatpush1.bf16.msra.mxu0 0
        %985 = vmatprep.subr.bf16.mxu0 0
        %986 = vmatpush1.bf16.msra.mxu0 0
        %987 = vmatprep.subr.bf16.mxu0 0
        %988 = vmatpush1.bf16.msra.mxu0 0
        %989 = vmatprep.subr.bf16.mxu0 0
        %990 = vmatpush1.bf16.msra.mxu0 0
        %991 = vmatprep.mubr.bf16.mxu0 0
        %992 = vmatmul.mubr.bf16.gmra.mrb[0].mxu0 %v886
        %v993 = vpop.f32.mrb[0].mxu0
        %v994 = vadd.f32 0.0, %v993
        %v995 = vpop.f32.mrb[0].mxu0
        %v996 = vpop.f32.mrb[0].mxu0
        %v997 = vadd.f32 0.0, %v996
        %v998 = vpop.f32.mrb[0].mxu0
        %999 = vmatprep.mubr.bf16.mxu0 0
        %1000 = vmatmul.mubr.bf16.gmra.mrb[0].mxu0 %v887
        %v1001 = vpop.f32.mrb[0].mxu0
        %v1002 = vadd.f32 0.0, %v1001
        %v1003 = vpop.f32.mrb[0].mxu0
        %v1004 = vpop.f32.mrb[0].mxu0
        %v1005 = vadd.f32 0.0, %v1004
        %v1006 = vpop.f32.mrb[0].mxu0
        %1007 = vmatprep.mubr.bf16.mxu0 0
        %1008 = vmatmul.mubr.bf16.gmra.mrb[0].mxu0 %v888
        %v1009 = vpop.f32.mrb[0].mxu0
        %v1010 = vadd.f32 0.0, %v1009
        %v1011 = vpop.f32.mrb[0].mxu0
        %v1012 = vpop.f32.mrb[0].mxu0
        %v1013 = vadd.f32 0.0, %v1012
        %v1014 = vpop.f32.mrb[0].mxu0
        %1015 = vmatprep.mubr.bf16.mxu0 0
        %1016 = vmatmul.mubr.bf16.gmra.mrb[0].mxu0 %v889
        %v1017 = vpop.f32.mrb[0].mxu0
        %v1018 = vadd.f32 0.0, %v1017
        %v1019 = vpop.f32.mrb[0].mxu0
        %v1020 = vpop.f32.mrb[0].mxu0
        %v1021 = vadd.f32 0.0, %v1020
        %v1022 = vpop.f32.mrb[0].mxu0
        %1023 = vmatprep.mubr.bf16.mxu0 0
        %1024 = vmatmul.mubr.bf16.gmra.mrb[0].mxu0 %v890
        %v1025 = vpop.f32.mrb[0].mxu0
        %v1026 = vadd.f32 0.0, %v1025
        %v1027 = vpop.f32.mrb[0].mxu0
        %v1028 = vpop.f32.mrb[0].mxu0
        %v1029 = vadd.f32 0.0, %v1028
        %v1030 = vpop.f32.mrb[0].mxu0
        %1031 = vmatprep.mubr.bf16.mxu0 0
        %1032 = vmatmul.mubr.bf16.gmra.mrb[0].mxu0 %v891
        %v1033 = vpop.f32.mrb[0].mxu0
        %v1034 = vadd.f32 0.0, %v1033
        %v1035 = vpop.f32.mrb[0].mxu0
        %v1036 = vpop.f32.mrb[0].mxu0
        %v1037 = vadd.f32 0.0, %v1036
        %v1038 = vpop.f32.mrb[0].mxu0
        %1039 = vmatprep.mubr.bf16.mxu0 0
        %1040 = vmatmul.mubr.bf16.gmra.mrb[0].mxu0 %v892
        %v1041 = vpop.f32.mrb[0].mxu0
        %v1042 = vadd.f32 0.0, %v1041
        %v1043 = vpop.f32.mrb[0].mxu0
        %v1044 = vpop.f32.mrb[0].mxu0
        %v1045 = vadd.f32 0.0, %v1044
        %v1046 = vpop.f32.mrb[0].mxu0
        %1047 = vmatprep.mubr.bf16.mxu0 0
        %1048 = vmatmul.mubr.bf16.gmra.mrb[0].mxu0 %v893
        %v1049 = vpop.f32.mrb[0].mxu0
        %v1050 = vadd.f32 0.0, %v1049
        %v1051 = vpop.f32.mrb[0].mxu0
        %v1052 = vpop.f32.mrb[0].mxu0
        %v1053 = vadd.f32 0.0, %v1052
        %v1054 = vpop.f32.mrb[0].mxu0
        %1055 = vdwg.mxu0
        %v1056 = vadd.f32 %v870, %v994
        %v1057 = vadd.f32 %v871, %v997
        %v1058 = vadd.f32 %v872, %v1002
        %v1059 = vadd.f32 %v873, %v1005
        %v1060 = vadd.f32 %v874, %v1010
        %v1061 = vadd.f32 %v875, %v1013
        %v1062 = vadd.f32 %v876, %v1018
        %v1063 = vadd.f32 %v877, %v1021
        %v1064 = vadd.f32 %v878, %v1026
        %v1065 = vadd.f32 %v879, %v1029
        %v1066 = vadd.f32 %v880, %v1034
        %v1067 = vadd.f32 %v881, %v1037
        %v1068 = vadd.f32 %v882, %v1042
        %v1069 = vadd.f32 %v883, %v1045
        %v1070 = vadd.f32 %v884, %v1050
        %v1071 = vadd.f32 %v885, %v1053
        %v1072 = vmax.f32 %v1056, 0.0
        %v1073 = vmax.f32 %v1057, 0.0
        %v1074 = vmax.f32 %v1058, 0.0
        %v1075 = vmax.f32 %v1059, 0.0
        %v1076 = vmax.f32 %v1060, 0.0
        %v1077 = vmax.f32 %v1061, 0.0
        %v1078 = vmax.f32 %v1062, 0.0
        %v1079 = vmax.f32 %v1063, 0.0
        %v1080 = vmax.f32 %v1064, 0.0
        %v1081 = vmax.f32 %v1065, 0.0
        %v1082 = vmax.f32 %v1066, 0.0
        %v1083 = vmax.f32 %v1067, 0.0
        %v1084 = vmax.f32 %v1068, 0.0
        %v1085 = vmax.f32 %v1069, 0.0
        %v1086 = vmax.f32 %v1070, 0.0
        %v1087 = vmax.f32 %v1071, 0.0
        %v1088 = vrot.slane %v1072, 7
        %v1089 = vrot.slane %v1073, 7
        %v1090 = vrot.slane %v1074, 7
        %v1091 = vrot.slane %v1075, 7
        %v1092 = vrot.slane %v1076, 7
        %v1093 = vrot.slane %v1077, 7
        %v1094 = vrot.slane %v1078, 7
        %v1095 = vrot.slane %v1079, 7
        %v1096 = vrot.slane %v1080, 7
        %v1097 = vrot.slane %v1081, 7
        %v1098 = vrot.slane %v1082, 7
        %v1099 = vrot.slane %v1083, 7
        %v1100 = vrot.slane %v1084, 7
        %v1101 = vrot.slane %v1085, 7
        %v1102 = vrot.slane %v1086, 7
        %v1103 = vrot.slane %v1087, 7
        %v1104 = vsel %vm442, %v1102, %v1103
        %v1105 = vsel %vm442, %v1101, %v1102
        %v1106 = vsel %vm442, %v1100, %v1101
        %v1107 = vsel %vm442, %v1099, %v1100
        %v1108 = vsel %vm442, %v1098, %v1099
        %v1109 = vsel %vm442, %v1097, %v1098
        %v1110 = vsel %vm442, %v1096, %v1097
        %v1111 = vsel %vm442, %v1095, %v1096
        %v1112 = vsel %vm442, %v1094, %v1095
        %v1113 = vsel %vm442, %v1093, %v1094
        %v1114 = vsel %vm442, %v1092, %v1093
        %v1115 = vsel %vm442, %v1091, %v1092
        %v1116 = vsel %vm442, %v1090, %v1091
        %v1117 = vsel %vm442, %v1089, %v1090
        %v1118 = vsel %vm442, %v1088, %v1089
        %v1119 = vsel %vm442, %v1103, %v1088
        %v1120 = vsel %vm378, %v1119, 0.0
        %v1121 = vsel %vm379, %v1118, 0.0
        %v1122 = vsel %vm380, %v1117, 0.0
        %v1123 = vsel %vm381, %v1116, 0.0
        %v1124 = vsel %vm382, %v1115, 0.0
        %v1125 = vsel %vm383, %v1114, 0.0
        %v1126 = vsel %vm384, %v1113, 0.0
        %v1127 = vsel %vm385, %v1112, 0.0
        %v1128 = vsel %vm386, %v1111, 0.0
        %v1129 = vsel %vm387, %v1110, 0.0
        %v1130 = vsel %vm388, %v1109, 0.0
        %v1131 = vsel %vm389, %v1108, 0.0
        %v1132 = vsel %vm390, %v1107, 0.0
        %v1133 = vsel %vm391, %v1106, 0.0
        %v1134 = vsel %vm392, %v1105, 0.0
        %v1135 = vsel %vm393, %v1104, 0.0
        %v1136 = vrot.slane %v1072, 1
        %v1137 = vrot.slane %v1073, 1
        %v1138 = vrot.slane %v1074, 1
        %v1139 = vrot.slane %v1075, 1
        %v1140 = vrot.slane %v1076, 1
        %v1141 = vrot.slane %v1077, 1
        %v1142 = vrot.slane %v1078, 1
        %v1143 = vrot.slane %v1079, 1
        %v1144 = vrot.slane %v1080, 1
        %v1145 = vrot.slane %v1081, 1
        %v1146 = vrot.slane %v1082, 1
        %v1147 = vrot.slane %v1083, 1
        %v1148 = vrot.slane %v1084, 1
        %v1149 = vrot.slane %v1085, 1
        %v1150 = vrot.slane %v1086, 1
        %v1151 = vrot.slane %v1087, 1
        %v1152 = vsel %vm491, %v1150, %v1151
        %v1153 = vsel %vm491, %v1149, %v1150
        %v1154 = vsel %vm491, %v1148, %v1149
        %v1155 = vsel %vm491, %v1147, %v1148
        %v1156 = vsel %vm491, %v1146, %v1147
        %v1157 = vsel %vm491, %v1145, %v1146
        %v1158 = vsel %vm491, %v1144, %v1145
        %v1159 = vsel %vm491, %v1143, %v1144
        %v1160 = vsel %vm491, %v1142, %v1143
        %v1161 = vsel %vm491, %v1141, %v1142
        %v1162 = vsel %vm491, %v1140, %v1141
        %v1163 = vsel %vm491, %v1139, %v1140
        %v1164 = vsel %vm491, %v1138, %v1139
        %v1165 = vsel %vm491, %v1137, %v1138
        %v1166 = vsel %vm491, %v1136, %v1137
        %v1167 = vsel %vm491, %v1151, %v1136
        %v1168 = vsel %vm394, %v1166, 0.0
        %v1169 = vsel %vm395, %v1165, 0.0
        %v1170 = vsel %vm396, %v1164, 0.0
        %v1171 = vsel %vm397, %v1163, 0.0
        %v1172 = vsel %vm398, %v1162, 0.0
        %v1173 = vsel %vm399, %v1161, 0.0
        %v1174 = vsel %vm400, %v1160, 0.0
        %v1175 = vsel %vm401, %v1159, 0.0
        %v1176 = vsel %vm402, %v1158, 0.0
        %v1177 = vsel %vm403, %v1157, 0.0
        %v1178 = vsel %vm404, %v1156, 0.0
        %v1179 = vsel %vm405, %v1155, 0.0
        %v1180 = vsel %vm406, %v1154, 0.0
        %v1181 = vsel %vm407, %v1153, 0.0
        %v1182 = vsel %vm408, %v1152, 0.0
        %v1183 = vsel %vm409, %v1167, 0.0
        %v1184 = vpack.c.bf16 %v1073, %v1072
        %v1185 = vpack.c.bf16 %v1075, %v1074
        %v1186 = vpack.c.bf16 %v1077, %v1076
        %v1187 = vpack.c.bf16 %v1079, %v1078
        %v1188 = vpack.c.bf16 %v1081, %v1080
        %v1189 = vpack.c.bf16 %v1083, %v1082
        %v1190 = vpack.c.bf16 %v1085, %v1084
        %v1191 = vpack.c.bf16 %v1087, %v1086
        %s1192 = scalar_lea.vmem %s1, 256
        %v1193 = vld [vmem:[%s1192] sm:$0xf]
        %v1194 = vld [vmem:[%s1192 + $0x4] sm:$0xf]
        %v1195 = vld [vmem:[%s1192 + $0x8] sm:$0xf]
        %v1196 = vld [vmem:[%s1192 + $0xc] sm:$0xf]
        %v1197 = vld [vmem:[%s1192 + $0x10] sm:$0xf]
        %v1198 = vld [vmem:[%s1192 + $0x14] sm:$0xf]
        %v1199 = vld [vmem:[%s1192 + $0x18] sm:$0xf]
        %v1200 = vld [vmem:[%s1192 + $0x1c] sm:$0xf]
        %v1201 = vld [vmem:[%s1192 + $0x20] sm:$0xf]
        %v1202 = vld [vmem:[%s1192 + $0x24] sm:$0xf]
        %v1203 = vld [vmem:[%s1192 + $0x28] sm:$0xf]
        %v1204 = vld [vmem:[%s1192 + $0x2c] sm:$0xf]
        %v1205 = vld [vmem:[%s1192 + $0x30] sm:$0xf]
        %v1206 = vld [vmem:[%s1192 + $0x34] sm:$0xf]
        %v1207 = vld [vmem:[%s1192 + $0x38] sm:$0xf]
        %v1208 = vld [vmem:[%s1192 + $0x3c] sm:$0xf]
        %s1209 = scalar_lea.vmem %s2, 1
        %v1210 = vld [vmem:[%s1209] sm:$0x1]
        %v1212 = vlaneseq
        %v1213 = vshrl.u32 %v1212, 7
        %v1214 = vsub.s32 0, %v1213
        %v1215 = vrot.slane %v1210, %v1214
        %v1233 = vunpack.c.l.b16 %v1193
        %v1234 = vunpack.c.l.b16 %v1194
        %v1235 = vunpack.c.l.b16 %v1195
        %v1236 = vunpack.c.l.b16 %v1196
        %v1237 = vunpack.c.l.b16 %v1197
        %v1238 = vunpack.c.l.b16 %v1198
        %v1239 = vunpack.c.l.b16 %v1199
        %v1240 = vunpack.c.l.b16 %v1200
        %v1241 = vunpack.c.l.b16 %v1201
        %v1242 = vunpack.c.l.b16 %v1202
        %v1243 = vunpack.c.l.b16 %v1203
        %v1244 = vunpack.c.l.b16 %v1204
        %v1245 = vunpack.c.l.b16 %v1205
        %v1246 = vunpack.c.l.b16 %v1206
        %v1247 = vunpack.c.l.b16 %v1207
        %v1248 = vunpack.c.l.b16 %v1208
        %v1249 = vpack.c.b16 %v1234, %v1233
        %v1250 = vpack.c.b16 %v1236, %v1235
        %v1251 = vpack.c.b16 %v1238, %v1237
        %v1252 = vpack.c.b16 %v1240, %v1239
        %v1253 = vpack.c.b16 %v1242, %v1241
        %v1254 = vpack.c.b16 %v1244, %v1243
        %v1255 = vpack.c.b16 %v1246, %v1245
        %v1256 = vpack.c.b16 %v1248, %v1247
        %1265 = vmatprep.subr.bf16.mxu0 0
        %1266 = vmatpush1.bf16.msra.mxu0 %v1249
        %1267 = vmatprep.subr.bf16.mxu0 0
        %1268 = vmatpush1.bf16.msra.mxu0 %v1250
        %1269 = vmatprep.subr.bf16.mxu0 0
        %1270 = vmatpush1.bf16.msra.mxu0 %v1251
        %1271 = vmatprep.subr.bf16.mxu0 0
        %1272 = vmatpush1.bf16.msra.mxu0 %v1252
        %1273 = vmatprep.subr.bf16.mxu0 0
        %1274 = vmatpush1.bf16.msra.mxu0 %v1253
        %1275 = vmatprep.subr.bf16.mxu0 0
        %1276 = vmatpush1.bf16.msra.mxu0 %v1254
        %1277 = vmatprep.subr.bf16.mxu0 0
        %1278 = vmatpush1.bf16.msra.mxu0 %v1255
        %1279 = vmatprep.subr.bf16.mxu0 0
        %1280 = vmatpush1.bf16.msra.mxu0 %v1256
        %1281 = vmatprep.subr.bf16.mxu0 0
        %1282 = vmatpush1.bf16.msra.mxu0 0
        %1283 = vmatprep.subr.bf16.mxu0 0
        %1284 = vmatpush1.bf16.msra.mxu0 0
        %1285 = vmatprep.subr.bf16.mxu0 0
        %1286 = vmatpush1.bf16.msra.mxu0 0
        %1287 = vmatprep.subr.bf16.mxu0 0
        %1288 = vmatpush1.bf16.msra.mxu0 0
        %1289 = vmatprep.subr.bf16.mxu0 0
        %1290 = vmatpush1.bf16.msra.mxu0 0
        %1291 = vmatprep.subr.bf16.mxu0 0
        %1292 = vmatpush1.bf16.msra.mxu0 0
        %1293 = vmatprep.subr.bf16.mxu0 0
        %1294 = vmatpush1.bf16.msra.mxu0 0
        %1295 = vmatprep.subr.bf16.mxu0 0
        %1296 = vmatpush1.bf16.msra.mxu0 0
        %1297 = vmatprep.mubr.bf16.mxu0 0
        %1298 = vmatmul.mubr.bf16.gmra.mrb[0].mxu0 %v1184
        %v1299 = vpop.f32.mrb[0].mxu0
        %v1300 = vadd.f32 %v1215, %v1299
        %v1301 = vpop.f32.mrb[0].mxu0
        %v1302 = vpop.f32.mrb[0].mxu0
        %v1303 = vadd.f32 %v1215, %v1302
        %v1304 = vpop.f32.mrb[0].mxu0
        %1305 = vmatprep.mubr.bf16.mxu0 0
        %1306 = vmatmul.mubr.bf16.gmra.mrb[0].mxu0 %v1185
        %v1307 = vpop.f32.mrb[0].mxu0
        %v1308 = vadd.f32 %v1215, %v1307
        %v1309 = vpop.f32.mrb[0].mxu0
        %v1310 = vpop.f32.mrb[0].mxu0
        %v1311 = vadd.f32 %v1215, %v1310
        %v1312 = vpop.f32.mrb[0].mxu0
        %1313 = vmatprep.mubr.bf16.mxu0 0
        %1314 = vmatmul.mubr.bf16.gmra.mrb[0].mxu0 %v1186
        %v1315 = vpop.f32.mrb[0].mxu0
        %v1316 = vadd.f32 %v1215, %v1315
        %v1317 = vpop.f32.mrb[0].mxu0
        %v1318 = vpop.f32.mrb[0].mxu0
        %v1319 = vadd.f32 %v1215, %v1318
        %v1320 = vpop.f32.mrb[0].mxu0
        %1321 = vmatprep.mubr.bf16.mxu0 0
        %1322 = vmatmul.mubr.bf16.gmra.mrb[0].mxu0 %v1187
        %v1323 = vpop.f32.mrb[0].mxu0
        %v1324 = vadd.f32 %v1215, %v1323
        %v1325 = vpop.f32.mrb[0].mxu0
        %v1326 = vpop.f32.mrb[0].mxu0
        %v1327 = vadd.f32 %v1215, %v1326
        %v1328 = vpop.f32.mrb[0].mxu0
        %1329 = vmatprep.mubr.bf16.mxu0 0
        %1330 = vmatmul.mubr.bf16.gmra.mrb[0].mxu0 %v1188
        %v1331 = vpop.f32.mrb[0].mxu0
        %v1332 = vadd.f32 %v1215, %v1331
        %v1333 = vpop.f32.mrb[0].mxu0
        %v1334 = vpop.f32.mrb[0].mxu0
        %v1335 = vadd.f32 %v1215, %v1334
        %v1336 = vpop.f32.mrb[0].mxu0
        %1337 = vmatprep.mubr.bf16.mxu0 0
        %1338 = vmatmul.mubr.bf16.gmra.mrb[0].mxu0 %v1189
        %v1339 = vpop.f32.mrb[0].mxu0
        %v1340 = vadd.f32 %v1215, %v1339
        %v1341 = vpop.f32.mrb[0].mxu0
        %v1342 = vpop.f32.mrb[0].mxu0
        %v1343 = vadd.f32 %v1215, %v1342
        %v1344 = vpop.f32.mrb[0].mxu0
        %1345 = vmatprep.mubr.bf16.mxu0 0
        %1346 = vmatmul.mubr.bf16.gmra.mrb[0].mxu0 %v1190
        %v1347 = vpop.f32.mrb[0].mxu0
        %v1348 = vadd.f32 %v1215, %v1347
        %v1349 = vpop.f32.mrb[0].mxu0
        %v1350 = vpop.f32.mrb[0].mxu0
        %v1351 = vadd.f32 %v1215, %v1350
        %v1352 = vpop.f32.mrb[0].mxu0
        %1353 = vmatprep.mubr.bf16.mxu0 0
        %1354 = vmatmul.mubr.bf16.gmra.mrb[0].mxu0 %v1191
        %v1355 = vpop.f32.mrb[0].mxu0
        %v1356 = vadd.f32 %v1215, %v1355
        %v1357 = vpop.f32.mrb[0].mxu0
        %v1358 = vpop.f32.mrb[0].mxu0
        %v1359 = vadd.f32 %v1215, %v1358
        %v1360 = vpop.f32.mrb[0].mxu0
        %1361 = vdwg.mxu0
        %v1362 = vpack.c.bf16 %v1121, %v1120
        %v1363 = vpack.c.bf16 %v1123, %v1122
        %v1364 = vpack.c.bf16 %v1125, %v1124
        %v1365 = vpack.c.bf16 %v1127, %v1126
        %v1366 = vpack.c.bf16 %v1129, %v1128
        %v1367 = vpack.c.bf16 %v1131, %v1130
        %v1368 = vpack.c.bf16 %v1133, %v1132
        %v1369 = vpack.c.bf16 %v1135, %v1134
        %s1370 = scalar_lea.vmem %s1, 192
        %v1371 = vld [vmem:[%s1370] sm:$0xf]
        %v1372 = vld [vmem:[%s1370 + $0x4] sm:$0xf]
        %v1373 = vld [vmem:[%s1370 + $0x8] sm:$0xf]
        %v1374 = vld [vmem:[%s1370 + $0xc] sm:$0xf]
        %v1375 = vld [vmem:[%s1370 + $0x10] sm:$0xf]
        %v1376 = vld [vmem:[%s1370 + $0x14] sm:$0xf]
        %v1377 = vld [vmem:[%s1370 + $0x18] sm:$0xf]
        %v1378 = vld [vmem:[%s1370 + $0x1c] sm:$0xf]
        %v1379 = vld [vmem:[%s1370 + $0x20] sm:$0xf]
        %v1380 = vld [vmem:[%s1370 + $0x24] sm:$0xf]
        %v1381 = vld [vmem:[%s1370 + $0x28] sm:$0xf]
        %v1382 = vld [vmem:[%s1370 + $0x2c] sm:$0xf]
        %v1383 = vld [vmem:[%s1370 + $0x30] sm:$0xf]
        %v1384 = vld [vmem:[%s1370 + $0x34] sm:$0xf]
        %v1385 = vld [vmem:[%s1370 + $0x38] sm:$0xf]
        %v1386 = vld [vmem:[%s1370 + $0x3c] sm:$0xf]
        %v1403 = vunpack.c.l.b16 %v1371
        %v1404 = vunpack.c.l.b16 %v1372
        %v1405 = vunpack.c.l.b16 %v1373
        %v1406 = vunpack.c.l.b16 %v1374
        %v1407 = vunpack.c.l.b16 %v1375
        %v1408 = vunpack.c.l.b16 %v1376
        %v1409 = vunpack.c.l.b16 %v1377
        %v1410 = vunpack.c.l.b16 %v1378
        %v1411 = vunpack.c.l.b16 %v1379
        %v1412 = vunpack.c.l.b16 %v1380
        %v1413 = vunpack.c.l.b16 %v1381
        %v1414 = vunpack.c.l.b16 %v1382
        %v1415 = vunpack.c.l.b16 %v1383
        %v1416 = vunpack.c.l.b16 %v1384
        %v1417 = vunpack.c.l.b16 %v1385
        %v1418 = vunpack.c.l.b16 %v1386
        %v1419 = vpack.c.b16 %v1404, %v1403
        %v1420 = vpack.c.b16 %v1406, %v1405
        %v1421 = vpack.c.b16 %v1408, %v1407
        %v1422 = vpack.c.b16 %v1410, %v1409
        %v1423 = vpack.c.b16 %v1412, %v1411
        %v1424 = vpack.c.b16 %v1414, %v1413
        %v1425 = vpack.c.b16 %v1416, %v1415
        %v1426 = vpack.c.b16 %v1418, %v1417
        %1435 = vmatprep.subr.bf16.mxu0 0
        %1436 = vmatpush1.bf16.msra.mxu0 %v1419
        %1437 = vmatprep.subr.bf16.mxu0 0
        %1438 = vmatpush1.bf16.msra.mxu0 %v1420
        %1439 = vmatprep.subr.bf16.mxu0 0
        %1440 = vmatpush1.bf16.msra.mxu0 %v1421
        %1441 = vmatprep.subr.bf16.mxu0 0
        %1442 = vmatpush1.bf16.msra.mxu0 %v1422
        %1443 = vmatprep.subr.bf16.mxu0 0
        %1444 = vmatpush1.bf16.msra.mxu0 %v1423
        %1445 = vmatprep.subr.bf16.mxu0 0
        %1446 = vmatpush1.bf16.msra.mxu0 %v1424
        %1447 = vmatprep.subr.bf16.mxu0 0
        %1448 = vmatpush1.bf16.msra.mxu0 %v1425
        %1449 = vmatprep.subr.bf16.mxu0 0
        %1450 = vmatpush1.bf16.msra.mxu0 %v1426
        %1451 = vmatprep.subr.bf16.mxu0 0
        %1452 = vmatpush1.bf16.msra.mxu0 0
        %1453 = vmatprep.subr.bf16.mxu0 0
        %1454 = vmatpush1.bf16.msra.mxu0 0
        %1455 = vmatprep.subr.bf16.mxu0 0
        %1456 = vmatpush1.bf16.msra.mxu0 0
        %1457 = vmatprep.subr.bf16.mxu0 0
        %1458 = vmatpush1.bf16.msra.mxu0 0
        %1459 = vmatprep.subr.bf16.mxu0 0
        %1460 = vmatpush1.bf16.msra.mxu0 0
        %1461 = vmatprep.subr.bf16.mxu0 0
        %1462 = vmatpush1.bf16.msra.mxu0 0
        %1463 = vmatprep.subr.bf16.mxu0 0
        %1464 = vmatpush1.bf16.msra.mxu0 0
        %1465 = vmatprep.subr.bf16.mxu0 0
        %1466 = vmatpush1.bf16.msra.mxu0 0
        %1467 = vmatprep.mubr.bf16.mxu0 0
        %1468 = vmatmul.mubr.bf16.gmra.mrb[0].mxu0 %v1362
        %v1469 = vpop.f32.mrb[0].mxu0
        %v1470 = vadd.f32 0.0, %v1469
        %v1471 = vpop.f32.mrb[0].mxu0
        %v1472 = vpop.f32.mrb[0].mxu0
        %v1473 = vadd.f32 0.0, %v1472
        %v1474 = vpop.f32.mrb[0].mxu0
        %1475 = vmatprep.mubr.bf16.mxu0 0
        %1476 = vmatmul.mubr.bf16.gmra.mrb[0].mxu0 %v1363
        %v1477 = vpop.f32.mrb[0].mxu0
        %v1478 = vadd.f32 0.0, %v1477
        %v1479 = vpop.f32.mrb[0].mxu0
        %v1480 = vpop.f32.mrb[0].mxu0
        %v1481 = vadd.f32 0.0, %v1480
        %v1482 = vpop.f32.mrb[0].mxu0
        %1483 = vmatprep.mubr.bf16.mxu0 0
        %1484 = vmatmul.mubr.bf16.gmra.mrb[0].mxu0 %v1364
        %v1485 = vpop.f32.mrb[0].mxu0
        %v1486 = vadd.f32 0.0, %v1485
        %v1487 = vpop.f32.mrb[0].mxu0
        %v1488 = vpop.f32.mrb[0].mxu0
        %v1489 = vadd.f32 0.0, %v1488
        %v1490 = vpop.f32.mrb[0].mxu0
        %1491 = vmatprep.mubr.bf16.mxu0 0
        %1492 = vmatmul.mubr.bf16.gmra.mrb[0].mxu0 %v1365
        %v1493 = vpop.f32.mrb[0].mxu0
        %v1494 = vadd.f32 0.0, %v1493
        %v1495 = vpop.f32.mrb[0].mxu0
        %v1496 = vpop.f32.mrb[0].mxu0
        %v1497 = vadd.f32 0.0, %v1496
        %v1498 = vpop.f32.mrb[0].mxu0
        %1499 = vmatprep.mubr.bf16.mxu0 0
        %1500 = vmatmul.mubr.bf16.gmra.mrb[0].mxu0 %v1366
        %v1501 = vpop.f32.mrb[0].mxu0
        %v1502 = vadd.f32 0.0, %v1501
        %v1503 = vpop.f32.mrb[0].mxu0
        %v1504 = vpop.f32.mrb[0].mxu0
        %v1505 = vadd.f32 0.0, %v1504
        %v1506 = vpop.f32.mrb[0].mxu0
        %1507 = vmatprep.mubr.bf16.mxu0 0
        %1508 = vmatmul.mubr.bf16.gmra.mrb[0].mxu0 %v1367
        %v1509 = vpop.f32.mrb[0].mxu0
        %v1510 = vadd.f32 0.0, %v1509
        %v1511 = vpop.f32.mrb[0].mxu0
        %v1512 = vpop.f32.mrb[0].mxu0
        %v1513 = vadd.f32 0.0, %v1512
        %v1514 = vpop.f32.mrb[0].mxu0
        %1515 = vmatprep.mubr.bf16.mxu0 0
        %1516 = vmatmul.mubr.bf16.gmra.mrb[0].mxu0 %v1368
        %v1517 = vpop.f32.mrb[0].mxu0
        %v1518 = vadd.f32 0.0, %v1517
        %v1519 = vpop.f32.mrb[0].mxu0
        %v1520 = vpop.f32.mrb[0].mxu0
        %v1521 = vadd.f32 0.0, %v1520
        %v1522 = vpop.f32.mrb[0].mxu0
        %1523 = vmatprep.mubr.bf16.mxu0 0
        %1524 = vmatmul.mubr.bf16.gmra.mrb[0].mxu0 %v1369
        %v1525 = vpop.f32.mrb[0].mxu0
        %v1526 = vadd.f32 0.0, %v1525
        %v1527 = vpop.f32.mrb[0].mxu0
        %v1528 = vpop.f32.mrb[0].mxu0
        %v1529 = vadd.f32 0.0, %v1528
        %v1530 = vpop.f32.mrb[0].mxu0
        %1531 = vdwg.mxu0
        %v1532 = vadd.f32 %v1300, %v1470
        %v1533 = vadd.f32 %v1303, %v1473
        %v1534 = vadd.f32 %v1308, %v1478
        %v1535 = vadd.f32 %v1311, %v1481
        %v1536 = vadd.f32 %v1316, %v1486
        %v1537 = vadd.f32 %v1319, %v1489
        %v1538 = vadd.f32 %v1324, %v1494
        %v1539 = vadd.f32 %v1327, %v1497
        %v1540 = vadd.f32 %v1332, %v1502
        %v1541 = vadd.f32 %v1335, %v1505
        %v1542 = vadd.f32 %v1340, %v1510
        %v1543 = vadd.f32 %v1343, %v1513
        %v1544 = vadd.f32 %v1348, %v1518
        %v1545 = vadd.f32 %v1351, %v1521
        %v1546 = vadd.f32 %v1356, %v1526
        %v1547 = vadd.f32 %v1359, %v1529
        %v1548 = vpack.c.bf16 %v1169, %v1168
        %v1549 = vpack.c.bf16 %v1171, %v1170
        %v1550 = vpack.c.bf16 %v1173, %v1172
        %v1551 = vpack.c.bf16 %v1175, %v1174
        %v1552 = vpack.c.bf16 %v1177, %v1176
        %v1553 = vpack.c.bf16 %v1179, %v1178
        %v1554 = vpack.c.bf16 %v1181, %v1180
        %v1555 = vpack.c.bf16 %v1183, %v1182
        %s1556 = scalar_lea.vmem %s1, 320
        %v1557 = vld [vmem:[%s1556] sm:$0xf]
        %v1558 = vld [vmem:[%s1556 + $0x4] sm:$0xf]
        %v1559 = vld [vmem:[%s1556 + $0x8] sm:$0xf]
        %v1560 = vld [vmem:[%s1556 + $0xc] sm:$0xf]
        %v1561 = vld [vmem:[%s1556 + $0x10] sm:$0xf]
        %v1562 = vld [vmem:[%s1556 + $0x14] sm:$0xf]
        %v1563 = vld [vmem:[%s1556 + $0x18] sm:$0xf]
        %v1564 = vld [vmem:[%s1556 + $0x1c] sm:$0xf]
        %v1565 = vld [vmem:[%s1556 + $0x20] sm:$0xf]
        %v1566 = vld [vmem:[%s1556 + $0x24] sm:$0xf]
        %v1567 = vld [vmem:[%s1556 + $0x28] sm:$0xf]
        %v1568 = vld [vmem:[%s1556 + $0x2c] sm:$0xf]
        %v1569 = vld [vmem:[%s1556 + $0x30] sm:$0xf]
        %v1570 = vld [vmem:[%s1556 + $0x34] sm:$0xf]
        %v1571 = vld [vmem:[%s1556 + $0x38] sm:$0xf]
        %v1572 = vld [vmem:[%s1556 + $0x3c] sm:$0xf]
        %v1589 = vunpack.c.l.b16 %v1557
        %v1590 = vunpack.c.l.b16 %v1558
        %v1591 = vunpack.c.l.b16 %v1559
        %v1592 = vunpack.c.l.b16 %v1560
        %v1593 = vunpack.c.l.b16 %v1561
        %v1594 = vunpack.c.l.b16 %v1562
        %v1595 = vunpack.c.l.b16 %v1563
        %v1596 = vunpack.c.l.b16 %v1564
        %v1597 = vunpack.c.l.b16 %v1565
        %v1598 = vunpack.c.l.b16 %v1566
        %v1599 = vunpack.c.l.b16 %v1567
        %v1600 = vunpack.c.l.b16 %v1568
        %v1601 = vunpack.c.l.b16 %v1569
        %v1602 = vunpack.c.l.b16 %v1570
        %v1603 = vunpack.c.l.b16 %v1571
        %v1604 = vunpack.c.l.b16 %v1572
        %v1605 = vpack.c.b16 %v1590, %v1589
        %v1606 = vpack.c.b16 %v1592, %v1591
        %v1607 = vpack.c.b16 %v1594, %v1593
        %v1608 = vpack.c.b16 %v1596, %v1595
        %v1609 = vpack.c.b16 %v1598, %v1597
        %v1610 = vpack.c.b16 %v1600, %v1599
        %v1611 = vpack.c.b16 %v1602, %v1601
        %v1612 = vpack.c.b16 %v1604, %v1603
        %1621 = vmatprep.subr.bf16.mxu0 0
        %1622 = vmatpush1.bf16.msra.mxu0 %v1605
        %1623 = vmatprep.subr.bf16.mxu0 0
        %1624 = vmatpush1.bf16.msra.mxu0 %v1606
        %1625 = vmatprep.subr.bf16.mxu0 0
        %1626 = vmatpush1.bf16.msra.mxu0 %v1607
        %1627 = vmatprep.subr.bf16.mxu0 0
        %1628 = vmatpush1.bf16.msra.mxu0 %v1608
        %1629 = vmatprep.subr.bf16.mxu0 0
        %1630 = vmatpush1.bf16.msra.mxu0 %v1609
        %1631 = vmatprep.subr.bf16.mxu0 0
        %1632 = vmatpush1.bf16.msra.mxu0 %v1610
        %1633 = vmatprep.subr.bf16.mxu0 0
        %1634 = vmatpush1.bf16.msra.mxu0 %v1611
        %1635 = vmatprep.subr.bf16.mxu0 0
        %1636 = vmatpush1.bf16.msra.mxu0 %v1612
        %1637 = vmatprep.subr.bf16.mxu0 0
        %1638 = vmatpush1.bf16.msra.mxu0 0
        %1639 = vmatprep.subr.bf16.mxu0 0
        %1640 = vmatpush1.bf16.msra.mxu0 0
        %1641 = vmatprep.subr.bf16.mxu0 0
        %1642 = vmatpush1.bf16.msra.mxu0 0
        %1643 = vmatprep.subr.bf16.mxu0 0
        %1644 = vmatpush1.bf16.msra.mxu0 0
        %1645 = vmatprep.subr.bf16.mxu0 0
        %1646 = vmatpush1.bf16.msra.mxu0 0
        %1647 = vmatprep.subr.bf16.mxu0 0
        %1648 = vmatpush1.bf16.msra.mxu0 0
        %1649 = vmatprep.subr.bf16.mxu0 0
        %1650 = vmatpush1.bf16.msra.mxu0 0
        %1651 = vmatprep.subr.bf16.mxu0 0
        %1652 = vmatpush1.bf16.msra.mxu0 0
        %1653 = vmatprep.mubr.bf16.mxu0 0
        %1654 = vmatmul.mubr.bf16.gmra.mrb[0].mxu0 %v1548
        %v1655 = vpop.f32.mrb[0].mxu0
        %v1656 = vadd.f32 0.0, %v1655
        %v1657 = vpop.f32.mrb[0].mxu0
        %v1658 = vpop.f32.mrb[0].mxu0
        %v1659 = vadd.f32 0.0, %v1658
        %v1660 = vpop.f32.mrb[0].mxu0
        %1661 = vmatprep.mubr.bf16.mxu0 0
        %1662 = vmatmul.mubr.bf16.gmra.mrb[0].mxu0 %v1549
        %v1663 = vpop.f32.mrb[0].mxu0
        %v1664 = vadd.f32 0.0, %v1663
        %v1665 = vpop.f32.mrb[0].mxu0
        %v1666 = vpop.f32.mrb[0].mxu0
        %v1667 = vadd.f32 0.0, %v1666
        %v1668 = vpop.f32.mrb[0].mxu0
        %1669 = vmatprep.mubr.bf16.mxu0 0
        %1670 = vmatmul.mubr.bf16.gmra.mrb[0].mxu0 %v1550
        %v1671 = vpop.f32.mrb[0].mxu0
        %v1672 = vadd.f32 0.0, %v1671
        %v1673 = vpop.f32.mrb[0].mxu0
        %v1674 = vpop.f32.mrb[0].mxu0
        %v1675 = vadd.f32 0.0, %v1674
        %v1676 = vpop.f32.mrb[0].mxu0
        %1677 = vmatprep.mubr.bf16.mxu0 0
        %1678 = vmatmul.mubr.bf16.gmra.mrb[0].mxu0 %v1551
        %v1679 = vpop.f32.mrb[0].mxu0
        %v1680 = vadd.f32 0.0, %v1679
        %v1681 = vpop.f32.mrb[0].mxu0
        %v1682 = vpop.f32.mrb[0].mxu0
        %v1683 = vadd.f32 0.0, %v1682
        %v1684 = vpop.f32.mrb[0].mxu0
        %1685 = vmatprep.mubr.bf16.mxu0 0
        %1686 = vmatmul.mubr.bf16.gmra.mrb[0].mxu0 %v1552
        %v1687 = vpop.f32.mrb[0].mxu0
        %v1688 = vadd.f32 0.0, %v1687
        %v1689 = vpop.f32.mrb[0].mxu0
        %v1690 = vpop.f32.mrb[0].mxu0
        %v1691 = vadd.f32 0.0, %v1690
        %v1692 = vpop.f32.mrb[0].mxu0
        %1693 = vmatprep.mubr.bf16.mxu0 0
        %1694 = vmatmul.mubr.bf16.gmra.mrb[0].mxu0 %v1553
        %v1695 = vpop.f32.mrb[0].mxu0
        %v1696 = vadd.f32 0.0, %v1695
        %v1697 = vpop.f32.mrb[0].mxu0
        %v1698 = vpop.f32.mrb[0].mxu0
        %v1699 = vadd.f32 0.0, %v1698
        %v1700 = vpop.f32.mrb[0].mxu0
        %1701 = vmatprep.mubr.bf16.mxu0 0
        %1702 = vmatmul.mubr.bf16.gmra.mrb[0].mxu0 %v1554
        %v1703 = vpop.f32.mrb[0].mxu0
        %v1704 = vadd.f32 0.0, %v1703
        %v1705 = vpop.f32.mrb[0].mxu0
        %v1706 = vpop.f32.mrb[0].mxu0
        %v1707 = vadd.f32 0.0, %v1706
        %v1708 = vpop.f32.mrb[0].mxu0
        %1709 = vmatprep.mubr.bf16.mxu0 0
        %1710 = vmatmul.mubr.bf16.gmra.mrb[0].mxu0 %v1555
        %v1711 = vpop.f32.mrb[0].mxu0
        %v1712 = vadd.f32 0.0, %v1711
        %v1713 = vpop.f32.mrb[0].mxu0
        %v1714 = vpop.f32.mrb[0].mxu0
        %v1715 = vadd.f32 0.0, %v1714
        %v1716 = vpop.f32.mrb[0].mxu0
        %1717 = vdwg.mxu0
        %v1718 = vadd.f32 %v1532, %v1656
        %v1719 = vadd.f32 %v1533, %v1659
        %v1720 = vadd.f32 %v1534, %v1664
        %v1721 = vadd.f32 %v1535, %v1667
        %v1722 = vadd.f32 %v1536, %v1672
        %v1723 = vadd.f32 %v1537, %v1675
        %v1724 = vadd.f32 %v1538, %v1680
        %v1725 = vadd.f32 %v1539, %v1683
        %v1726 = vadd.f32 %v1540, %v1688
        %v1727 = vadd.f32 %v1541, %v1691
        %v1728 = vadd.f32 %v1542, %v1696
        %v1729 = vadd.f32 %v1543, %v1699
        %v1730 = vadd.f32 %v1544, %v1704
        %v1731 = vadd.f32 %v1545, %v1707
        %v1732 = vadd.f32 %v1546, %v1712
        %v1733 = vadd.f32 %v1547, %v1715
        %v1734 = vadd.f32 %v1718, %v410
        %v1735 = vadd.f32 %v1719, %v411
        %v1736 = vadd.f32 %v1720, %v412
        %v1737 = vadd.f32 %v1721, %v413
        %v1738 = vadd.f32 %v1722, %v414
        %v1739 = vadd.f32 %v1723, %v415
        %v1740 = vadd.f32 %v1724, %v416
        %v1741 = vadd.f32 %v1725, %v417
        %v1742 = vadd.f32 %v1726, %v418
        %v1743 = vadd.f32 %v1727, %v419
        %v1744 = vadd.f32 %v1728, %v420
        %v1745 = vadd.f32 %v1729, %v421
        %v1746 = vadd.f32 %v1730, %v422
        %v1747 = vadd.f32 %v1731, %v423
        %v1748 = vadd.f32 %v1732, %v424
        %v1749 = vadd.f32 %v1733, %v425
        %v1750 = vrot.slane %v1734, 7
        %v1751 = vrot.slane %v1735, 7
        %v1752 = vrot.slane %v1736, 7
        %v1753 = vrot.slane %v1737, 7
        %v1754 = vrot.slane %v1738, 7
        %v1755 = vrot.slane %v1739, 7
        %v1756 = vrot.slane %v1740, 7
        %v1757 = vrot.slane %v1741, 7
        %v1758 = vrot.slane %v1742, 7
        %v1759 = vrot.slane %v1743, 7
        %v1760 = vrot.slane %v1744, 7
        %v1761 = vrot.slane %v1745, 7
        %v1762 = vrot.slane %v1746, 7
        %v1763 = vrot.slane %v1747, 7
        %v1764 = vrot.slane %v1748, 7
        %v1765 = vrot.slane %v1749, 7
        %v1766 = vsel %vm442, %v1764, %v1765
        %v1767 = vsel %vm442, %v1763, %v1764
        %v1768 = vsel %vm442, %v1762, %v1763
        %v1769 = vsel %vm442, %v1761, %v1762
        %v1770 = vsel %vm442, %v1760, %v1761
        %v1771 = vsel %vm442, %v1759, %v1760
        %v1772 = vsel %vm442, %v1758, %v1759
        %v1773 = vsel %vm442, %v1757, %v1758
        %v1774 = vsel %vm442, %v1756, %v1757
        %v1775 = vsel %vm442, %v1755, %v1756
        %v1776 = vsel %vm442, %v1754, %v1755
        %v1777 = vsel %vm442, %v1753, %v1754
        %v1778 = vsel %vm442, %v1752, %v1753
        %v1779 = vsel %vm442, %v1751, %v1752
        %v1780 = vsel %vm442, %v1750, %v1751
        %v1781 = vsel %vm442, %v1765, %v1750
        %v1782 = vsel %vm378, %v1781, 0.0
        %v1783 = vsel %vm379, %v1780, 0.0
        %v1784 = vsel %vm380, %v1779, 0.0
        %v1785 = vsel %vm381, %v1778, 0.0
        %v1786 = vsel %vm382, %v1777, 0.0
        %v1787 = vsel %vm383, %v1776, 0.0
        %v1788 = vsel %vm384, %v1775, 0.0
        %v1789 = vsel %vm385, %v1774, 0.0
        %v1790 = vsel %vm386, %v1773, 0.0
        %v1791 = vsel %vm387, %v1772, 0.0
        %v1792 = vsel %vm388, %v1771, 0.0
        %v1793 = vsel %vm389, %v1770, 0.0
        %v1794 = vsel %vm390, %v1769, 0.0
        %v1795 = vsel %vm391, %v1768, 0.0
        %v1796 = vsel %vm392, %v1767, 0.0
        %v1797 = vsel %vm393, %v1766, 0.0
        %v1798 = vrot.slane %v1734, 1
        %v1799 = vrot.slane %v1735, 1
        %v1800 = vrot.slane %v1736, 1
        %v1801 = vrot.slane %v1737, 1
        %v1802 = vrot.slane %v1738, 1
        %v1803 = vrot.slane %v1739, 1
        %v1804 = vrot.slane %v1740, 1
        %v1805 = vrot.slane %v1741, 1
        %v1806 = vrot.slane %v1742, 1
        %v1807 = vrot.slane %v1743, 1
        %v1808 = vrot.slane %v1744, 1
        %v1809 = vrot.slane %v1745, 1
        %v1810 = vrot.slane %v1746, 1
        %v1811 = vrot.slane %v1747, 1
        %v1812 = vrot.slane %v1748, 1
        %v1813 = vrot.slane %v1749, 1
        %v1814 = vsel %vm491, %v1812, %v1813
        %v1815 = vsel %vm491, %v1811, %v1812
        %v1816 = vsel %vm491, %v1810, %v1811
        %v1817 = vsel %vm491, %v1809, %v1810
        %v1818 = vsel %vm491, %v1808, %v1809
        %v1819 = vsel %vm491, %v1807, %v1808
        %v1820 = vsel %vm491, %v1806, %v1807
        %v1821 = vsel %vm491, %v1805, %v1806
        %v1822 = vsel %vm491, %v1804, %v1805
        %v1823 = vsel %vm491, %v1803, %v1804
        %v1824 = vsel %vm491, %v1802, %v1803
        %v1825 = vsel %vm491, %v1801, %v1802
        %v1826 = vsel %vm491, %v1800, %v1801
        %v1827 = vsel %vm491, %v1799, %v1800
        %v1828 = vsel %vm491, %v1798, %v1799
        %v1829 = vsel %vm491, %v1813, %v1798
        %v1830 = vsel %vm394, %v1828, 0.0
        %v1831 = vsel %vm395, %v1827, 0.0
        %v1832 = vsel %vm396, %v1826, 0.0
        %v1833 = vsel %vm397, %v1825, 0.0
        %v1834 = vsel %vm398, %v1824, 0.0
        %v1835 = vsel %vm399, %v1823, 0.0
        %v1836 = vsel %vm400, %v1822, 0.0
        %v1837 = vsel %vm401, %v1821, 0.0
        %v1838 = vsel %vm402, %v1820, 0.0
        %v1839 = vsel %vm403, %v1819, 0.0
        %v1840 = vsel %vm404, %v1818, 0.0
        %v1841 = vsel %vm405, %v1817, 0.0
        %v1842 = vsel %vm406, %v1816, 0.0
        %v1843 = vsel %vm407, %v1815, 0.0
        %v1844 = vsel %vm408, %v1814, 0.0
        %v1845 = vsel %vm409, %v1829, 0.0
        %v1846 = vpack.c.bf16 %v1735, %v1734
        %v1847 = vpack.c.bf16 %v1737, %v1736
        %v1848 = vpack.c.bf16 %v1739, %v1738
        %v1849 = vpack.c.bf16 %v1741, %v1740
        %v1850 = vpack.c.bf16 %v1743, %v1742
        %v1851 = vpack.c.bf16 %v1745, %v1744
        %v1852 = vpack.c.bf16 %v1747, %v1746
        %v1853 = vpack.c.bf16 %v1749, %v1748
        %s1854 = scalar_lea.vmem %s1, 448
        %v1855 = vld [vmem:[%s1854] sm:$0xf]
        %v1856 = vld [vmem:[%s1854 + $0x4] sm:$0xf]
        %v1857 = vld [vmem:[%s1854 + $0x8] sm:$0xf]
        %v1858 = vld [vmem:[%s1854 + $0xc] sm:$0xf]
        %v1859 = vld [vmem:[%s1854 + $0x10] sm:$0xf]
        %v1860 = vld [vmem:[%s1854 + $0x14] sm:$0xf]
        %v1861 = vld [vmem:[%s1854 + $0x18] sm:$0xf]
        %v1862 = vld [vmem:[%s1854 + $0x1c] sm:$0xf]
        %v1863 = vld [vmem:[%s1854 + $0x20] sm:$0xf]
        %v1864 = vld [vmem:[%s1854 + $0x24] sm:$0xf]
        %v1865 = vld [vmem:[%s1854 + $0x28] sm:$0xf]
        %v1866 = vld [vmem:[%s1854 + $0x2c] sm:$0xf]
        %v1867 = vld [vmem:[%s1854 + $0x30] sm:$0xf]
        %v1868 = vld [vmem:[%s1854 + $0x34] sm:$0xf]
        %v1869 = vld [vmem:[%s1854 + $0x38] sm:$0xf]
        %v1870 = vld [vmem:[%s1854 + $0x3c] sm:$0xf]
        %s1871 = scalar_lea.vmem %s2, 2
        %v1872 = vld [vmem:[%s1871] sm:$0x1]
        %v1874 = vlaneseq
        %v1875 = vshrl.u32 %v1874, 7
        %v1876 = vsub.s32 0, %v1875
        %v1877 = vrot.slane %v1872, %v1876
        %v1895 = vunpack.c.l.b16 %v1855
        %v1896 = vunpack.c.l.b16 %v1856
        %v1897 = vunpack.c.l.b16 %v1857
        %v1898 = vunpack.c.l.b16 %v1858
        %v1899 = vunpack.c.l.b16 %v1859
        %v1900 = vunpack.c.l.b16 %v1860
        %v1901 = vunpack.c.l.b16 %v1861
        %v1902 = vunpack.c.l.b16 %v1862
        %v1903 = vunpack.c.l.b16 %v1863
        %v1904 = vunpack.c.l.b16 %v1864
        %v1905 = vunpack.c.l.b16 %v1865
        %v1906 = vunpack.c.l.b16 %v1866
        %v1907 = vunpack.c.l.b16 %v1867
        %v1908 = vunpack.c.l.b16 %v1868
        %v1909 = vunpack.c.l.b16 %v1869
        %v1910 = vunpack.c.l.b16 %v1870
        %v1911 = vpack.c.b16 %v1896, %v1895
        %v1912 = vpack.c.b16 %v1898, %v1897
        %v1913 = vpack.c.b16 %v1900, %v1899
        %v1914 = vpack.c.b16 %v1902, %v1901
        %v1915 = vpack.c.b16 %v1904, %v1903
        %v1916 = vpack.c.b16 %v1906, %v1905
        %v1917 = vpack.c.b16 %v1908, %v1907
        %v1918 = vpack.c.b16 %v1910, %v1909
        %1927 = vmatprep.subr.bf16.mxu0 0
        %1928 = vmatpush1.bf16.msra.mxu0 %v1911
        %1929 = vmatprep.subr.bf16.mxu0 0
        %1930 = vmatpush1.bf16.msra.mxu0 %v1912
        %1931 = vmatprep.subr.bf16.mxu0 0
        %1932 = vmatpush1.bf16.msra.mxu0 %v1913
        %1933 = vmatprep.subr.bf16.mxu0 0
        %1934 = vmatpush1.bf16.msra.mxu0 %v1914
        %1935 = vmatprep.subr.bf16.mxu0 0
        %1936 = vmatpush1.bf16.msra.mxu0 %v1915
        %1937 = vmatprep.subr.bf16.mxu0 0
        %1938 = vmatpush1.bf16.msra.mxu0 %v1916
        %1939 = vmatprep.subr.bf16.mxu0 0
        %1940 = vmatpush1.bf16.msra.mxu0 %v1917
        %1941 = vmatprep.subr.bf16.mxu0 0
        %1942 = vmatpush1.bf16.msra.mxu0 %v1918
        %1943 = vmatprep.subr.bf16.mxu0 0
        %1944 = vmatpush1.bf16.msra.mxu0 0
        %1945 = vmatprep.subr.bf16.mxu0 0
        %1946 = vmatpush1.bf16.msra.mxu0 0
        %1947 = vmatprep.subr.bf16.mxu0 0
        %1948 = vmatpush1.bf16.msra.mxu0 0
        %1949 = vmatprep.subr.bf16.mxu0 0
        %1950 = vmatpush1.bf16.msra.mxu0 0
        %1951 = vmatprep.subr.bf16.mxu0 0
        %1952 = vmatpush1.bf16.msra.mxu0 0
        %1953 = vmatprep.subr.bf16.mxu0 0
        %1954 = vmatpush1.bf16.msra.mxu0 0
        %1955 = vmatprep.subr.bf16.mxu0 0
        %1956 = vmatpush1.bf16.msra.mxu0 0
        %1957 = vmatprep.subr.bf16.mxu0 0
        %1958 = vmatpush1.bf16.msra.mxu0 0
        %1959 = vmatprep.mubr.bf16.mxu0 0
        %1960 = vmatmul.mubr.bf16.gmra.mrb[0].mxu0 %v1846
        %v1961 = vpop.f32.mrb[0].mxu0
        %v1962 = vadd.f32 %v1877, %v1961
        %v1963 = vpop.f32.mrb[0].mxu0
        %v1964 = vpop.f32.mrb[0].mxu0
        %v1965 = vadd.f32 %v1877, %v1964
        %v1966 = vpop.f32.mrb[0].mxu0
        %1967 = vmatprep.mubr.bf16.mxu0 0
        %1968 = vmatmul.mubr.bf16.gmra.mrb[0].mxu0 %v1847
        %v1969 = vpop.f32.mrb[0].mxu0
        %v1970 = vadd.f32 %v1877, %v1969
        %v1971 = vpop.f32.mrb[0].mxu0
        %v1972 = vpop.f32.mrb[0].mxu0
        %v1973 = vadd.f32 %v1877, %v1972
        %v1974 = vpop.f32.mrb[0].mxu0
        %1975 = vmatprep.mubr.bf16.mxu0 0
        %1976 = vmatmul.mubr.bf16.gmra.mrb[0].mxu0 %v1848
        %v1977 = vpop.f32.mrb[0].mxu0
        %v1978 = vadd.f32 %v1877, %v1977
        %v1979 = vpop.f32.mrb[0].mxu0
        %v1980 = vpop.f32.mrb[0].mxu0
        %v1981 = vadd.f32 %v1877, %v1980
        %v1982 = vpop.f32.mrb[0].mxu0
        %1983 = vmatprep.mubr.bf16.mxu0 0
        %1984 = vmatmul.mubr.bf16.gmra.mrb[0].mxu0 %v1849
        %v1985 = vpop.f32.mrb[0].mxu0
        %v1986 = vadd.f32 %v1877, %v1985
        %v1987 = vpop.f32.mrb[0].mxu0
        %v1988 = vpop.f32.mrb[0].mxu0
        %v1989 = vadd.f32 %v1877, %v1988
        %v1990 = vpop.f32.mrb[0].mxu0
        %1991 = vmatprep.mubr.bf16.mxu0 0
        %1992 = vmatmul.mubr.bf16.gmra.mrb[0].mxu0 %v1850
        %v1993 = vpop.f32.mrb[0].mxu0
        %v1994 = vadd.f32 %v1877, %v1993
        %v1995 = vpop.f32.mrb[0].mxu0
        %v1996 = vpop.f32.mrb[0].mxu0
        %v1997 = vadd.f32 %v1877, %v1996
        %v1998 = vpop.f32.mrb[0].mxu0
        %1999 = vmatprep.mubr.bf16.mxu0 0
        %2000 = vmatmul.mubr.bf16.gmra.mrb[0].mxu0 %v1851
        %v2001 = vpop.f32.mrb[0].mxu0
        %v2002 = vadd.f32 %v1877, %v2001
        %v2003 = vpop.f32.mrb[0].mxu0
        %v2004 = vpop.f32.mrb[0].mxu0
        %v2005 = vadd.f32 %v1877, %v2004
        %v2006 = vpop.f32.mrb[0].mxu0
        %2007 = vmatprep.mubr.bf16.mxu0 0
        %2008 = vmatmul.mubr.bf16.gmra.mrb[0].mxu0 %v1852
        %v2009 = vpop.f32.mrb[0].mxu0
        %v2010 = vadd.f32 %v1877, %v2009
        %v2011 = vpop.f32.mrb[0].mxu0
        %v2012 = vpop.f32.mrb[0].mxu0
        %v2013 = vadd.f32 %v1877, %v2012
        %v2014 = vpop.f32.mrb[0].mxu0
        %2015 = vmatprep.mubr.bf16.mxu0 0
        %2016 = vmatmul.mubr.bf16.gmra.mrb[0].mxu0 %v1853
        %v2017 = vpop.f32.mrb[0].mxu0
        %v2018 = vadd.f32 %v1877, %v2017
        %v2019 = vpop.f32.mrb[0].mxu0
        %v2020 = vpop.f32.mrb[0].mxu0
        %v2021 = vadd.f32 %v1877, %v2020
        %v2022 = vpop.f32.mrb[0].mxu0
        %2023 = vdwg.mxu0
        %v2024 = vpack.c.bf16 %v1783, %v1782
        %v2025 = vpack.c.bf16 %v1785, %v1784
        %v2026 = vpack.c.bf16 %v1787, %v1786
        %v2027 = vpack.c.bf16 %v1789, %v1788
        %v2028 = vpack.c.bf16 %v1791, %v1790
        %v2029 = vpack.c.bf16 %v1793, %v1792
        %v2030 = vpack.c.bf16 %v1795, %v1794
        %v2031 = vpack.c.bf16 %v1797, %v1796
        %s2032 = scalar_lea.vmem %s1, 384
        %v2033 = vld [vmem:[%s2032] sm:$0xf]
        %v2034 = vld [vmem:[%s2032 + $0x4] sm:$0xf]
        %v2035 = vld [vmem:[%s2032 + $0x8] sm:$0xf]
        %v2036 = vld [vmem:[%s2032 + $0xc] sm:$0xf]
        %v2037 = vld [vmem:[%s2032 + $0x10] sm:$0xf]
        %v2038 = vld [vmem:[%s2032 + $0x14] sm:$0xf]
        %v2039 = vld [vmem:[%s2032 + $0x18] sm:$0xf]
        %v2040 = vld [vmem:[%s2032 + $0x1c] sm:$0xf]
        %v2041 = vld [vmem:[%s2032 + $0x20] sm:$0xf]
        %v2042 = vld [vmem:[%s2032 + $0x24] sm:$0xf]
        %v2043 = vld [vmem:[%s2032 + $0x28] sm:$0xf]
        %v2044 = vld [vmem:[%s2032 + $0x2c] sm:$0xf]
        %v2045 = vld [vmem:[%s2032 + $0x30] sm:$0xf]
        %v2046 = vld [vmem:[%s2032 + $0x34] sm:$0xf]
        %v2047 = vld [vmem:[%s2032 + $0x38] sm:$0xf]
        %v2048 = vld [vmem:[%s2032 + $0x3c] sm:$0xf]
        %v2065 = vunpack.c.l.b16 %v2033
        %v2066 = vunpack.c.l.b16 %v2034
        %v2067 = vunpack.c.l.b16 %v2035
        %v2068 = vunpack.c.l.b16 %v2036
        %v2069 = vunpack.c.l.b16 %v2037
        %v2070 = vunpack.c.l.b16 %v2038
        %v2071 = vunpack.c.l.b16 %v2039
        %v2072 = vunpack.c.l.b16 %v2040
        %v2073 = vunpack.c.l.b16 %v2041
        %v2074 = vunpack.c.l.b16 %v2042
        %v2075 = vunpack.c.l.b16 %v2043
        %v2076 = vunpack.c.l.b16 %v2044
        %v2077 = vunpack.c.l.b16 %v2045
        %v2078 = vunpack.c.l.b16 %v2046
        %v2079 = vunpack.c.l.b16 %v2047
        %v2080 = vunpack.c.l.b16 %v2048
        %v2081 = vpack.c.b16 %v2066, %v2065
        %v2082 = vpack.c.b16 %v2068, %v2067
        %v2083 = vpack.c.b16 %v2070, %v2069
        %v2084 = vpack.c.b16 %v2072, %v2071
        %v2085 = vpack.c.b16 %v2074, %v2073
        %v2086 = vpack.c.b16 %v2076, %v2075
        %v2087 = vpack.c.b16 %v2078, %v2077
        %v2088 = vpack.c.b16 %v2080, %v2079
        %2097 = vmatprep.subr.bf16.mxu0 0
        %2098 = vmatpush1.bf16.msra.mxu0 %v2081
        %2099 = vmatprep.subr.bf16.mxu0 0
        %2100 = vmatpush1.bf16.msra.mxu0 %v2082
        %2101 = vmatprep.subr.bf16.mxu0 0
        %2102 = vmatpush1.bf16.msra.mxu0 %v2083
        %2103 = vmatprep.subr.bf16.mxu0 0
        %2104 = vmatpush1.bf16.msra.mxu0 %v2084
        %2105 = vmatprep.subr.bf16.mxu0 0
        %2106 = vmatpush1.bf16.msra.mxu0 %v2085
        %2107 = vmatprep.subr.bf16.mxu0 0
        %2108 = vmatpush1.bf16.msra.mxu0 %v2086
        %2109 = vmatprep.subr.bf16.mxu0 0
        %2110 = vmatpush1.bf16.msra.mxu0 %v2087
        %2111 = vmatprep.subr.bf16.mxu0 0
        %2112 = vmatpush1.bf16.msra.mxu0 %v2088
        %2113 = vmatprep.subr.bf16.mxu0 0
        %2114 = vmatpush1.bf16.msra.mxu0 0
        %2115 = vmatprep.subr.bf16.mxu0 0
        %2116 = vmatpush1.bf16.msra.mxu0 0
        %2117 = vmatprep.subr.bf16.mxu0 0
        %2118 = vmatpush1.bf16.msra.mxu0 0
        %2119 = vmatprep.subr.bf16.mxu0 0
        %2120 = vmatpush1.bf16.msra.mxu0 0
        %2121 = vmatprep.subr.bf16.mxu0 0
        %2122 = vmatpush1.bf16.msra.mxu0 0
        %2123 = vmatprep.subr.bf16.mxu0 0
        %2124 = vmatpush1.bf16.msra.mxu0 0
        %2125 = vmatprep.subr.bf16.mxu0 0
        %2126 = vmatpush1.bf16.msra.mxu0 0
        %2127 = vmatprep.subr.bf16.mxu0 0
        %2128 = vmatpush1.bf16.msra.mxu0 0
        %2129 = vmatprep.mubr.bf16.mxu0 0
        %2130 = vmatmul.mubr.bf16.gmra.mrb[0].mxu0 %v2024
        %v2131 = vpop.f32.mrb[0].mxu0
        %v2132 = vadd.f32 0.0, %v2131
        %v2133 = vpop.f32.mrb[0].mxu0
        %v2134 = vpop.f32.mrb[0].mxu0
        %v2135 = vadd.f32 0.0, %v2134
        %v2136 = vpop.f32.mrb[0].mxu0
        %2137 = vmatprep.mubr.bf16.mxu0 0
        %2138 = vmatmul.mubr.bf16.gmra.mrb[0].mxu0 %v2025
        %v2139 = vpop.f32.mrb[0].mxu0
        %v2140 = vadd.f32 0.0, %v2139
        %v2141 = vpop.f32.mrb[0].mxu0
        %v2142 = vpop.f32.mrb[0].mxu0
        %v2143 = vadd.f32 0.0, %v2142
        %v2144 = vpop.f32.mrb[0].mxu0
        %2145 = vmatprep.mubr.bf16.mxu0 0
        %2146 = vmatmul.mubr.bf16.gmra.mrb[0].mxu0 %v2026
        %v2147 = vpop.f32.mrb[0].mxu0
        %v2148 = vadd.f32 0.0, %v2147
        %v2149 = vpop.f32.mrb[0].mxu0
        %v2150 = vpop.f32.mrb[0].mxu0
        %v2151 = vadd.f32 0.0, %v2150
        %v2152 = vpop.f32.mrb[0].mxu0
        %2153 = vmatprep.mubr.bf16.mxu0 0
        %2154 = vmatmul.mubr.bf16.gmra.mrb[0].mxu0 %v2027
        %v2155 = vpop.f32.mrb[0].mxu0
        %v2156 = vadd.f32 0.0, %v2155
        %v2157 = vpop.f32.mrb[0].mxu0
        %v2158 = vpop.f32.mrb[0].mxu0
        %v2159 = vadd.f32 0.0, %v2158
        %v2160 = vpop.f32.mrb[0].mxu0
        %2161 = vmatprep.mubr.bf16.mxu0 0
        %2162 = vmatmul.mubr.bf16.gmra.mrb[0].mxu0 %v2028
        %v2163 = vpop.f32.mrb[0].mxu0
        %v2164 = vadd.f32 0.0, %v2163
        %v2165 = vpop.f32.mrb[0].mxu0
        %v2166 = vpop.f32.mrb[0].mxu0
        %v2167 = vadd.f32 0.0, %v2166
        %v2168 = vpop.f32.mrb[0].mxu0
        %2169 = vmatprep.mubr.bf16.mxu0 0
        %2170 = vmatmul.mubr.bf16.gmra.mrb[0].mxu0 %v2029
        %v2171 = vpop.f32.mrb[0].mxu0
        %v2172 = vadd.f32 0.0, %v2171
        %v2173 = vpop.f32.mrb[0].mxu0
        %v2174 = vpop.f32.mrb[0].mxu0
        %v2175 = vadd.f32 0.0, %v2174
        %v2176 = vpop.f32.mrb[0].mxu0
        %2177 = vmatprep.mubr.bf16.mxu0 0
        %2178 = vmatmul.mubr.bf16.gmra.mrb[0].mxu0 %v2030
        %v2179 = vpop.f32.mrb[0].mxu0
        %v2180 = vadd.f32 0.0, %v2179
        %v2181 = vpop.f32.mrb[0].mxu0
        %v2182 = vpop.f32.mrb[0].mxu0
        %v2183 = vadd.f32 0.0, %v2182
        %v2184 = vpop.f32.mrb[0].mxu0
        %2185 = vmatprep.mubr.bf16.mxu0 0
        %2186 = vmatmul.mubr.bf16.gmra.mrb[0].mxu0 %v2031
        %v2187 = vpop.f32.mrb[0].mxu0
        %v2188 = vadd.f32 0.0, %v2187
        %v2189 = vpop.f32.mrb[0].mxu0
        %v2190 = vpop.f32.mrb[0].mxu0
        %v2191 = vadd.f32 0.0, %v2190
        %v2192 = vpop.f32.mrb[0].mxu0
        %2193 = vdwg.mxu0
        %v2194 = vadd.f32 %v1962, %v2132
        %v2195 = vadd.f32 %v1965, %v2135
        %v2196 = vadd.f32 %v1970, %v2140
        %v2197 = vadd.f32 %v1973, %v2143
        %v2198 = vadd.f32 %v1978, %v2148
        %v2199 = vadd.f32 %v1981, %v2151
        %v2200 = vadd.f32 %v1986, %v2156
        %v2201 = vadd.f32 %v1989, %v2159
        %v2202 = vadd.f32 %v1994, %v2164
        %v2203 = vadd.f32 %v1997, %v2167
        %v2204 = vadd.f32 %v2002, %v2172
        %v2205 = vadd.f32 %v2005, %v2175
        %v2206 = vadd.f32 %v2010, %v2180
        %v2207 = vadd.f32 %v2013, %v2183
        %v2208 = vadd.f32 %v2018, %v2188
        %v2209 = vadd.f32 %v2021, %v2191
        %v2210 = vpack.c.bf16 %v1831, %v1830
        %v2211 = vpack.c.bf16 %v1833, %v1832
        %v2212 = vpack.c.bf16 %v1835, %v1834
        %v2213 = vpack.c.bf16 %v1837, %v1836
        %v2214 = vpack.c.bf16 %v1839, %v1838
        %v2215 = vpack.c.bf16 %v1841, %v1840
        %v2216 = vpack.c.bf16 %v1843, %v1842
        %v2217 = vpack.c.bf16 %v1845, %v1844
        %s2218 = scalar_lea.vmem %s1, 512
        %v2219 = vld [vmem:[%s2218] sm:$0xf]
        %v2220 = vld [vmem:[%s2218 + $0x4] sm:$0xf]
        %v2221 = vld [vmem:[%s2218 + $0x8] sm:$0xf]
        %v2222 = vld [vmem:[%s2218 + $0xc] sm:$0xf]
        %v2223 = vld [vmem:[%s2218 + $0x10] sm:$0xf]
        %v2224 = vld [vmem:[%s2218 + $0x14] sm:$0xf]
        %v2225 = vld [vmem:[%s2218 + $0x18] sm:$0xf]
        %v2226 = vld [vmem:[%s2218 + $0x1c] sm:$0xf]
        %v2227 = vld [vmem:[%s2218 + $0x20] sm:$0xf]
        %v2228 = vld [vmem:[%s2218 + $0x24] sm:$0xf]
        %v2229 = vld [vmem:[%s2218 + $0x28] sm:$0xf]
        %v2230 = vld [vmem:[%s2218 + $0x2c] sm:$0xf]
        %v2231 = vld [vmem:[%s2218 + $0x30] sm:$0xf]
        %v2232 = vld [vmem:[%s2218 + $0x34] sm:$0xf]
        %v2233 = vld [vmem:[%s2218 + $0x38] sm:$0xf]
        %v2234 = vld [vmem:[%s2218 + $0x3c] sm:$0xf]
        %v2251 = vunpack.c.l.b16 %v2219
        %v2252 = vunpack.c.l.b16 %v2220
        %v2253 = vunpack.c.l.b16 %v2221
        %v2254 = vunpack.c.l.b16 %v2222
        %v2255 = vunpack.c.l.b16 %v2223
        %v2256 = vunpack.c.l.b16 %v2224
        %v2257 = vunpack.c.l.b16 %v2225
        %v2258 = vunpack.c.l.b16 %v2226
        %v2259 = vunpack.c.l.b16 %v2227
        %v2260 = vunpack.c.l.b16 %v2228
        %v2261 = vunpack.c.l.b16 %v2229
        %v2262 = vunpack.c.l.b16 %v2230
        %v2263 = vunpack.c.l.b16 %v2231
        %v2264 = vunpack.c.l.b16 %v2232
        %v2265 = vunpack.c.l.b16 %v2233
        %v2266 = vunpack.c.l.b16 %v2234
        %v2267 = vpack.c.b16 %v2252, %v2251
        %v2268 = vpack.c.b16 %v2254, %v2253
        %v2269 = vpack.c.b16 %v2256, %v2255
        %v2270 = vpack.c.b16 %v2258, %v2257
        %v2271 = vpack.c.b16 %v2260, %v2259
        %v2272 = vpack.c.b16 %v2262, %v2261
        %v2273 = vpack.c.b16 %v2264, %v2263
        %v2274 = vpack.c.b16 %v2266, %v2265
        %2283 = vmatprep.subr.bf16.mxu0 0
        %2284 = vmatpush1.bf16.msra.mxu0 %v2267
        %2285 = vmatprep.subr.bf16.mxu0 0
        %2286 = vmatpush1.bf16.msra.mxu0 %v2268
        %2287 = vmatprep.subr.bf16.mxu0 0
        %2288 = vmatpush1.bf16.msra.mxu0 %v2269
        %2289 = vmatprep.subr.bf16.mxu0 0
        %2290 = vmatpush1.bf16.msra.mxu0 %v2270
        %2291 = vmatprep.subr.bf16.mxu0 0
        %2292 = vmatpush1.bf16.msra.mxu0 %v2271
        %2293 = vmatprep.subr.bf16.mxu0 0
        %2294 = vmatpush1.bf16.msra.mxu0 %v2272
        %2295 = vmatprep.subr.bf16.mxu0 0
        %2296 = vmatpush1.bf16.msra.mxu0 %v2273
        %2297 = vmatprep.subr.bf16.mxu0 0
        %2298 = vmatpush1.bf16.msra.mxu0 %v2274
        %2299 = vmatprep.subr.bf16.mxu0 0
        %2300 = vmatpush1.bf16.msra.mxu0 0
        %2301 = vmatprep.subr.bf16.mxu0 0
        %2302 = vmatpush1.bf16.msra.mxu0 0
        %2303 = vmatprep.subr.bf16.mxu0 0
        %2304 = vmatpush1.bf16.msra.mxu0 0
        %2305 = vmatprep.subr.bf16.mxu0 0
        %2306 = vmatpush1.bf16.msra.mxu0 0
        %2307 = vmatprep.subr.bf16.mxu0 0
        %2308 = vmatpush1.bf16.msra.mxu0 0
        %2309 = vmatprep.subr.bf16.mxu0 0
        %2310 = vmatpush1.bf16.msra.mxu0 0
        %2311 = vmatprep.subr.bf16.mxu0 0
        %2312 = vmatpush1.bf16.msra.mxu0 0
        %2313 = vmatprep.subr.bf16.mxu0 0
        %2314 = vmatpush1.bf16.msra.mxu0 0
        %2315 = vmatprep.mubr.bf16.mxu0 0
        %2316 = vmatmul.mubr.bf16.gmra.mrb[0].mxu0 %v2210
        %v2317 = vpop.f32.mrb[0].mxu0
        %v2318 = vadd.f32 0.0, %v2317
        %v2319 = vpop.f32.mrb[0].mxu0
        %v2320 = vpop.f32.mrb[0].mxu0
        %v2321 = vadd.f32 0.0, %v2320
        %v2322 = vpop.f32.mrb[0].mxu0
        %2323 = vmatprep.mubr.bf16.mxu0 0
        %2324 = vmatmul.mubr.bf16.gmra.mrb[0].mxu0 %v2211
        %v2325 = vpop.f32.mrb[0].mxu0
        %v2326 = vadd.f32 0.0, %v2325
        %v2327 = vpop.f32.mrb[0].mxu0
        %v2328 = vpop.f32.mrb[0].mxu0
        %v2329 = vadd.f32 0.0, %v2328
        %v2330 = vpop.f32.mrb[0].mxu0
        %2331 = vmatprep.mubr.bf16.mxu0 0
        %2332 = vmatmul.mubr.bf16.gmra.mrb[0].mxu0 %v2212
        %v2333 = vpop.f32.mrb[0].mxu0
        %v2334 = vadd.f32 0.0, %v2333
        %v2335 = vpop.f32.mrb[0].mxu0
        %v2336 = vpop.f32.mrb[0].mxu0
        %v2337 = vadd.f32 0.0, %v2336
        %v2338 = vpop.f32.mrb[0].mxu0
        %2339 = vmatprep.mubr.bf16.mxu0 0
        %2340 = vmatmul.mubr.bf16.gmra.mrb[0].mxu0 %v2213
        %v2341 = vpop.f32.mrb[0].mxu0
        %v2342 = vadd.f32 0.0, %v2341
        %v2343 = vpop.f32.mrb[0].mxu0
        %v2344 = vpop.f32.mrb[0].mxu0
        %v2345 = vadd.f32 0.0, %v2344
        %v2346 = vpop.f32.mrb[0].mxu0
        %2347 = vmatprep.mubr.bf16.mxu0 0
        %2348 = vmatmul.mubr.bf16.gmra.mrb[0].mxu0 %v2214
        %v2349 = vpop.f32.mrb[0].mxu0
        %v2350 = vadd.f32 0.0, %v2349
        %v2351 = vpop.f32.mrb[0].mxu0
        %v2352 = vpop.f32.mrb[0].mxu0
        %v2353 = vadd.f32 0.0, %v2352
        %v2354 = vpop.f32.mrb[0].mxu0
        %2355 = vmatprep.mubr.bf16.mxu0 0
        %2356 = vmatmul.mubr.bf16.gmra.mrb[0].mxu0 %v2215
        %v2357 = vpop.f32.mrb[0].mxu0
        %v2358 = vadd.f32 0.0, %v2357
        %v2359 = vpop.f32.mrb[0].mxu0
        %v2360 = vpop.f32.mrb[0].mxu0
        %v2361 = vadd.f32 0.0, %v2360
        %v2362 = vpop.f32.mrb[0].mxu0
        %2363 = vmatprep.mubr.bf16.mxu0 0
        %2364 = vmatmul.mubr.bf16.gmra.mrb[0].mxu0 %v2216
        %v2365 = vpop.f32.mrb[0].mxu0
        %v2366 = vadd.f32 0.0, %v2365
        %v2367 = vpop.f32.mrb[0].mxu0
        %v2368 = vpop.f32.mrb[0].mxu0
        %v2369 = vadd.f32 0.0, %v2368
        %v2370 = vpop.f32.mrb[0].mxu0
        %2371 = vmatprep.mubr.bf16.mxu0 0
        %2372 = vmatmul.mubr.bf16.gmra.mrb[0].mxu0 %v2217
        %v2373 = vpop.f32.mrb[0].mxu0
        %v2374 = vadd.f32 0.0, %v2373
        %v2375 = vpop.f32.mrb[0].mxu0
        %v2376 = vpop.f32.mrb[0].mxu0
        %v2377 = vadd.f32 0.0, %v2376
        %v2378 = vpop.f32.mrb[0].mxu0
        %2379 = vdwg.mxu0
        %v2380 = vadd.f32 %v2194, %v2318
        %v2381 = vadd.f32 %v2195, %v2321
        %v2382 = vadd.f32 %v2196, %v2326
        %v2383 = vadd.f32 %v2197, %v2329
        %v2384 = vadd.f32 %v2198, %v2334
        %v2385 = vadd.f32 %v2199, %v2337
        %v2386 = vadd.f32 %v2200, %v2342
        %v2387 = vadd.f32 %v2201, %v2345
        %v2388 = vadd.f32 %v2202, %v2350
        %v2389 = vadd.f32 %v2203, %v2353
        %v2390 = vadd.f32 %v2204, %v2358
        %v2391 = vadd.f32 %v2205, %v2361
        %v2392 = vadd.f32 %v2206, %v2366
        %v2393 = vadd.f32 %v2207, %v2369
        %v2394 = vadd.f32 %v2208, %v2374
        %v2395 = vadd.f32 %v2209, %v2377
        %v2396 = vmax.f32 %v2380, 0.0
        %v2397 = vmax.f32 %v2381, 0.0
        %v2398 = vmax.f32 %v2382, 0.0
        %v2399 = vmax.f32 %v2383, 0.0
        %v2400 = vmax.f32 %v2384, 0.0
        %v2401 = vmax.f32 %v2385, 0.0
        %v2402 = vmax.f32 %v2386, 0.0
        %v2403 = vmax.f32 %v2387, 0.0
        %v2404 = vmax.f32 %v2388, 0.0
        %v2405 = vmax.f32 %v2389, 0.0
        %v2406 = vmax.f32 %v2390, 0.0
        %v2407 = vmax.f32 %v2391, 0.0
        %v2408 = vmax.f32 %v2392, 0.0
        %v2409 = vmax.f32 %v2393, 0.0
        %v2410 = vmax.f32 %v2394, 0.0
        %v2411 = vmax.f32 %v2395, 0.0
        %v2412 = vrot.slane %v2396, 7
        %v2413 = vrot.slane %v2397, 7
        %v2414 = vrot.slane %v2398, 7
        %v2415 = vrot.slane %v2399, 7
        %v2416 = vrot.slane %v2400, 7
        %v2417 = vrot.slane %v2401, 7
        %v2418 = vrot.slane %v2402, 7
        %v2419 = vrot.slane %v2403, 7
        %v2420 = vrot.slane %v2404, 7
        %v2421 = vrot.slane %v2405, 7
        %v2422 = vrot.slane %v2406, 7
        %v2423 = vrot.slane %v2407, 7
        %v2424 = vrot.slane %v2408, 7
        %v2425 = vrot.slane %v2409, 7
        %v2426 = vrot.slane %v2410, 7
        %v2427 = vrot.slane %v2411, 7
        %v2428 = vsel %vm442, %v2426, %v2427
        %v2429 = vsel %vm442, %v2425, %v2426
        %v2430 = vsel %vm442, %v2424, %v2425
        %v2431 = vsel %vm442, %v2423, %v2424
        %v2432 = vsel %vm442, %v2422, %v2423
        %v2433 = vsel %vm442, %v2421, %v2422
        %v2434 = vsel %vm442, %v2420, %v2421
        %v2435 = vsel %vm442, %v2419, %v2420
        %v2436 = vsel %vm442, %v2418, %v2419
        %v2437 = vsel %vm442, %v2417, %v2418
        %v2438 = vsel %vm442, %v2416, %v2417
        %v2439 = vsel %vm442, %v2415, %v2416
        %v2440 = vsel %vm442, %v2414, %v2415
        %v2441 = vsel %vm442, %v2413, %v2414
        %v2442 = vsel %vm442, %v2412, %v2413
        %v2443 = vsel %vm442, %v2427, %v2412
        %v2444 = vsel %vm378, %v2443, 0.0
        %v2445 = vsel %vm379, %v2442, 0.0
        %v2446 = vsel %vm380, %v2441, 0.0
        %v2447 = vsel %vm381, %v2440, 0.0
        %v2448 = vsel %vm382, %v2439, 0.0
        %v2449 = vsel %vm383, %v2438, 0.0
        %v2450 = vsel %vm384, %v2437, 0.0
        %v2451 = vsel %vm385, %v2436, 0.0
        %v2452 = vsel %vm386, %v2435, 0.0
        %v2453 = vsel %vm387, %v2434, 0.0
        %v2454 = vsel %vm388, %v2433, 0.0
        %v2455 = vsel %vm389, %v2432, 0.0
        %v2456 = vsel %vm390, %v2431, 0.0
        %v2457 = vsel %vm391, %v2430, 0.0
        %v2458 = vsel %vm392, %v2429, 0.0
        %v2459 = vsel %vm393, %v2428, 0.0
        %v2460 = vrot.slane %v2396, 1
        %v2461 = vrot.slane %v2397, 1
        %v2462 = vrot.slane %v2398, 1
        %v2463 = vrot.slane %v2399, 1
        %v2464 = vrot.slane %v2400, 1
        %v2465 = vrot.slane %v2401, 1
        %v2466 = vrot.slane %v2402, 1
        %v2467 = vrot.slane %v2403, 1
        %v2468 = vrot.slane %v2404, 1
        %v2469 = vrot.slane %v2405, 1
        %v2470 = vrot.slane %v2406, 1
        %v2471 = vrot.slane %v2407, 1
        %v2472 = vrot.slane %v2408, 1
        %v2473 = vrot.slane %v2409, 1
        %v2474 = vrot.slane %v2410, 1
        %v2475 = vrot.slane %v2411, 1
        %v2476 = vsel %vm491, %v2474, %v2475
        %v2477 = vsel %vm491, %v2473, %v2474
        %v2478 = vsel %vm491, %v2472, %v2473
        %v2479 = vsel %vm491, %v2471, %v2472
        %v2480 = vsel %vm491, %v2470, %v2471
        %v2481 = vsel %vm491, %v2469, %v2470
        %v2482 = vsel %vm491, %v2468, %v2469
        %v2483 = vsel %vm491, %v2467, %v2468
        %v2484 = vsel %vm491, %v2466, %v2467
        %v2485 = vsel %vm491, %v2465, %v2466
        %v2486 = vsel %vm491, %v2464, %v2465
        %v2487 = vsel %vm491, %v2463, %v2464
        %v2488 = vsel %vm491, %v2462, %v2463
        %v2489 = vsel %vm491, %v2461, %v2462
        %v2490 = vsel %vm491, %v2460, %v2461
        %v2491 = vsel %vm491, %v2475, %v2460
        %v2492 = vsel %vm394, %v2490, 0.0
        %v2493 = vsel %vm395, %v2489, 0.0
        %v2494 = vsel %vm396, %v2488, 0.0
        %v2495 = vsel %vm397, %v2487, 0.0
        %v2496 = vsel %vm398, %v2486, 0.0
        %v2497 = vsel %vm399, %v2485, 0.0
        %v2498 = vsel %vm400, %v2484, 0.0
        %v2499 = vsel %vm401, %v2483, 0.0
        %v2500 = vsel %vm402, %v2482, 0.0
        %v2501 = vsel %vm403, %v2481, 0.0
        %v2502 = vsel %vm404, %v2480, 0.0
        %v2503 = vsel %vm405, %v2479, 0.0
        %v2504 = vsel %vm406, %v2478, 0.0
        %v2505 = vsel %vm407, %v2477, 0.0
        %v2506 = vsel %vm408, %v2476, 0.0
        %v2507 = vsel %vm409, %v2491, 0.0
        %v2508 = vpack.c.bf16 %v2397, %v2396
        %v2509 = vpack.c.bf16 %v2399, %v2398
        %v2510 = vpack.c.bf16 %v2401, %v2400
        %v2511 = vpack.c.bf16 %v2403, %v2402
        %v2512 = vpack.c.bf16 %v2405, %v2404
        %v2513 = vpack.c.bf16 %v2407, %v2406
        %v2514 = vpack.c.bf16 %v2409, %v2408
        %v2515 = vpack.c.bf16 %v2411, %v2410
        %s2516 = scalar_lea.vmem %s1, 640
        %v2517 = vld [vmem:[%s2516] sm:$0xf]
        %v2518 = vld [vmem:[%s2516 + $0x4] sm:$0xf]
        %v2519 = vld [vmem:[%s2516 + $0x8] sm:$0xf]
        %v2520 = vld [vmem:[%s2516 + $0xc] sm:$0xf]
        %v2521 = vld [vmem:[%s2516 + $0x10] sm:$0xf]
        %v2522 = vld [vmem:[%s2516 + $0x14] sm:$0xf]
        %v2523 = vld [vmem:[%s2516 + $0x18] sm:$0xf]
        %v2524 = vld [vmem:[%s2516 + $0x1c] sm:$0xf]
        %v2525 = vld [vmem:[%s2516 + $0x20] sm:$0xf]
        %v2526 = vld [vmem:[%s2516 + $0x24] sm:$0xf]
        %v2527 = vld [vmem:[%s2516 + $0x28] sm:$0xf]
        %v2528 = vld [vmem:[%s2516 + $0x2c] sm:$0xf]
        %v2529 = vld [vmem:[%s2516 + $0x30] sm:$0xf]
        %v2530 = vld [vmem:[%s2516 + $0x34] sm:$0xf]
        %v2531 = vld [vmem:[%s2516 + $0x38] sm:$0xf]
        %v2532 = vld [vmem:[%s2516 + $0x3c] sm:$0xf]
        %s2533 = scalar_lea.vmem %s2, 3
        %v2534 = vld [vmem:[%s2533] sm:$0x1]
        %v2536 = vlaneseq
        %v2537 = vshrl.u32 %v2536, 7
        %v2538 = vsub.s32 0, %v2537
        %v2539 = vrot.slane %v2534, %v2538
        %v2557 = vunpack.c.l.b16 %v2517
        %v2558 = vunpack.c.l.b16 %v2518
        %v2559 = vunpack.c.l.b16 %v2519
        %v2560 = vunpack.c.l.b16 %v2520
        %v2561 = vunpack.c.l.b16 %v2521
        %v2562 = vunpack.c.l.b16 %v2522
        %v2563 = vunpack.c.l.b16 %v2523
        %v2564 = vunpack.c.l.b16 %v2524
        %v2565 = vunpack.c.l.b16 %v2525
        %v2566 = vunpack.c.l.b16 %v2526
        %v2567 = vunpack.c.l.b16 %v2527
        %v2568 = vunpack.c.l.b16 %v2528
        %v2569 = vunpack.c.l.b16 %v2529
        %v2570 = vunpack.c.l.b16 %v2530
        %v2571 = vunpack.c.l.b16 %v2531
        %v2572 = vunpack.c.l.b16 %v2532
        %v2573 = vpack.c.b16 %v2558, %v2557
        %v2574 = vpack.c.b16 %v2560, %v2559
        %v2575 = vpack.c.b16 %v2562, %v2561
        %v2576 = vpack.c.b16 %v2564, %v2563
        %v2577 = vpack.c.b16 %v2566, %v2565
        %v2578 = vpack.c.b16 %v2568, %v2567
        %v2579 = vpack.c.b16 %v2570, %v2569
        %v2580 = vpack.c.b16 %v2572, %v2571
        %2589 = vmatprep.subr.bf16.mxu0 0
        %2590 = vmatpush1.bf16.msra.mxu0 %v2573
        %2591 = vmatprep.subr.bf16.mxu0 0
        %2592 = vmatpush1.bf16.msra.mxu0 %v2574
        %2593 = vmatprep.subr.bf16.mxu0 0
        %2594 = vmatpush1.bf16.msra.mxu0 %v2575
        %2595 = vmatprep.subr.bf16.mxu0 0
        %2596 = vmatpush1.bf16.msra.mxu0 %v2576
        %2597 = vmatprep.subr.bf16.mxu0 0
        %2598 = vmatpush1.bf16.msra.mxu0 %v2577
        %2599 = vmatprep.subr.bf16.mxu0 0
        %2600 = vmatpush1.bf16.msra.mxu0 %v2578
        %2601 = vmatprep.subr.bf16.mxu0 0
        %2602 = vmatpush1.bf16.msra.mxu0 %v2579
        %2603 = vmatprep.subr.bf16.mxu0 0
        %2604 = vmatpush1.bf16.msra.mxu0 %v2580
        %2605 = vmatprep.subr.bf16.mxu0 0
        %2606 = vmatpush1.bf16.msra.mxu0 0
        %2607 = vmatprep.subr.bf16.mxu0 0
        %2608 = vmatpush1.bf16.msra.mxu0 0
        %2609 = vmatprep.subr.bf16.mxu0 0
        %2610 = vmatpush1.bf16.msra.mxu0 0
        %2611 = vmatprep.subr.bf16.mxu0 0
        %2612 = vmatpush1.bf16.msra.mxu0 0
        %2613 = vmatprep.subr.bf16.mxu0 0
        %2614 = vmatpush1.bf16.msra.mxu0 0
        %2615 = vmatprep.subr.bf16.mxu0 0
        %2616 = vmatpush1.bf16.msra.mxu0 0
        %2617 = vmatprep.subr.bf16.mxu0 0
        %2618 = vmatpush1.bf16.msra.mxu0 0
        %2619 = vmatprep.subr.bf16.mxu0 0
        %2620 = vmatpush1.bf16.msra.mxu0 0
        %2621 = vmatprep.mubr.bf16.mxu0 0
        %2622 = vmatmul.mubr.bf16.gmra.mrb[0].mxu0 %v2508
        %v2623 = vpop.f32.mrb[0].mxu0
        %v2624 = vadd.f32 %v2539, %v2623
        %v2625 = vpop.f32.mrb[0].mxu0
        %v2626 = vpop.f32.mrb[0].mxu0
        %v2627 = vadd.f32 %v2539, %v2626
        %v2628 = vpop.f32.mrb[0].mxu0
        %2629 = vmatprep.mubr.bf16.mxu0 0
        %2630 = vmatmul.mubr.bf16.gmra.mrb[0].mxu0 %v2509
        %v2631 = vpop.f32.mrb[0].mxu0
        %v2632 = vadd.f32 %v2539, %v2631
        %v2633 = vpop.f32.mrb[0].mxu0
        %v2634 = vpop.f32.mrb[0].mxu0
        %v2635 = vadd.f32 %v2539, %v2634
        %v2636 = vpop.f32.mrb[0].mxu0
        %2637 = vmatprep.mubr.bf16.mxu0 0
        %2638 = vmatmul.mubr.bf16.gmra.mrb[0].mxu0 %v2510
        %v2639 = vpop.f32.mrb[0].mxu0
        %v2640 = vadd.f32 %v2539, %v2639
        %v2641 = vpop.f32.mrb[0].mxu0
        %v2642 = vpop.f32.mrb[0].mxu0
        %v2643 = vadd.f32 %v2539, %v2642
        %v2644 = vpop.f32.mrb[0].mxu0
        %2645 = vmatprep.mubr.bf16.mxu0 0
        %2646 = vmatmul.mubr.bf16.gmra.mrb[0].mxu0 %v2511
        %v2647 = vpop.f32.mrb[0].mxu0
        %v2648 = vadd.f32 %v2539, %v2647
        %v2649 = vpop.f32.mrb[0].mxu0
        %v2650 = vpop.f32.mrb[0].mxu0
        %v2651 = vadd.f32 %v2539, %v2650
        %v2652 = vpop.f32.mrb[0].mxu0
        %2653 = vmatprep.mubr.bf16.mxu0 0
        %2654 = vmatmul.mubr.bf16.gmra.mrb[0].mxu0 %v2512
        %v2655 = vpop.f32.mrb[0].mxu0
        %v2656 = vadd.f32 %v2539, %v2655
        %v2657 = vpop.f32.mrb[0].mxu0
        %v2658 = vpop.f32.mrb[0].mxu0
        %v2659 = vadd.f32 %v2539, %v2658
        %v2660 = vpop.f32.mrb[0].mxu0
        %2661 = vmatprep.mubr.bf16.mxu0 0
        %2662 = vmatmul.mubr.bf16.gmra.mrb[0].mxu0 %v2513
        %v2663 = vpop.f32.mrb[0].mxu0
        %v2664 = vadd.f32 %v2539, %v2663
        %v2665 = vpop.f32.mrb[0].mxu0
        %v2666 = vpop.f32.mrb[0].mxu0
        %v2667 = vadd.f32 %v2539, %v2666
        %v2668 = vpop.f32.mrb[0].mxu0
        %2669 = vmatprep.mubr.bf16.mxu0 0
        %2670 = vmatmul.mubr.bf16.gmra.mrb[0].mxu0 %v2514
        %v2671 = vpop.f32.mrb[0].mxu0
        %v2672 = vadd.f32 %v2539, %v2671
        %v2673 = vpop.f32.mrb[0].mxu0
        %v2674 = vpop.f32.mrb[0].mxu0
        %v2675 = vadd.f32 %v2539, %v2674
        %v2676 = vpop.f32.mrb[0].mxu0
        %2677 = vmatprep.mubr.bf16.mxu0 0
        %2678 = vmatmul.mubr.bf16.gmra.mrb[0].mxu0 %v2515
        %v2679 = vpop.f32.mrb[0].mxu0
        %v2680 = vadd.f32 %v2539, %v2679
        %v2681 = vpop.f32.mrb[0].mxu0
        %v2682 = vpop.f32.mrb[0].mxu0
        %v2683 = vadd.f32 %v2539, %v2682
        %v2684 = vpop.f32.mrb[0].mxu0
        %2685 = vdwg.mxu0
        %v2686 = vpack.c.bf16 %v2445, %v2444
        %v2687 = vpack.c.bf16 %v2447, %v2446
        %v2688 = vpack.c.bf16 %v2449, %v2448
        %v2689 = vpack.c.bf16 %v2451, %v2450
        %v2690 = vpack.c.bf16 %v2453, %v2452
        %v2691 = vpack.c.bf16 %v2455, %v2454
        %v2692 = vpack.c.bf16 %v2457, %v2456
        %v2693 = vpack.c.bf16 %v2459, %v2458
        %s2694 = scalar_lea.vmem %s1, 576
        %v2695 = vld [vmem:[%s2694] sm:$0xf]
        %v2696 = vld [vmem:[%s2694 + $0x4] sm:$0xf]
        %v2697 = vld [vmem:[%s2694 + $0x8] sm:$0xf]
        %v2698 = vld [vmem:[%s2694 + $0xc] sm:$0xf]
        %v2699 = vld [vmem:[%s2694 + $0x10] sm:$0xf]
        %v2700 = vld [vmem:[%s2694 + $0x14] sm:$0xf]
        %v2701 = vld [vmem:[%s2694 + $0x18] sm:$0xf]
        %v2702 = vld [vmem:[%s2694 + $0x1c] sm:$0xf]
        %v2703 = vld [vmem:[%s2694 + $0x20] sm:$0xf]
        %v2704 = vld [vmem:[%s2694 + $0x24] sm:$0xf]
        %v2705 = vld [vmem:[%s2694 + $0x28] sm:$0xf]
        %v2706 = vld [vmem:[%s2694 + $0x2c] sm:$0xf]
        %v2707 = vld [vmem:[%s2694 + $0x30] sm:$0xf]
        %v2708 = vld [vmem:[%s2694 + $0x34] sm:$0xf]
        %v2709 = vld [vmem:[%s2694 + $0x38] sm:$0xf]
        %v2710 = vld [vmem:[%s2694 + $0x3c] sm:$0xf]
        %v2727 = vunpack.c.l.b16 %v2695
        %v2728 = vunpack.c.l.b16 %v2696
        %v2729 = vunpack.c.l.b16 %v2697
        %v2730 = vunpack.c.l.b16 %v2698
        %v2731 = vunpack.c.l.b16 %v2699
        %v2732 = vunpack.c.l.b16 %v2700
        %v2733 = vunpack.c.l.b16 %v2701
        %v2734 = vunpack.c.l.b16 %v2702
        %v2735 = vunpack.c.l.b16 %v2703
        %v2736 = vunpack.c.l.b16 %v2704
        %v2737 = vunpack.c.l.b16 %v2705
        %v2738 = vunpack.c.l.b16 %v2706
        %v2739 = vunpack.c.l.b16 %v2707
        %v2740 = vunpack.c.l.b16 %v2708
        %v2741 = vunpack.c.l.b16 %v2709
        %v2742 = vunpack.c.l.b16 %v2710
        %v2743 = vpack.c.b16 %v2728, %v2727
        %v2744 = vpack.c.b16 %v2730, %v2729
        %v2745 = vpack.c.b16 %v2732, %v2731
        %v2746 = vpack.c.b16 %v2734, %v2733
        %v2747 = vpack.c.b16 %v2736, %v2735
        %v2748 = vpack.c.b16 %v2738, %v2737
        %v2749 = vpack.c.b16 %v2740, %v2739
        %v2750 = vpack.c.b16 %v2742, %v2741
        %2759 = vmatprep.subr.bf16.mxu0 0
        %2760 = vmatpush1.bf16.msra.mxu0 %v2743
        %2761 = vmatprep.subr.bf16.mxu0 0
        %2762 = vmatpush1.bf16.msra.mxu0 %v2744
        %2763 = vmatprep.subr.bf16.mxu0 0
        %2764 = vmatpush1.bf16.msra.mxu0 %v2745
        %2765 = vmatprep.subr.bf16.mxu0 0
        %2766 = vmatpush1.bf16.msra.mxu0 %v2746
        %2767 = vmatprep.subr.bf16.mxu0 0
        %2768 = vmatpush1.bf16.msra.mxu0 %v2747
        %2769 = vmatprep.subr.bf16.mxu0 0
        %2770 = vmatpush1.bf16.msra.mxu0 %v2748
        %2771 = vmatprep.subr.bf16.mxu0 0
        %2772 = vmatpush1.bf16.msra.mxu0 %v2749
        %2773 = vmatprep.subr.bf16.mxu0 0
        %2774 = vmatpush1.bf16.msra.mxu0 %v2750
        %2775 = vmatprep.subr.bf16.mxu0 0
        %2776 = vmatpush1.bf16.msra.mxu0 0
        %2777 = vmatprep.subr.bf16.mxu0 0
        %2778 = vmatpush1.bf16.msra.mxu0 0
        %2779 = vmatprep.subr.bf16.mxu0 0
        %2780 = vmatpush1.bf16.msra.mxu0 0
        %2781 = vmatprep.subr.bf16.mxu0 0
        %2782 = vmatpush1.bf16.msra.mxu0 0
        %2783 = vmatprep.subr.bf16.mxu0 0
        %2784 = vmatpush1.bf16.msra.mxu0 0
        %2785 = vmatprep.subr.bf16.mxu0 0
        %2786 = vmatpush1.bf16.msra.mxu0 0
        %2787 = vmatprep.subr.bf16.mxu0 0
        %2788 = vmatpush1.bf16.msra.mxu0 0
        %2789 = vmatprep.subr.bf16.mxu0 0
        %2790 = vmatpush1.bf16.msra.mxu0 0
        %2791 = vmatprep.mubr.bf16.mxu0 0
        %2792 = vmatmul.mubr.bf16.gmra.mrb[0].mxu0 %v2686
        %v2793 = vpop.f32.mrb[0].mxu0
        %v2794 = vadd.f32 0.0, %v2793
        %v2795 = vpop.f32.mrb[0].mxu0
        %v2796 = vpop.f32.mrb[0].mxu0
        %v2797 = vadd.f32 0.0, %v2796
        %v2798 = vpop.f32.mrb[0].mxu0
        %2799 = vmatprep.mubr.bf16.mxu0 0
        %2800 = vmatmul.mubr.bf16.gmra.mrb[0].mxu0 %v2687
        %v2801 = vpop.f32.mrb[0].mxu0
        %v2802 = vadd.f32 0.0, %v2801
        %v2803 = vpop.f32.mrb[0].mxu0
        %v2804 = vpop.f32.mrb[0].mxu0
        %v2805 = vadd.f32 0.0, %v2804
        %v2806 = vpop.f32.mrb[0].mxu0
        %2807 = vmatprep.mubr.bf16.mxu0 0
        %2808 = vmatmul.mubr.bf16.gmra.mrb[0].mxu0 %v2688
        %v2809 = vpop.f32.mrb[0].mxu0
        %v2810 = vadd.f32 0.0, %v2809
        %v2811 = vpop.f32.mrb[0].mxu0
        %v2812 = vpop.f32.mrb[0].mxu0
        %v2813 = vadd.f32 0.0, %v2812
        %v2814 = vpop.f32.mrb[0].mxu0
        %2815 = vmatprep.mubr.bf16.mxu0 0
        %2816 = vmatmul.mubr.bf16.gmra.mrb[0].mxu0 %v2689
        %v2817 = vpop.f32.mrb[0].mxu0
        %v2818 = vadd.f32 0.0, %v2817
        %v2819 = vpop.f32.mrb[0].mxu0
        %v2820 = vpop.f32.mrb[0].mxu0
        %v2821 = vadd.f32 0.0, %v2820
        %v2822 = vpop.f32.mrb[0].mxu0
        %2823 = vmatprep.mubr.bf16.mxu0 0
        %2824 = vmatmul.mubr.bf16.gmra.mrb[0].mxu0 %v2690
        %v2825 = vpop.f32.mrb[0].mxu0
        %v2826 = vadd.f32 0.0, %v2825
        %v2827 = vpop.f32.mrb[0].mxu0
        %v2828 = vpop.f32.mrb[0].mxu0
        %v2829 = vadd.f32 0.0, %v2828
        %v2830 = vpop.f32.mrb[0].mxu0
        %2831 = vmatprep.mubr.bf16.mxu0 0
        %2832 = vmatmul.mubr.bf16.gmra.mrb[0].mxu0 %v2691
        %v2833 = vpop.f32.mrb[0].mxu0
        %v2834 = vadd.f32 0.0, %v2833
        %v2835 = vpop.f32.mrb[0].mxu0
        %v2836 = vpop.f32.mrb[0].mxu0
        %v2837 = vadd.f32 0.0, %v2836
        %v2838 = vpop.f32.mrb[0].mxu0
        %2839 = vmatprep.mubr.bf16.mxu0 0
        %2840 = vmatmul.mubr.bf16.gmra.mrb[0].mxu0 %v2692
        %v2841 = vpop.f32.mrb[0].mxu0
        %v2842 = vadd.f32 0.0, %v2841
        %v2843 = vpop.f32.mrb[0].mxu0
        %v2844 = vpop.f32.mrb[0].mxu0
        %v2845 = vadd.f32 0.0, %v2844
        %v2846 = vpop.f32.mrb[0].mxu0
        %2847 = vmatprep.mubr.bf16.mxu0 0
        %2848 = vmatmul.mubr.bf16.gmra.mrb[0].mxu0 %v2693
        %v2849 = vpop.f32.mrb[0].mxu0
        %v2850 = vadd.f32 0.0, %v2849
        %v2851 = vpop.f32.mrb[0].mxu0
        %v2852 = vpop.f32.mrb[0].mxu0
        %v2853 = vadd.f32 0.0, %v2852
        %v2854 = vpop.f32.mrb[0].mxu0
        %2855 = vdwg.mxu0
        %v2856 = vadd.f32 %v2624, %v2794
        %v2857 = vadd.f32 %v2627, %v2797
        %v2858 = vadd.f32 %v2632, %v2802
        %v2859 = vadd.f32 %v2635, %v2805
        %v2860 = vadd.f32 %v2640, %v2810
        %v2861 = vadd.f32 %v2643, %v2813
        %v2862 = vadd.f32 %v2648, %v2818
        %v2863 = vadd.f32 %v2651, %v2821
        %v2864 = vadd.f32 %v2656, %v2826
        %v2865 = vadd.f32 %v2659, %v2829
        %v2866 = vadd.f32 %v2664, %v2834
        %v2867 = vadd.f32 %v2667, %v2837
        %v2868 = vadd.f32 %v2672, %v2842
        %v2869 = vadd.f32 %v2675, %v2845
        %v2870 = vadd.f32 %v2680, %v2850
        %v2871 = vadd.f32 %v2683, %v2853
        %v2872 = vpack.c.bf16 %v2493, %v2492
        %v2873 = vpack.c.bf16 %v2495, %v2494
        %v2874 = vpack.c.bf16 %v2497, %v2496
        %v2875 = vpack.c.bf16 %v2499, %v2498
        %v2876 = vpack.c.bf16 %v2501, %v2500
        %v2877 = vpack.c.bf16 %v2503, %v2502
        %v2878 = vpack.c.bf16 %v2505, %v2504
        %v2879 = vpack.c.bf16 %v2507, %v2506
        %s2880 = scalar_lea.vmem %s1, 704
        %v2881 = vld [vmem:[%s2880] sm:$0xf]
        %v2882 = vld [vmem:[%s2880 + $0x4] sm:$0xf]
        %v2883 = vld [vmem:[%s2880 + $0x8] sm:$0xf]
        %v2884 = vld [vmem:[%s2880 + $0xc] sm:$0xf]
        %v2885 = vld [vmem:[%s2880 + $0x10] sm:$0xf]
        %v2886 = vld [vmem:[%s2880 + $0x14] sm:$0xf]
        %v2887 = vld [vmem:[%s2880 + $0x18] sm:$0xf]
        %v2888 = vld [vmem:[%s2880 + $0x1c] sm:$0xf]
        %v2889 = vld [vmem:[%s2880 + $0x20] sm:$0xf]
        %v2890 = vld [vmem:[%s2880 + $0x24] sm:$0xf]
        %v2891 = vld [vmem:[%s2880 + $0x28] sm:$0xf]
        %v2892 = vld [vmem:[%s2880 + $0x2c] sm:$0xf]
        %v2893 = vld [vmem:[%s2880 + $0x30] sm:$0xf]
        %v2894 = vld [vmem:[%s2880 + $0x34] sm:$0xf]
        %v2895 = vld [vmem:[%s2880 + $0x38] sm:$0xf]
        %v2896 = vld [vmem:[%s2880 + $0x3c] sm:$0xf]
        %v2913 = vunpack.c.l.b16 %v2881
        %v2914 = vunpack.c.l.b16 %v2882
        %v2915 = vunpack.c.l.b16 %v2883
        %v2916 = vunpack.c.l.b16 %v2884
        %v2917 = vunpack.c.l.b16 %v2885
        %v2918 = vunpack.c.l.b16 %v2886
        %v2919 = vunpack.c.l.b16 %v2887
        %v2920 = vunpack.c.l.b16 %v2888
        %v2921 = vunpack.c.l.b16 %v2889
        %v2922 = vunpack.c.l.b16 %v2890
        %v2923 = vunpack.c.l.b16 %v2891
        %v2924 = vunpack.c.l.b16 %v2892
        %v2925 = vunpack.c.l.b16 %v2893
        %v2926 = vunpack.c.l.b16 %v2894
        %v2927 = vunpack.c.l.b16 %v2895
        %v2928 = vunpack.c.l.b16 %v2896
        %v2929 = vpack.c.b16 %v2914, %v2913
        %v2930 = vpack.c.b16 %v2916, %v2915
        %v2931 = vpack.c.b16 %v2918, %v2917
        %v2932 = vpack.c.b16 %v2920, %v2919
        %v2933 = vpack.c.b16 %v2922, %v2921
        %v2934 = vpack.c.b16 %v2924, %v2923
        %v2935 = vpack.c.b16 %v2926, %v2925
        %v2936 = vpack.c.b16 %v2928, %v2927
        %2945 = vmatprep.subr.bf16.mxu0 0
        %2946 = vmatpush1.bf16.msra.mxu0 %v2929
        %2947 = vmatprep.subr.bf16.mxu0 0
        %2948 = vmatpush1.bf16.msra.mxu0 %v2930
        %2949 = vmatprep.subr.bf16.mxu0 0
        %2950 = vmatpush1.bf16.msra.mxu0 %v2931
        %2951 = vmatprep.subr.bf16.mxu0 0
        %2952 = vmatpush1.bf16.msra.mxu0 %v2932
        %2953 = vmatprep.subr.bf16.mxu0 0
        %2954 = vmatpush1.bf16.msra.mxu0 %v2933
        %2955 = vmatprep.subr.bf16.mxu0 0
        %2956 = vmatpush1.bf16.msra.mxu0 %v2934
        %2957 = vmatprep.subr.bf16.mxu0 0
        %2958 = vmatpush1.bf16.msra.mxu0 %v2935
        %2959 = vmatprep.subr.bf16.mxu0 0
        %2960 = vmatpush1.bf16.msra.mxu0 %v2936
        %2961 = vmatprep.subr.bf16.mxu0 0
        %2962 = vmatpush1.bf16.msra.mxu0 0
        %2963 = vmatprep.subr.bf16.mxu0 0
        %2964 = vmatpush1.bf16.msra.mxu0 0
        %2965 = vmatprep.subr.bf16.mxu0 0
        %2966 = vmatpush1.bf16.msra.mxu0 0
        %2967 = vmatprep.subr.bf16.mxu0 0
        %2968 = vmatpush1.bf16.msra.mxu0 0
        %2969 = vmatprep.subr.bf16.mxu0 0
        %2970 = vmatpush1.bf16.msra.mxu0 0
        %2971 = vmatprep.subr.bf16.mxu0 0
        %2972 = vmatpush1.bf16.msra.mxu0 0
        %2973 = vmatprep.subr.bf16.mxu0 0
        %2974 = vmatpush1.bf16.msra.mxu0 0
        %2975 = vmatprep.subr.bf16.mxu0 0
        %2976 = vmatpush1.bf16.msra.mxu0 0
        %2977 = vmatprep.mubr.bf16.mxu0 0
        %2978 = vmatmul.mubr.bf16.gmra.mrb[0].mxu0 %v2872
        %v2979 = vpop.f32.mrb[0].mxu0
        %v2980 = vadd.f32 0.0, %v2979
        %v2981 = vpop.f32.mrb[0].mxu0
        %v2982 = vpop.f32.mrb[0].mxu0
        %v2983 = vadd.f32 0.0, %v2982
        %v2984 = vpop.f32.mrb[0].mxu0
        %2985 = vmatprep.mubr.bf16.mxu0 0
        %2986 = vmatmul.mubr.bf16.gmra.mrb[0].mxu0 %v2873
        %v2987 = vpop.f32.mrb[0].mxu0
        %v2988 = vadd.f32 0.0, %v2987
        %v2989 = vpop.f32.mrb[0].mxu0
        %v2990 = vpop.f32.mrb[0].mxu0
        %v2991 = vadd.f32 0.0, %v2990
        %v2992 = vpop.f32.mrb[0].mxu0
        %2993 = vmatprep.mubr.bf16.mxu0 0
        %2994 = vmatmul.mubr.bf16.gmra.mrb[0].mxu0 %v2874
        %v2995 = vpop.f32.mrb[0].mxu0
        %v2996 = vadd.f32 0.0, %v2995
        %v2997 = vpop.f32.mrb[0].mxu0
        %v2998 = vpop.f32.mrb[0].mxu0
        %v2999 = vadd.f32 0.0, %v2998
        %v3000 = vpop.f32.mrb[0].mxu0
        %3001 = vmatprep.mubr.bf16.mxu0 0
        %3002 = vmatmul.mubr.bf16.gmra.mrb[0].mxu0 %v2875
        %v3003 = vpop.f32.mrb[0].mxu0
        %v3004 = vadd.f32 0.0, %v3003
        %v3005 = vpop.f32.mrb[0].mxu0
        %v3006 = vpop.f32.mrb[0].mxu0
        %v3007 = vadd.f32 0.0, %v3006
        %v3008 = vpop.f32.mrb[0].mxu0
        %3009 = vmatprep.mubr.bf16.mxu0 0
        %3010 = vmatmul.mubr.bf16.gmra.mrb[0].mxu0 %v2876
        %v3011 = vpop.f32.mrb[0].mxu0
        %v3012 = vadd.f32 0.0, %v3011
        %v3013 = vpop.f32.mrb[0].mxu0
        %v3014 = vpop.f32.mrb[0].mxu0
        %v3015 = vadd.f32 0.0, %v3014
        %v3016 = vpop.f32.mrb[0].mxu0
        %3017 = vmatprep.mubr.bf16.mxu0 0
        %3018 = vmatmul.mubr.bf16.gmra.mrb[0].mxu0 %v2877
        %v3019 = vpop.f32.mrb[0].mxu0
        %v3020 = vadd.f32 0.0, %v3019
        %v3021 = vpop.f32.mrb[0].mxu0
        %v3022 = vpop.f32.mrb[0].mxu0
        %v3023 = vadd.f32 0.0, %v3022
        %v3024 = vpop.f32.mrb[0].mxu0
        %3025 = vmatprep.mubr.bf16.mxu0 0
        %3026 = vmatmul.mubr.bf16.gmra.mrb[0].mxu0 %v2878
        %v3027 = vpop.f32.mrb[0].mxu0
        %v3028 = vadd.f32 0.0, %v3027
        %v3029 = vpop.f32.mrb[0].mxu0
        %v3030 = vpop.f32.mrb[0].mxu0
        %v3031 = vadd.f32 0.0, %v3030
        %v3032 = vpop.f32.mrb[0].mxu0
        %3033 = vmatprep.mubr.bf16.mxu0 0
        %3034 = vmatmul.mubr.bf16.gmra.mrb[0].mxu0 %v2879
        %v3035 = vpop.f32.mrb[0].mxu0
        %v3036 = vadd.f32 0.0, %v3035
        %v3037 = vpop.f32.mrb[0].mxu0
        %v3038 = vpop.f32.mrb[0].mxu0
        %v3039 = vadd.f32 0.0, %v3038
        %v3040 = vpop.f32.mrb[0].mxu0
        %3041 = vdwg.mxu0
        %v3042 = vadd.f32 %v2856, %v2980
        %v3043 = vadd.f32 %v2857, %v2983
        %v3044 = vadd.f32 %v2858, %v2988
        %v3045 = vadd.f32 %v2859, %v2991
        %v3046 = vadd.f32 %v2860, %v2996
        %v3047 = vadd.f32 %v2861, %v2999
        %v3048 = vadd.f32 %v2862, %v3004
        %v3049 = vadd.f32 %v2863, %v3007
        %v3050 = vadd.f32 %v2864, %v3012
        %v3051 = vadd.f32 %v2865, %v3015
        %v3052 = vadd.f32 %v2866, %v3020
        %v3053 = vadd.f32 %v2867, %v3023
        %v3054 = vadd.f32 %v2868, %v3028
        %v3055 = vadd.f32 %v2869, %v3031
        %v3056 = vadd.f32 %v2870, %v3036
        %v3057 = vadd.f32 %v2871, %v3039
        %v3058 = vadd.f32 %v3042, %v1734
        %v3059 = vadd.f32 %v3043, %v1735
        %v3060 = vadd.f32 %v3044, %v1736
        %v3061 = vadd.f32 %v3045, %v1737
        %v3062 = vadd.f32 %v3046, %v1738
        %v3063 = vadd.f32 %v3047, %v1739
        %v3064 = vadd.f32 %v3048, %v1740
        %v3065 = vadd.f32 %v3049, %v1741
        %v3066 = vadd.f32 %v3050, %v1742
        %v3067 = vadd.f32 %v3051, %v1743
        %v3068 = vadd.f32 %v3052, %v1744
        %v3069 = vadd.f32 %v3053, %v1745
        %v3070 = vadd.f32 %v3054, %v1746
        %v3071 = vadd.f32 %v3055, %v1747
        %v3072 = vadd.f32 %v3056, %v1748
        %v3073 = vadd.f32 %v3057, %v1749
        %s3074 = scalar_lea.vmem %s1, 832
        %v3075 = vld [vmem:[%s3074] sm:$0xf]
        %v3076 = vld [vmem:[%s3074 + $0x4] sm:$0xf]
        %v3077 = vld [vmem:[%s3074 + $0x8] sm:$0xf]
        %v3078 = vld [vmem:[%s3074 + $0xc] sm:$0xf]
        %v3079 = vld [vmem:[%s3074 + $0x10] sm:$0xf]
        %v3080 = vld [vmem:[%s3074 + $0x14] sm:$0xf]
        %v3081 = vld [vmem:[%s3074 + $0x18] sm:$0xf]
        %v3082 = vld [vmem:[%s3074 + $0x1c] sm:$0xf]
        %v3083 = vld [vmem:[%s3074 + $0x20] sm:$0xf]
        %v3084 = vld [vmem:[%s3074 + $0x24] sm:$0xf]
        %v3085 = vld [vmem:[%s3074 + $0x28] sm:$0xf]
        %v3086 = vld [vmem:[%s3074 + $0x2c] sm:$0xf]
        %v3087 = vld [vmem:[%s3074 + $0x30] sm:$0xf]
        %v3088 = vld [vmem:[%s3074 + $0x34] sm:$0xf]
        %v3089 = vld [vmem:[%s3074 + $0x38] sm:$0xf]
        %v3090 = vld [vmem:[%s3074 + $0x3c] sm:$0xf]
        %s3091 = scalar_lea.vmem %s2, 4
        %v3092 = vld [vmem:[%s3091] sm:$0x1]
        %v3094 = vlaneseq
        %v3095 = vshrl.u32 %v3094, 7
        %v3096 = vsub.s32 0, %v3095
        %v3097 = vrot.slane %v3092, %v3096
        %v3115 = vunpack.c.l.b16 %v3075
        %v3116 = vunpack.c.l.b16 %v3076
        %v3117 = vunpack.c.l.b16 %v3077
        %v3118 = vunpack.c.l.b16 %v3078
        %v3119 = vunpack.c.l.b16 %v3079
        %v3120 = vunpack.c.l.b16 %v3080
        %v3121 = vunpack.c.l.b16 %v3081
        %v3122 = vunpack.c.l.b16 %v3082
        %v3123 = vunpack.c.l.b16 %v3083
        %v3124 = vunpack.c.l.b16 %v3084
        %v3125 = vunpack.c.l.b16 %v3085
        %v3126 = vunpack.c.l.b16 %v3086
        %v3127 = vunpack.c.l.b16 %v3087
        %v3128 = vunpack.c.l.b16 %v3088
        %v3129 = vunpack.c.l.b16 %v3089
        %v3130 = vunpack.c.l.b16 %v3090
        %v3131 = vpack.c.b16 %v3116, %v3115
        %v3132 = vpack.c.b16 %v3118, %v3117
        %v3133 = vpack.c.b16 %v3120, %v3119
        %v3134 = vpack.c.b16 %v3122, %v3121
        %v3135 = vpack.c.b16 %v3124, %v3123
        %v3136 = vpack.c.b16 %v3126, %v3125
        %v3137 = vpack.c.b16 %v3128, %v3127
        %v3138 = vpack.c.b16 %v3130, %v3129
        %3147 = vmatprep.subr.bf16.mxu0 0
        %3148 = vmatpush1.bf16.msra.mxu0 %v3131
        %3149 = vmatprep.subr.bf16.mxu0 0
        %3150 = vmatpush1.bf16.msra.mxu0 %v3132
        %3151 = vmatprep.subr.bf16.mxu0 0
        %3152 = vmatpush1.bf16.msra.mxu0 %v3133
        %3153 = vmatprep.subr.bf16.mxu0 0
        %3154 = vmatpush1.bf16.msra.mxu0 %v3134
        %3155 = vmatprep.subr.bf16.mxu0 0
        %3156 = vmatpush1.bf16.msra.mxu0 %v3135
        %3157 = vmatprep.subr.bf16.mxu0 0
        %3158 = vmatpush1.bf16.msra.mxu0 %v3136
        %3159 = vmatprep.subr.bf16.mxu0 0
        %3160 = vmatpush1.bf16.msra.mxu0 %v3137
        %3161 = vmatprep.subr.bf16.mxu0 0
        %3162 = vmatpush1.bf16.msra.mxu0 %v3138
        %3163 = vmatprep.subr.bf16.mxu0 0
        %3164 = vmatpush1.bf16.msra.mxu0 0
        %3165 = vmatprep.subr.bf16.mxu0 0
        %3166 = vmatpush1.bf16.msra.mxu0 0
        %3167 = vmatprep.subr.bf16.mxu0 0
        %3168 = vmatpush1.bf16.msra.mxu0 0
        %3169 = vmatprep.subr.bf16.mxu0 0
        %3170 = vmatpush1.bf16.msra.mxu0 0
        %3171 = vmatprep.subr.bf16.mxu0 0
        %3172 = vmatpush1.bf16.msra.mxu0 0
        %3173 = vmatprep.subr.bf16.mxu0 0
        %3174 = vmatpush1.bf16.msra.mxu0 0
        %3175 = vmatprep.subr.bf16.mxu0 0
        %3176 = vmatpush1.bf16.msra.mxu0 0
        %3177 = vmatprep.subr.bf16.mxu0 0
        %3178 = vmatpush1.bf16.msra.mxu0 0
        %3179 = vmatprep.mubr.bf16.mxu0 0
        %3180 = vmatmul.mubr.bf16.gmra.mrb[0].mxu0 %v524
        %v3181 = vpop.f32.mrb[0].mxu0
        %v3182 = vadd.f32 %v3097, %v3181
        %v3183 = vpop.f32.mrb[0].mxu0
        %v3184 = vpop.f32.mrb[0].mxu0
        %v3185 = vadd.f32 %v3097, %v3184
        %v3186 = vpop.f32.mrb[0].mxu0
        %3187 = vmatprep.mubr.bf16.mxu0 0
        %3188 = vmatmul.mubr.bf16.gmra.mrb[0].mxu0 %v525
        %v3189 = vpop.f32.mrb[0].mxu0
        %v3190 = vadd.f32 %v3097, %v3189
        %v3191 = vpop.f32.mrb[0].mxu0
        %v3192 = vpop.f32.mrb[0].mxu0
        %v3193 = vadd.f32 %v3097, %v3192
        %v3194 = vpop.f32.mrb[0].mxu0
        %3195 = vmatprep.mubr.bf16.mxu0 0
        %3196 = vmatmul.mubr.bf16.gmra.mrb[0].mxu0 %v526
        %v3197 = vpop.f32.mrb[0].mxu0
        %v3198 = vadd.f32 %v3097, %v3197
        %v3199 = vpop.f32.mrb[0].mxu0
        %v3200 = vpop.f32.mrb[0].mxu0
        %v3201 = vadd.f32 %v3097, %v3200
        %v3202 = vpop.f32.mrb[0].mxu0
        %3203 = vmatprep.mubr.bf16.mxu0 0
        %3204 = vmatmul.mubr.bf16.gmra.mrb[0].mxu0 %v527
        %v3205 = vpop.f32.mrb[0].mxu0
        %v3206 = vadd.f32 %v3097, %v3205
        %v3207 = vpop.f32.mrb[0].mxu0
        %v3208 = vpop.f32.mrb[0].mxu0
        %v3209 = vadd.f32 %v3097, %v3208
        %v3210 = vpop.f32.mrb[0].mxu0
        %3211 = vmatprep.mubr.bf16.mxu0 0
        %3212 = vmatmul.mubr.bf16.gmra.mrb[0].mxu0 %v528
        %v3213 = vpop.f32.mrb[0].mxu0
        %v3214 = vadd.f32 %v3097, %v3213
        %v3215 = vpop.f32.mrb[0].mxu0
        %v3216 = vpop.f32.mrb[0].mxu0
        %v3217 = vadd.f32 %v3097, %v3216
        %v3218 = vpop.f32.mrb[0].mxu0
        %3219 = vmatprep.mubr.bf16.mxu0 0
        %3220 = vmatmul.mubr.bf16.gmra.mrb[0].mxu0 %v529
        %v3221 = vpop.f32.mrb[0].mxu0
        %v3222 = vadd.f32 %v3097, %v3221
        %v3223 = vpop.f32.mrb[0].mxu0
        %v3224 = vpop.f32.mrb[0].mxu0
        %v3225 = vadd.f32 %v3097, %v3224
        %v3226 = vpop.f32.mrb[0].mxu0
        %3227 = vmatprep.mubr.bf16.mxu0 0
        %3228 = vmatmul.mubr.bf16.gmra.mrb[0].mxu0 %v530
        %v3229 = vpop.f32.mrb[0].mxu0
        %v3230 = vadd.f32 %v3097, %v3229
        %v3231 = vpop.f32.mrb[0].mxu0
        %v3232 = vpop.f32.mrb[0].mxu0
        %v3233 = vadd.f32 %v3097, %v3232
        %v3234 = vpop.f32.mrb[0].mxu0
        %3235 = vmatprep.mubr.bf16.mxu0 0
        %3236 = vmatmul.mubr.bf16.gmra.mrb[0].mxu0 %v531
        %v3237 = vpop.f32.mrb[0].mxu0
        %v3238 = vadd.f32 %v3097, %v3237
        %v3239 = vpop.f32.mrb[0].mxu0
        %v3240 = vpop.f32.mrb[0].mxu0
        %v3241 = vadd.f32 %v3097, %v3240
        %v3242 = vpop.f32.mrb[0].mxu0
        %3243 = vdwg.mxu0
        %s3244 = scalar_lea.vmem %s1, 768
        %v3245 = vld [vmem:[%s3244] sm:$0xf]
        %v3246 = vld [vmem:[%s3244 + $0x4] sm:$0xf]
        %v3247 = vld [vmem:[%s3244 + $0x8] sm:$0xf]
        %v3248 = vld [vmem:[%s3244 + $0xc] sm:$0xf]
        %v3249 = vld [vmem:[%s3244 + $0x10] sm:$0xf]
        %v3250 = vld [vmem:[%s3244 + $0x14] sm:$0xf]
        %v3251 = vld [vmem:[%s3244 + $0x18] sm:$0xf]
        %v3252 = vld [vmem:[%s3244 + $0x1c] sm:$0xf]
        %v3253 = vld [vmem:[%s3244 + $0x20] sm:$0xf]
        %v3254 = vld [vmem:[%s3244 + $0x24] sm:$0xf]
        %v3255 = vld [vmem:[%s3244 + $0x28] sm:$0xf]
        %v3256 = vld [vmem:[%s3244 + $0x2c] sm:$0xf]
        %v3257 = vld [vmem:[%s3244 + $0x30] sm:$0xf]
        %v3258 = vld [vmem:[%s3244 + $0x34] sm:$0xf]
        %v3259 = vld [vmem:[%s3244 + $0x38] sm:$0xf]
        %v3260 = vld [vmem:[%s3244 + $0x3c] sm:$0xf]
        %v3277 = vunpack.c.l.b16 %v3245
        %v3278 = vunpack.c.l.b16 %v3246
        %v3279 = vunpack.c.l.b16 %v3247
        %v3280 = vunpack.c.l.b16 %v3248
        %v3281 = vunpack.c.l.b16 %v3249
        %v3282 = vunpack.c.l.b16 %v3250
        %v3283 = vunpack.c.l.b16 %v3251
        %v3284 = vunpack.c.l.b16 %v3252
        %v3285 = vunpack.c.l.b16 %v3253
        %v3286 = vunpack.c.l.b16 %v3254
        %v3287 = vunpack.c.l.b16 %v3255
        %v3288 = vunpack.c.l.b16 %v3256
        %v3289 = vunpack.c.l.b16 %v3257
        %v3290 = vunpack.c.l.b16 %v3258
        %v3291 = vunpack.c.l.b16 %v3259
        %v3292 = vunpack.c.l.b16 %v3260
        %v3293 = vpack.c.b16 %v3278, %v3277
        %v3294 = vpack.c.b16 %v3280, %v3279
        %v3295 = vpack.c.b16 %v3282, %v3281
        %v3296 = vpack.c.b16 %v3284, %v3283
        %v3297 = vpack.c.b16 %v3286, %v3285
        %v3298 = vpack.c.b16 %v3288, %v3287
        %v3299 = vpack.c.b16 %v3290, %v3289
        %v3300 = vpack.c.b16 %v3292, %v3291
        %3309 = vmatprep.subr.bf16.mxu0 0
        %3310 = vmatpush1.bf16.msra.mxu0 %v3293
        %3311 = vmatprep.subr.bf16.mxu0 0
        %3312 = vmatpush1.bf16.msra.mxu0 %v3294
        %3313 = vmatprep.subr.bf16.mxu0 0
        %3314 = vmatpush1.bf16.msra.mxu0 %v3295
        %3315 = vmatprep.subr.bf16.mxu0 0
        %3316 = vmatpush1.bf16.msra.mxu0 %v3296
        %3317 = vmatprep.subr.bf16.mxu0 0
        %3318 = vmatpush1.bf16.msra.mxu0 %v3297
        %3319 = vmatprep.subr.bf16.mxu0 0
        %3320 = vmatpush1.bf16.msra.mxu0 %v3298
        %3321 = vmatprep.subr.bf16.mxu0 0
        %3322 = vmatpush1.bf16.msra.mxu0 %v3299
        %3323 = vmatprep.subr.bf16.mxu0 0
        %3324 = vmatpush1.bf16.msra.mxu0 %v3300
        %3325 = vmatprep.subr.bf16.mxu0 0
        %3326 = vmatpush1.bf16.msra.mxu0 0
        %3327 = vmatprep.subr.bf16.mxu0 0
        %3328 = vmatpush1.bf16.msra.mxu0 0
        %3329 = vmatprep.subr.bf16.mxu0 0
        %3330 = vmatpush1.bf16.msra.mxu0 0
        %3331 = vmatprep.subr.bf16.mxu0 0
        %3332 = vmatpush1.bf16.msra.mxu0 0
        %3333 = vmatprep.subr.bf16.mxu0 0
        %3334 = vmatpush1.bf16.msra.mxu0 0
        %3335 = vmatprep.subr.bf16.mxu0 0
        %3336 = vmatpush1.bf16.msra.mxu0 0
        %3337 = vmatprep.subr.bf16.mxu0 0
        %3338 = vmatpush1.bf16.msra.mxu0 0
        %3339 = vmatprep.subr.bf16.mxu0 0
        %3340 = vmatpush1.bf16.msra.mxu0 0
        %3341 = vmatprep.mubr.bf16.mxu0 0
        %3342 = vmatmul.mubr.bf16.gmra.mrb[0].mxu0 %v701
        %v3343 = vpop.f32.mrb[0].mxu0
        %v3344 = vadd.f32 0.0, %v3343
        %v3345 = vpop.f32.mrb[0].mxu0
        %v3346 = vpop.f32.mrb[0].mxu0
        %v3347 = vadd.f32 0.0, %v3346
        %v3348 = vpop.f32.mrb[0].mxu0
        %3349 = vmatprep.mubr.bf16.mxu0 0
        %3350 = vmatmul.mubr.bf16.gmra.mrb[0].mxu0 %v702
        %v3351 = vpop.f32.mrb[0].mxu0
        %v3352 = vadd.f32 0.0, %v3351
        %v3353 = vpop.f32.mrb[0].mxu0
        %v3354 = vpop.f32.mrb[0].mxu0
        %v3355 = vadd.f32 0.0, %v3354
        %v3356 = vpop.f32.mrb[0].mxu0
        %3357 = vmatprep.mubr.bf16.mxu0 0
        %3358 = vmatmul.mubr.bf16.gmra.mrb[0].mxu0 %v703
        %v3359 = vpop.f32.mrb[0].mxu0
        %v3360 = vadd.f32 0.0, %v3359
        %v3361 = vpop.f32.mrb[0].mxu0
        %v3362 = vpop.f32.mrb[0].mxu0
        %v3363 = vadd.f32 0.0, %v3362
        %v3364 = vpop.f32.mrb[0].mxu0
        %3365 = vmatprep.mubr.bf16.mxu0 0
        %3366 = vmatmul.mubr.bf16.gmra.mrb[0].mxu0 %v704
        %v3367 = vpop.f32.mrb[0].mxu0
        %v3368 = vadd.f32 0.0, %v3367
        %v3369 = vpop.f32.mrb[0].mxu0
        %v3370 = vpop.f32.mrb[0].mxu0
        %v3371 = vadd.f32 0.0, %v3370
        %v3372 = vpop.f32.mrb[0].mxu0
        %3373 = vmatprep.mubr.bf16.mxu0 0
        %3374 = vmatmul.mubr.bf16.gmra.mrb[0].mxu0 %v705
        %v3375 = vpop.f32.mrb[0].mxu0
        %v3376 = vadd.f32 0.0, %v3375
        %v3377 = vpop.f32.mrb[0].mxu0
        %v3378 = vpop.f32.mrb[0].mxu0
        %v3379 = vadd.f32 0.0, %v3378
        %v3380 = vpop.f32.mrb[0].mxu0
        %3381 = vmatprep.mubr.bf16.mxu0 0
        %3382 = vmatmul.mubr.bf16.gmra.mrb[0].mxu0 %v706
        %v3383 = vpop.f32.mrb[0].mxu0
        %v3384 = vadd.f32 0.0, %v3383
        %v3385 = vpop.f32.mrb[0].mxu0
        %v3386 = vpop.f32.mrb[0].mxu0
        %v3387 = vadd.f32 0.0, %v3386
        %v3388 = vpop.f32.mrb[0].mxu0
        %3389 = vmatprep.mubr.bf16.mxu0 0
        %3390 = vmatmul.mubr.bf16.gmra.mrb[0].mxu0 %v707
        %v3391 = vpop.f32.mrb[0].mxu0
        %v3392 = vadd.f32 0.0, %v3391
        %v3393 = vpop.f32.mrb[0].mxu0
        %v3394 = vpop.f32.mrb[0].mxu0
        %v3395 = vadd.f32 0.0, %v3394
        %v3396 = vpop.f32.mrb[0].mxu0
        %3397 = vmatprep.mubr.bf16.mxu0 0
        %3398 = vmatmul.mubr.bf16.gmra.mrb[0].mxu0 %v708
        %v3399 = vpop.f32.mrb[0].mxu0
        %v3400 = vadd.f32 0.0, %v3399
        %v3401 = vpop.f32.mrb[0].mxu0
        %v3402 = vpop.f32.mrb[0].mxu0
        %v3403 = vadd.f32 0.0, %v3402
        %v3404 = vpop.f32.mrb[0].mxu0
        %3405 = vdwg.mxu0
        %v3406 = vadd.f32 %v3182, %v3344
        %v3407 = vadd.f32 %v3185, %v3347
        %v3408 = vadd.f32 %v3190, %v3352
        %v3409 = vadd.f32 %v3193, %v3355
        %v3410 = vadd.f32 %v3198, %v3360
        %v3411 = vadd.f32 %v3201, %v3363
        %v3412 = vadd.f32 %v3206, %v3368
        %v3413 = vadd.f32 %v3209, %v3371
        %v3414 = vadd.f32 %v3214, %v3376
        %v3415 = vadd.f32 %v3217, %v3379
        %v3416 = vadd.f32 %v3222, %v3384
        %v3417 = vadd.f32 %v3225, %v3387
        %v3418 = vadd.f32 %v3230, %v3392
        %v3419 = vadd.f32 %v3233, %v3395
        %v3420 = vadd.f32 %v3238, %v3400
        %v3421 = vadd.f32 %v3241, %v3403
        %s3422 = scalar_lea.vmem %s1, 896
        %v3423 = vld [vmem:[%s3422] sm:$0xf]
        %v3424 = vld [vmem:[%s3422 + $0x4] sm:$0xf]
        %v3425 = vld [vmem:[%s3422 + $0x8] sm:$0xf]
        %v3426 = vld [vmem:[%s3422 + $0xc] sm:$0xf]
        %v3427 = vld [vmem:[%s3422 + $0x10] sm:$0xf]
        %v3428 = vld [vmem:[%s3422 + $0x14] sm:$0xf]
        %v3429 = vld [vmem:[%s3422 + $0x18] sm:$0xf]
        %v3430 = vld [vmem:[%s3422 + $0x1c] sm:$0xf]
        %v3431 = vld [vmem:[%s3422 + $0x20] sm:$0xf]
        %v3432 = vld [vmem:[%s3422 + $0x24] sm:$0xf]
        %v3433 = vld [vmem:[%s3422 + $0x28] sm:$0xf]
        %v3434 = vld [vmem:[%s3422 + $0x2c] sm:$0xf]
        %v3435 = vld [vmem:[%s3422 + $0x30] sm:$0xf]
        %v3436 = vld [vmem:[%s3422 + $0x34] sm:$0xf]
        %v3437 = vld [vmem:[%s3422 + $0x38] sm:$0xf]
        %v3438 = vld [vmem:[%s3422 + $0x3c] sm:$0xf]
        %v3455 = vunpack.c.l.b16 %v3423
        %v3456 = vunpack.c.l.b16 %v3424
        %v3457 = vunpack.c.l.b16 %v3425
        %v3458 = vunpack.c.l.b16 %v3426
        %v3459 = vunpack.c.l.b16 %v3427
        %v3460 = vunpack.c.l.b16 %v3428
        %v3461 = vunpack.c.l.b16 %v3429
        %v3462 = vunpack.c.l.b16 %v3430
        %v3463 = vunpack.c.l.b16 %v3431
        %v3464 = vunpack.c.l.b16 %v3432
        %v3465 = vunpack.c.l.b16 %v3433
        %v3466 = vunpack.c.l.b16 %v3434
        %v3467 = vunpack.c.l.b16 %v3435
        %v3468 = vunpack.c.l.b16 %v3436
        %v3469 = vunpack.c.l.b16 %v3437
        %v3470 = vunpack.c.l.b16 %v3438
        %v3471 = vpack.c.b16 %v3456, %v3455
        %v3472 = vpack.c.b16 %v3458, %v3457
        %v3473 = vpack.c.b16 %v3460, %v3459
        %v3474 = vpack.c.b16 %v3462, %v3461
        %v3475 = vpack.c.b16 %v3464, %v3463
        %v3476 = vpack.c.b16 %v3466, %v3465
        %v3477 = vpack.c.b16 %v3468, %v3467
        %v3478 = vpack.c.b16 %v3470, %v3469
        %3487 = vmatprep.subr.bf16.mxu0 0
        %3488 = vmatpush1.bf16.msra.mxu0 %v3471
        %3489 = vmatprep.subr.bf16.mxu0 0
        %3490 = vmatpush1.bf16.msra.mxu0 %v3472
        %3491 = vmatprep.subr.bf16.mxu0 0
        %3492 = vmatpush1.bf16.msra.mxu0 %v3473
        %3493 = vmatprep.subr.bf16.mxu0 0
        %3494 = vmatpush1.bf16.msra.mxu0 %v3474
        %3495 = vmatprep.subr.bf16.mxu0 0
        %3496 = vmatpush1.bf16.msra.mxu0 %v3475
        %3497 = vmatprep.subr.bf16.mxu0 0
        %3498 = vmatpush1.bf16.msra.mxu0 %v3476
        %3499 = vmatprep.subr.bf16.mxu0 0
        %3500 = vmatpush1.bf16.msra.mxu0 %v3477
        %3501 = vmatprep.subr.bf16.mxu0 0
        %3502 = vmatpush1.bf16.msra.mxu0 %v3478
        %3503 = vmatprep.subr.bf16.mxu0 0
        %3504 = vmatpush1.bf16.msra.mxu0 0
        %3505 = vmatprep.subr.bf16.mxu0 0
        %3506 = vmatpush1.bf16.msra.mxu0 0
        %3507 = vmatprep.subr.bf16.mxu0 0
        %3508 = vmatpush1.bf16.msra.mxu0 0
        %3509 = vmatprep.subr.bf16.mxu0 0
        %3510 = vmatpush1.bf16.msra.mxu0 0
        %3511 = vmatprep.subr.bf16.mxu0 0
        %3512 = vmatpush1.bf16.msra.mxu0 0
        %3513 = vmatprep.subr.bf16.mxu0 0
        %3514 = vmatpush1.bf16.msra.mxu0 0
        %3515 = vmatprep.subr.bf16.mxu0 0
        %3516 = vmatpush1.bf16.msra.mxu0 0
        %3517 = vmatprep.subr.bf16.mxu0 0
        %3518 = vmatpush1.bf16.msra.mxu0 0
        %3519 = vmatprep.mubr.bf16.mxu0 0
        %3520 = vmatmul.mubr.bf16.gmra.mrb[0].mxu0 %v886
        %v3521 = vpop.f32.mrb[0].mxu0
        %v3522 = vadd.f32 0.0, %v3521
        %v3523 = vpop.f32.mrb[0].mxu0
        %v3524 = vpop.f32.mrb[0].mxu0
        %v3525 = vadd.f32 0.0, %v3524
        %v3526 = vpop.f32.mrb[0].mxu0
        %3527 = vmatprep.mubr.bf16.mxu0 0
        %3528 = vmatmul.mubr.bf16.gmra.mrb[0].mxu0 %v887
        %v3529 = vpop.f32.mrb[0].mxu0
        %v3530 = vadd.f32 0.0, %v3529
        %v3531 = vpop.f32.mrb[0].mxu0
        %v3532 = vpop.f32.mrb[0].mxu0
        %v3533 = vadd.f32 0.0, %v3532
        %v3534 = vpop.f32.mrb[0].mxu0
        %3535 = vmatprep.mubr.bf16.mxu0 0
        %3536 = vmatmul.mubr.bf16.gmra.mrb[0].mxu0 %v888
        %v3537 = vpop.f32.mrb[0].mxu0
        %v3538 = vadd.f32 0.0, %v3537
        %v3539 = vpop.f32.mrb[0].mxu0
        %v3540 = vpop.f32.mrb[0].mxu0
        %v3541 = vadd.f32 0.0, %v3540
        %v3542 = vpop.f32.mrb[0].mxu0
        %3543 = vmatprep.mubr.bf16.mxu0 0
        %3544 = vmatmul.mubr.bf16.gmra.mrb[0].mxu0 %v889
        %v3545 = vpop.f32.mrb[0].mxu0
        %v3546 = vadd.f32 0.0, %v3545
        %v3547 = vpop.f32.mrb[0].mxu0
        %v3548 = vpop.f32.mrb[0].mxu0
        %v3549 = vadd.f32 0.0, %v3548
        %v3550 = vpop.f32.mrb[0].mxu0
        %3551 = vmatprep.mubr.bf16.mxu0 0
        %3552 = vmatmul.mubr.bf16.gmra.mrb[0].mxu0 %v890
        %v3553 = vpop.f32.mrb[0].mxu0
        %v3554 = vadd.f32 0.0, %v3553
        %v3555 = vpop.f32.mrb[0].mxu0
        %v3556 = vpop.f32.mrb[0].mxu0
        %v3557 = vadd.f32 0.0, %v3556
        %v3558 = vpop.f32.mrb[0].mxu0
        %3559 = vmatprep.mubr.bf16.mxu0 0
        %3560 = vmatmul.mubr.bf16.gmra.mrb[0].mxu0 %v891
        %v3561 = vpop.f32.mrb[0].mxu0
        %v3562 = vadd.f32 0.0, %v3561
        %v3563 = vpop.f32.mrb[0].mxu0
        %v3564 = vpop.f32.mrb[0].mxu0
        %v3565 = vadd.f32 0.0, %v3564
        %v3566 = vpop.f32.mrb[0].mxu0
        %3567 = vmatprep.mubr.bf16.mxu0 0
        %3568 = vmatmul.mubr.bf16.gmra.mrb[0].mxu0 %v892
        %v3569 = vpop.f32.mrb[0].mxu0
        %v3570 = vadd.f32 0.0, %v3569
        %v3571 = vpop.f32.mrb[0].mxu0
        %v3572 = vpop.f32.mrb[0].mxu0
        %v3573 = vadd.f32 0.0, %v3572
        %v3574 = vpop.f32.mrb[0].mxu0
        %3575 = vmatprep.mubr.bf16.mxu0 0
        %3576 = vmatmul.mubr.bf16.gmra.mrb[0].mxu0 %v893
        %v3577 = vpop.f32.mrb[0].mxu0
        %v3578 = vadd.f32 0.0, %v3577
        %v3579 = vpop.f32.mrb[0].mxu0
        %v3580 = vpop.f32.mrb[0].mxu0
        %v3581 = vadd.f32 0.0, %v3580
        %v3582 = vpop.f32.mrb[0].mxu0
        %3583 = vdwg.mxu0
        %v3584 = vadd.f32 %v3406, %v3522
        %v3585 = vadd.f32 %v3407, %v3525
        %v3586 = vadd.f32 %v3408, %v3530
        %v3587 = vadd.f32 %v3409, %v3533
        %v3588 = vadd.f32 %v3410, %v3538
        %v3589 = vadd.f32 %v3411, %v3541
        %v3590 = vadd.f32 %v3412, %v3546
        %v3591 = vadd.f32 %v3413, %v3549
        %v3592 = vadd.f32 %v3414, %v3554
        %v3593 = vadd.f32 %v3415, %v3557
        %v3594 = vadd.f32 %v3416, %v3562
        %v3595 = vadd.f32 %v3417, %v3565
        %v3596 = vadd.f32 %v3418, %v3570
        %v3597 = vadd.f32 %v3419, %v3573
        %v3598 = vadd.f32 %v3420, %v3578
        %v3599 = vadd.f32 %v3421, %v3581
        %v3600 = vmax.f32 %v3584, 0.0
        %v3601 = vmax.f32 %v3585, 0.0
        %v3602 = vmax.f32 %v3586, 0.0
        %v3603 = vmax.f32 %v3587, 0.0
        %v3604 = vmax.f32 %v3588, 0.0
        %v3605 = vmax.f32 %v3589, 0.0
        %v3606 = vmax.f32 %v3590, 0.0
        %v3607 = vmax.f32 %v3591, 0.0
        %v3608 = vmax.f32 %v3592, 0.0
        %v3609 = vmax.f32 %v3593, 0.0
        %v3610 = vmax.f32 %v3594, 0.0
        %v3611 = vmax.f32 %v3595, 0.0
        %v3612 = vmax.f32 %v3596, 0.0
        %v3613 = vmax.f32 %v3597, 0.0
        %v3614 = vmax.f32 %v3598, 0.0
        %v3615 = vmax.f32 %v3599, 0.0
        %v3616 = vrot.slane %v3600, 7
        %v3617 = vrot.slane %v3601, 7
        %v3618 = vrot.slane %v3602, 7
        %v3619 = vrot.slane %v3603, 7
        %v3620 = vrot.slane %v3604, 7
        %v3621 = vrot.slane %v3605, 7
        %v3622 = vrot.slane %v3606, 7
        %v3623 = vrot.slane %v3607, 7
        %v3624 = vrot.slane %v3608, 7
        %v3625 = vrot.slane %v3609, 7
        %v3626 = vrot.slane %v3610, 7
        %v3627 = vrot.slane %v3611, 7
        %v3628 = vrot.slane %v3612, 7
        %v3629 = vrot.slane %v3613, 7
        %v3630 = vrot.slane %v3614, 7
        %v3631 = vrot.slane %v3615, 7
        %v3632 = vsel %vm442, %v3630, %v3631
        %v3633 = vsel %vm442, %v3629, %v3630
        %v3634 = vsel %vm442, %v3628, %v3629
        %v3635 = vsel %vm442, %v3627, %v3628
        %v3636 = vsel %vm442, %v3626, %v3627
        %v3637 = vsel %vm442, %v3625, %v3626
        %v3638 = vsel %vm442, %v3624, %v3625
        %v3639 = vsel %vm442, %v3623, %v3624
        %v3640 = vsel %vm442, %v3622, %v3623
        %v3641 = vsel %vm442, %v3621, %v3622
        %v3642 = vsel %vm442, %v3620, %v3621
        %v3643 = vsel %vm442, %v3619, %v3620
        %v3644 = vsel %vm442, %v3618, %v3619
        %v3645 = vsel %vm442, %v3617, %v3618
        %v3646 = vsel %vm442, %v3616, %v3617
        %v3647 = vsel %vm442, %v3631, %v3616
        %v3648 = vsel %vm378, %v3647, 0.0
        %v3649 = vsel %vm379, %v3646, 0.0
        %v3650 = vsel %vm380, %v3645, 0.0
        %v3651 = vsel %vm381, %v3644, 0.0
        %v3652 = vsel %vm382, %v3643, 0.0
        %v3653 = vsel %vm383, %v3642, 0.0
        %v3654 = vsel %vm384, %v3641, 0.0
        %v3655 = vsel %vm385, %v3640, 0.0
        %v3656 = vsel %vm386, %v3639, 0.0
        %v3657 = vsel %vm387, %v3638, 0.0
        %v3658 = vsel %vm388, %v3637, 0.0
        %v3659 = vsel %vm389, %v3636, 0.0
        %v3660 = vsel %vm390, %v3635, 0.0
        %v3661 = vsel %vm391, %v3634, 0.0
        %v3662 = vsel %vm392, %v3633, 0.0
        %v3663 = vsel %vm393, %v3632, 0.0
        %v3664 = vrot.slane %v3600, 1
        %v3665 = vrot.slane %v3601, 1
        %v3666 = vrot.slane %v3602, 1
        %v3667 = vrot.slane %v3603, 1
        %v3668 = vrot.slane %v3604, 1
        %v3669 = vrot.slane %v3605, 1
        %v3670 = vrot.slane %v3606, 1
        %v3671 = vrot.slane %v3607, 1
        %v3672 = vrot.slane %v3608, 1
        %v3673 = vrot.slane %v3609, 1
        %v3674 = vrot.slane %v3610, 1
        %v3675 = vrot.slane %v3611, 1
        %v3676 = vrot.slane %v3612, 1
        %v3677 = vrot.slane %v3613, 1
        %v3678 = vrot.slane %v3614, 1
        %v3679 = vrot.slane %v3615, 1
        %v3680 = vsel %vm491, %v3678, %v3679
        %v3681 = vsel %vm491, %v3677, %v3678
        %v3682 = vsel %vm491, %v3676, %v3677
        %v3683 = vsel %vm491, %v3675, %v3676
        %v3684 = vsel %vm491, %v3674, %v3675
        %v3685 = vsel %vm491, %v3673, %v3674
        %v3686 = vsel %vm491, %v3672, %v3673
        %v3687 = vsel %vm491, %v3671, %v3672
        %v3688 = vsel %vm491, %v3670, %v3671
        %v3689 = vsel %vm491, %v3669, %v3670
        %v3690 = vsel %vm491, %v3668, %v3669
        %v3691 = vsel %vm491, %v3667, %v3668
        %v3692 = vsel %vm491, %v3666, %v3667
        %v3693 = vsel %vm491, %v3665, %v3666
        %v3694 = vsel %vm491, %v3664, %v3665
        %v3695 = vsel %vm491, %v3679, %v3664
        %v3696 = vsel %vm394, %v3694, 0.0
        %v3697 = vsel %vm395, %v3693, 0.0
        %v3698 = vsel %vm396, %v3692, 0.0
        %v3699 = vsel %vm397, %v3691, 0.0
        %v3700 = vsel %vm398, %v3690, 0.0
        %v3701 = vsel %vm399, %v3689, 0.0
        %v3702 = vsel %vm400, %v3688, 0.0
        %v3703 = vsel %vm401, %v3687, 0.0
        %v3704 = vsel %vm402, %v3686, 0.0
        %v3705 = vsel %vm403, %v3685, 0.0
        %v3706 = vsel %vm404, %v3684, 0.0
        %v3707 = vsel %vm405, %v3683, 0.0
        %v3708 = vsel %vm406, %v3682, 0.0
        %v3709 = vsel %vm407, %v3681, 0.0
        %v3710 = vsel %vm408, %v3680, 0.0
        %v3711 = vsel %vm409, %v3695, 0.0
        %v3712 = vpack.c.bf16 %v3601, %v3600
        %v3713 = vpack.c.bf16 %v3603, %v3602
        %v3714 = vpack.c.bf16 %v3605, %v3604
        %v3715 = vpack.c.bf16 %v3607, %v3606
        %v3716 = vpack.c.bf16 %v3609, %v3608
        %v3717 = vpack.c.bf16 %v3611, %v3610
        %v3718 = vpack.c.bf16 %v3613, %v3612
        %v3719 = vpack.c.bf16 %v3615, %v3614
        %s3720 = scalar_lea.vmem %s1, 1024
        %v3721 = vld [vmem:[%s3720] sm:$0xf]
        %v3722 = vld [vmem:[%s3720 + $0x4] sm:$0xf]
        %v3723 = vld [vmem:[%s3720 + $0x8] sm:$0xf]
        %v3724 = vld [vmem:[%s3720 + $0xc] sm:$0xf]
        %v3725 = vld [vmem:[%s3720 + $0x10] sm:$0xf]
        %v3726 = vld [vmem:[%s3720 + $0x14] sm:$0xf]
        %v3727 = vld [vmem:[%s3720 + $0x18] sm:$0xf]
        %v3728 = vld [vmem:[%s3720 + $0x1c] sm:$0xf]
        %v3729 = vld [vmem:[%s3720 + $0x20] sm:$0xf]
        %v3730 = vld [vmem:[%s3720 + $0x24] sm:$0xf]
        %v3731 = vld [vmem:[%s3720 + $0x28] sm:$0xf]
        %v3732 = vld [vmem:[%s3720 + $0x2c] sm:$0xf]
        %v3733 = vld [vmem:[%s3720 + $0x30] sm:$0xf]
        %v3734 = vld [vmem:[%s3720 + $0x34] sm:$0xf]
        %v3735 = vld [vmem:[%s3720 + $0x38] sm:$0xf]
        %v3736 = vld [vmem:[%s3720 + $0x3c] sm:$0xf]
        %s3737 = scalar_lea.vmem %s2, 5
        %v3738 = vld [vmem:[%s3737] sm:$0x1]
        %v3740 = vlaneseq
        %v3741 = vshrl.u32 %v3740, 7
        %v3742 = vsub.s32 0, %v3741
        %v3743 = vrot.slane %v3738, %v3742
        %v3761 = vunpack.c.l.b16 %v3721
        %v3762 = vunpack.c.l.b16 %v3722
        %v3763 = vunpack.c.l.b16 %v3723
        %v3764 = vunpack.c.l.b16 %v3724
        %v3765 = vunpack.c.l.b16 %v3725
        %v3766 = vunpack.c.l.b16 %v3726
        %v3767 = vunpack.c.l.b16 %v3727
        %v3768 = vunpack.c.l.b16 %v3728
        %v3769 = vunpack.c.l.b16 %v3729
        %v3770 = vunpack.c.l.b16 %v3730
        %v3771 = vunpack.c.l.b16 %v3731
        %v3772 = vunpack.c.l.b16 %v3732
        %v3773 = vunpack.c.l.b16 %v3733
        %v3774 = vunpack.c.l.b16 %v3734
        %v3775 = vunpack.c.l.b16 %v3735
        %v3776 = vunpack.c.l.b16 %v3736
        %v3777 = vpack.c.b16 %v3762, %v3761
        %v3778 = vpack.c.b16 %v3764, %v3763
        %v3779 = vpack.c.b16 %v3766, %v3765
        %v3780 = vpack.c.b16 %v3768, %v3767
        %v3781 = vpack.c.b16 %v3770, %v3769
        %v3782 = vpack.c.b16 %v3772, %v3771
        %v3783 = vpack.c.b16 %v3774, %v3773
        %v3784 = vpack.c.b16 %v3776, %v3775
        %3793 = vmatprep.subr.bf16.mxu0 0
        %3794 = vmatpush1.bf16.msra.mxu0 %v3777
        %3795 = vmatprep.subr.bf16.mxu0 0
        %3796 = vmatpush1.bf16.msra.mxu0 %v3778
        %3797 = vmatprep.subr.bf16.mxu0 0
        %3798 = vmatpush1.bf16.msra.mxu0 %v3779
        %3799 = vmatprep.subr.bf16.mxu0 0
        %3800 = vmatpush1.bf16.msra.mxu0 %v3780
        %3801 = vmatprep.subr.bf16.mxu0 0
        %3802 = vmatpush1.bf16.msra.mxu0 %v3781
        %3803 = vmatprep.subr.bf16.mxu0 0
        %3804 = vmatpush1.bf16.msra.mxu0 %v3782
        %3805 = vmatprep.subr.bf16.mxu0 0
        %3806 = vmatpush1.bf16.msra.mxu0 %v3783
        %3807 = vmatprep.subr.bf16.mxu0 0
        %3808 = vmatpush1.bf16.msra.mxu0 %v3784
        %3809 = vmatprep.subr.bf16.mxu0 0
        %3810 = vmatpush1.bf16.msra.mxu0 0
        %3811 = vmatprep.subr.bf16.mxu0 0
        %3812 = vmatpush1.bf16.msra.mxu0 0
        %3813 = vmatprep.subr.bf16.mxu0 0
        %3814 = vmatpush1.bf16.msra.mxu0 0
        %3815 = vmatprep.subr.bf16.mxu0 0
        %3816 = vmatpush1.bf16.msra.mxu0 0
        %3817 = vmatprep.subr.bf16.mxu0 0
        %3818 = vmatpush1.bf16.msra.mxu0 0
        %3819 = vmatprep.subr.bf16.mxu0 0
        %3820 = vmatpush1.bf16.msra.mxu0 0
        %3821 = vmatprep.subr.bf16.mxu0 0
        %3822 = vmatpush1.bf16.msra.mxu0 0
        %3823 = vmatprep.subr.bf16.mxu0 0
        %3824 = vmatpush1.bf16.msra.mxu0 0
        %3825 = vmatprep.mubr.bf16.mxu0 0
        %3826 = vmatmul.mubr.bf16.gmra.mrb[0].mxu0 %v3712
        %v3827 = vpop.f32.mrb[0].mxu0
        %v3828 = vadd.f32 %v3743, %v3827
        %v3829 = vpop.f32.mrb[0].mxu0
        %v3830 = vpop.f32.mrb[0].mxu0
        %v3831 = vadd.f32 %v3743, %v3830
        %v3832 = vpop.f32.mrb[0].mxu0
        %3833 = vmatprep.mubr.bf16.mxu0 0
        %3834 = vmatmul.mubr.bf16.gmra.mrb[0].mxu0 %v3713
        %v3835 = vpop.f32.mrb[0].mxu0
        %v3836 = vadd.f32 %v3743, %v3835
        %v3837 = vpop.f32.mrb[0].mxu0
        %v3838 = vpop.f32.mrb[0].mxu0
        %v3839 = vadd.f32 %v3743, %v3838
        %v3840 = vpop.f32.mrb[0].mxu0
        %3841 = vmatprep.mubr.bf16.mxu0 0
        %3842 = vmatmul.mubr.bf16.gmra.mrb[0].mxu0 %v3714
        %v3843 = vpop.f32.mrb[0].mxu0
        %v3844 = vadd.f32 %v3743, %v3843
        %v3845 = vpop.f32.mrb[0].mxu0
        %v3846 = vpop.f32.mrb[0].mxu0
        %v3847 = vadd.f32 %v3743, %v3846
        %v3848 = vpop.f32.mrb[0].mxu0
        %3849 = vmatprep.mubr.bf16.mxu0 0
        %3850 = vmatmul.mubr.bf16.gmra.mrb[0].mxu0 %v3715
        %v3851 = vpop.f32.mrb[0].mxu0
        %v3852 = vadd.f32 %v3743, %v3851
        %v3853 = vpop.f32.mrb[0].mxu0
        %v3854 = vpop.f32.mrb[0].mxu0
        %v3855 = vadd.f32 %v3743, %v3854
        %v3856 = vpop.f32.mrb[0].mxu0
        %3857 = vmatprep.mubr.bf16.mxu0 0
        %3858 = vmatmul.mubr.bf16.gmra.mrb[0].mxu0 %v3716
        %v3859 = vpop.f32.mrb[0].mxu0
        %v3860 = vadd.f32 %v3743, %v3859
        %v3861 = vpop.f32.mrb[0].mxu0
        %v3862 = vpop.f32.mrb[0].mxu0
        %v3863 = vadd.f32 %v3743, %v3862
        %v3864 = vpop.f32.mrb[0].mxu0
        %3865 = vmatprep.mubr.bf16.mxu0 0
        %3866 = vmatmul.mubr.bf16.gmra.mrb[0].mxu0 %v3717
        %v3867 = vpop.f32.mrb[0].mxu0
        %v3868 = vadd.f32 %v3743, %v3867
        %v3869 = vpop.f32.mrb[0].mxu0
        %v3870 = vpop.f32.mrb[0].mxu0
        %v3871 = vadd.f32 %v3743, %v3870
        %v3872 = vpop.f32.mrb[0].mxu0
        %3873 = vmatprep.mubr.bf16.mxu0 0
        %3874 = vmatmul.mubr.bf16.gmra.mrb[0].mxu0 %v3718
        %v3875 = vpop.f32.mrb[0].mxu0
        %v3876 = vadd.f32 %v3743, %v3875
        %v3877 = vpop.f32.mrb[0].mxu0
        %v3878 = vpop.f32.mrb[0].mxu0
        %v3879 = vadd.f32 %v3743, %v3878
        %v3880 = vpop.f32.mrb[0].mxu0
        %3881 = vmatprep.mubr.bf16.mxu0 0
        %3882 = vmatmul.mubr.bf16.gmra.mrb[0].mxu0 %v3719
        %v3883 = vpop.f32.mrb[0].mxu0
        %v3884 = vadd.f32 %v3743, %v3883
        %v3885 = vpop.f32.mrb[0].mxu0
        %v3886 = vpop.f32.mrb[0].mxu0
        %v3887 = vadd.f32 %v3743, %v3886
        %v3888 = vpop.f32.mrb[0].mxu0
        %3889 = vdwg.mxu0
        %v3890 = vpack.c.bf16 %v3649, %v3648
        %v3891 = vpack.c.bf16 %v3651, %v3650
        %v3892 = vpack.c.bf16 %v3653, %v3652
        %v3893 = vpack.c.bf16 %v3655, %v3654
        %v3894 = vpack.c.bf16 %v3657, %v3656
        %v3895 = vpack.c.bf16 %v3659, %v3658
        %v3896 = vpack.c.bf16 %v3661, %v3660
        %v3897 = vpack.c.bf16 %v3663, %v3662
        %s3898 = scalar_lea.vmem %s1, 960
        %v3899 = vld [vmem:[%s3898] sm:$0xf]
        %v3900 = vld [vmem:[%s3898 + $0x4] sm:$0xf]
        %v3901 = vld [vmem:[%s3898 + $0x8] sm:$0xf]
        %v3902 = vld [vmem:[%s3898 + $0xc] sm:$0xf]
        %v3903 = vld [vmem:[%s3898 + $0x10] sm:$0xf]
        %v3904 = vld [vmem:[%s3898 + $0x14] sm:$0xf]
        %v3905 = vld [vmem:[%s3898 + $0x18] sm:$0xf]
        %v3906 = vld [vmem:[%s3898 + $0x1c] sm:$0xf]
        %v3907 = vld [vmem:[%s3898 + $0x20] sm:$0xf]
        %v3908 = vld [vmem:[%s3898 + $0x24] sm:$0xf]
        %v3909 = vld [vmem:[%s3898 + $0x28] sm:$0xf]
        %v3910 = vld [vmem:[%s3898 + $0x2c] sm:$0xf]
        %v3911 = vld [vmem:[%s3898 + $0x30] sm:$0xf]
        %v3912 = vld [vmem:[%s3898 + $0x34] sm:$0xf]
        %v3913 = vld [vmem:[%s3898 + $0x38] sm:$0xf]
        %v3914 = vld [vmem:[%s3898 + $0x3c] sm:$0xf]
        %v3931 = vunpack.c.l.b16 %v3899
        %v3932 = vunpack.c.l.b16 %v3900
        %v3933 = vunpack.c.l.b16 %v3901
        %v3934 = vunpack.c.l.b16 %v3902
        %v3935 = vunpack.c.l.b16 %v3903
        %v3936 = vunpack.c.l.b16 %v3904
        %v3937 = vunpack.c.l.b16 %v3905
        %v3938 = vunpack.c.l.b16 %v3906
        %v3939 = vunpack.c.l.b16 %v3907
        %v3940 = vunpack.c.l.b16 %v3908
        %v3941 = vunpack.c.l.b16 %v3909
        %v3942 = vunpack.c.l.b16 %v3910
        %v3943 = vunpack.c.l.b16 %v3911
        %v3944 = vunpack.c.l.b16 %v3912
        %v3945 = vunpack.c.l.b16 %v3913
        %v3946 = vunpack.c.l.b16 %v3914
        %v3947 = vpack.c.b16 %v3932, %v3931
        %v3948 = vpack.c.b16 %v3934, %v3933
        %v3949 = vpack.c.b16 %v3936, %v3935
        %v3950 = vpack.c.b16 %v3938, %v3937
        %v3951 = vpack.c.b16 %v3940, %v3939
        %v3952 = vpack.c.b16 %v3942, %v3941
        %v3953 = vpack.c.b16 %v3944, %v3943
        %v3954 = vpack.c.b16 %v3946, %v3945
        %3963 = vmatprep.subr.bf16.mxu0 0
        %3964 = vmatpush1.bf16.msra.mxu0 %v3947
        %3965 = vmatprep.subr.bf16.mxu0 0
        %3966 = vmatpush1.bf16.msra.mxu0 %v3948
        %3967 = vmatprep.subr.bf16.mxu0 0
        %3968 = vmatpush1.bf16.msra.mxu0 %v3949
        %3969 = vmatprep.subr.bf16.mxu0 0
        %3970 = vmatpush1.bf16.msra.mxu0 %v3950
        %3971 = vmatprep.subr.bf16.mxu0 0
        %3972 = vmatpush1.bf16.msra.mxu0 %v3951
        %3973 = vmatprep.subr.bf16.mxu0 0
        %3974 = vmatpush1.bf16.msra.mxu0 %v3952
        %3975 = vmatprep.subr.bf16.mxu0 0
        %3976 = vmatpush1.bf16.msra.mxu0 %v3953
        %3977 = vmatprep.subr.bf16.mxu0 0
        %3978 = vmatpush1.bf16.msra.mxu0 %v3954
        %3979 = vmatprep.subr.bf16.mxu0 0
        %3980 = vmatpush1.bf16.msra.mxu0 0
        %3981 = vmatprep.subr.bf16.mxu0 0
        %3982 = vmatpush1.bf16.msra.mxu0 0
        %3983 = vmatprep.subr.bf16.mxu0 0
        %3984 = vmatpush1.bf16.msra.mxu0 0
        %3985 = vmatprep.subr.bf16.mxu0 0
        %3986 = vmatpush1.bf16.msra.mxu0 0
        %3987 = vmatprep.subr.bf16.mxu0 0
        %3988 = vmatpush1.bf16.msra.mxu0 0
        %3989 = vmatprep.subr.bf16.mxu0 0
        %3990 = vmatpush1.bf16.msra.mxu0 0
        %3991 = vmatprep.subr.bf16.mxu0 0
        %3992 = vmatpush1.bf16.msra.mxu0 0
        %3993 = vmatprep.subr.bf16.mxu0 0
        %3994 = vmatpush1.bf16.msra.mxu0 0
        %3995 = vmatprep.mubr.bf16.mxu0 0
        %3996 = vmatmul.mubr.bf16.gmra.mrb[0].mxu0 %v3890
        %v3997 = vpop.f32.mrb[0].mxu0
        %v3998 = vadd.f32 0.0, %v3997
        %v3999 = vpop.f32.mrb[0].mxu0
        %v4000 = vpop.f32.mrb[0].mxu0
        %v4001 = vadd.f32 0.0, %v4000
        %v4002 = vpop.f32.mrb[0].mxu0
        %4003 = vmatprep.mubr.bf16.mxu0 0
        %4004 = vmatmul.mubr.bf16.gmra.mrb[0].mxu0 %v3891
        %v4005 = vpop.f32.mrb[0].mxu0
        %v4006 = vadd.f32 0.0, %v4005
        %v4007 = vpop.f32.mrb[0].mxu0
        %v4008 = vpop.f32.mrb[0].mxu0
        %v4009 = vadd.f32 0.0, %v4008
        %v4010 = vpop.f32.mrb[0].mxu0
        %4011 = vmatprep.mubr.bf16.mxu0 0
        %4012 = vmatmul.mubr.bf16.gmra.mrb[0].mxu0 %v3892
        %v4013 = vpop.f32.mrb[0].mxu0
        %v4014 = vadd.f32 0.0, %v4013
        %v4015 = vpop.f32.mrb[0].mxu0
        %v4016 = vpop.f32.mrb[0].mxu0
        %v4017 = vadd.f32 0.0, %v4016
        %v4018 = vpop.f32.mrb[0].mxu0
        %4019 = vmatprep.mubr.bf16.mxu0 0
        %4020 = vmatmul.mubr.bf16.gmra.mrb[0].mxu0 %v3893
        %v4021 = vpop.f32.mrb[0].mxu0
        %v4022 = vadd.f32 0.0, %v4021
        %v4023 = vpop.f32.mrb[0].mxu0
        %v4024 = vpop.f32.mrb[0].mxu0
        %v4025 = vadd.f32 0.0, %v4024
        %v4026 = vpop.f32.mrb[0].mxu0
        %4027 = vmatprep.mubr.bf16.mxu0 0
        %4028 = vmatmul.mubr.bf16.gmra.mrb[0].mxu0 %v3894
        %v4029 = vpop.f32.mrb[0].mxu0
        %v4030 = vadd.f32 0.0, %v4029
        %v4031 = vpop.f32.mrb[0].mxu0
        %v4032 = vpop.f32.mrb[0].mxu0
        %v4033 = vadd.f32 0.0, %v4032
        %v4034 = vpop.f32.mrb[0].mxu0
        %4035 = vmatprep.mubr.bf16.mxu0 0
        %4036 = vmatmul.mubr.bf16.gmra.mrb[0].mxu0 %v3895
        %v4037 = vpop.f32.mrb[0].mxu0
        %v4038 = vadd.f32 0.0, %v4037
        %v4039 = vpop.f32.mrb[0].mxu0
        %v4040 = vpop.f32.mrb[0].mxu0
        %v4041 = vadd.f32 0.0, %v4040
        %v4042 = vpop.f32.mrb[0].mxu0
        %4043 = vmatprep.mubr.bf16.mxu0 0
        %4044 = vmatmul.mubr.bf16.gmra.mrb[0].mxu0 %v3896
        %v4045 = vpop.f32.mrb[0].mxu0
        %v4046 = vadd.f32 0.0, %v4045
        %v4047 = vpop.f32.mrb[0].mxu0
        %v4048 = vpop.f32.mrb[0].mxu0
        %v4049 = vadd.f32 0.0, %v4048
        %v4050 = vpop.f32.mrb[0].mxu0
        %4051 = vmatprep.mubr.bf16.mxu0 0
        %4052 = vmatmul.mubr.bf16.gmra.mrb[0].mxu0 %v3897
        %v4053 = vpop.f32.mrb[0].mxu0
        %v4054 = vadd.f32 0.0, %v4053
        %v4055 = vpop.f32.mrb[0].mxu0
        %v4056 = vpop.f32.mrb[0].mxu0
        %v4057 = vadd.f32 0.0, %v4056
        %v4058 = vpop.f32.mrb[0].mxu0
        %4059 = vdwg.mxu0
        %v4060 = vadd.f32 %v3828, %v3998
        %v4061 = vadd.f32 %v3831, %v4001
        %v4062 = vadd.f32 %v3836, %v4006
        %v4063 = vadd.f32 %v3839, %v4009
        %v4064 = vadd.f32 %v3844, %v4014
        %v4065 = vadd.f32 %v3847, %v4017
        %v4066 = vadd.f32 %v3852, %v4022
        %v4067 = vadd.f32 %v3855, %v4025
        %v4068 = vadd.f32 %v3860, %v4030
        %v4069 = vadd.f32 %v3863, %v4033
        %v4070 = vadd.f32 %v3868, %v4038
        %v4071 = vadd.f32 %v3871, %v4041
        %v4072 = vadd.f32 %v3876, %v4046
        %v4073 = vadd.f32 %v3879, %v4049
        %v4074 = vadd.f32 %v3884, %v4054
        %v4075 = vadd.f32 %v3887, %v4057
        %v4076 = vpack.c.bf16 %v3697, %v3696
        %v4077 = vpack.c.bf16 %v3699, %v3698
        %v4078 = vpack.c.bf16 %v3701, %v3700
        %v4079 = vpack.c.bf16 %v3703, %v3702
        %v4080 = vpack.c.bf16 %v3705, %v3704
        %v4081 = vpack.c.bf16 %v3707, %v3706
        %v4082 = vpack.c.bf16 %v3709, %v3708
        %v4083 = vpack.c.bf16 %v3711, %v3710
        %s4084 = scalar_lea.vmem %s1, 1088
        %v4085 = vld [vmem:[%s4084] sm:$0xf]
        %v4086 = vld [vmem:[%s4084 + $0x4] sm:$0xf]
        %v4087 = vld [vmem:[%s4084 + $0x8] sm:$0xf]
        %v4088 = vld [vmem:[%s4084 + $0xc] sm:$0xf]
        %v4089 = vld [vmem:[%s4084 + $0x10] sm:$0xf]
        %v4090 = vld [vmem:[%s4084 + $0x14] sm:$0xf]
        %v4091 = vld [vmem:[%s4084 + $0x18] sm:$0xf]
        %v4092 = vld [vmem:[%s4084 + $0x1c] sm:$0xf]
        %v4093 = vld [vmem:[%s4084 + $0x20] sm:$0xf]
        %v4094 = vld [vmem:[%s4084 + $0x24] sm:$0xf]
        %v4095 = vld [vmem:[%s4084 + $0x28] sm:$0xf]
        %v4096 = vld [vmem:[%s4084 + $0x2c] sm:$0xf]
        %v4097 = vld [vmem:[%s4084 + $0x30] sm:$0xf]
        %v4098 = vld [vmem:[%s4084 + $0x34] sm:$0xf]
        %v4099 = vld [vmem:[%s4084 + $0x38] sm:$0xf]
        %v4100 = vld [vmem:[%s4084 + $0x3c] sm:$0xf]
        %v4117 = vunpack.c.l.b16 %v4085
        %v4118 = vunpack.c.l.b16 %v4086
        %v4119 = vunpack.c.l.b16 %v4087
        %v4120 = vunpack.c.l.b16 %v4088
        %v4121 = vunpack.c.l.b16 %v4089
        %v4122 = vunpack.c.l.b16 %v4090
        %v4123 = vunpack.c.l.b16 %v4091
        %v4124 = vunpack.c.l.b16 %v4092
        %v4125 = vunpack.c.l.b16 %v4093
        %v4126 = vunpack.c.l.b16 %v4094
        %v4127 = vunpack.c.l.b16 %v4095
        %v4128 = vunpack.c.l.b16 %v4096
        %v4129 = vunpack.c.l.b16 %v4097
        %v4130 = vunpack.c.l.b16 %v4098
        %v4131 = vunpack.c.l.b16 %v4099
        %v4132 = vunpack.c.l.b16 %v4100
        %v4133 = vpack.c.b16 %v4118, %v4117
        %v4134 = vpack.c.b16 %v4120, %v4119
        %v4135 = vpack.c.b16 %v4122, %v4121
        %v4136 = vpack.c.b16 %v4124, %v4123
        %v4137 = vpack.c.b16 %v4126, %v4125
        %v4138 = vpack.c.b16 %v4128, %v4127
        %v4139 = vpack.c.b16 %v4130, %v4129
        %v4140 = vpack.c.b16 %v4132, %v4131
        %4149 = vmatprep.subr.bf16.mxu0 0
        %4150 = vmatpush1.bf16.msra.mxu0 %v4133
        %4151 = vmatprep.subr.bf16.mxu0 0
        %4152 = vmatpush1.bf16.msra.mxu0 %v4134
        %4153 = vmatprep.subr.bf16.mxu0 0
        %4154 = vmatpush1.bf16.msra.mxu0 %v4135
        %4155 = vmatprep.subr.bf16.mxu0 0
        %4156 = vmatpush1.bf16.msra.mxu0 %v4136
        %4157 = vmatprep.subr.bf16.mxu0 0
        %4158 = vmatpush1.bf16.msra.mxu0 %v4137
        %4159 = vmatprep.subr.bf16.mxu0 0
        %4160 = vmatpush1.bf16.msra.mxu0 %v4138
        %4161 = vmatprep.subr.bf16.mxu0 0
        %4162 = vmatpush1.bf16.msra.mxu0 %v4139
        %4163 = vmatprep.subr.bf16.mxu0 0
        %4164 = vmatpush1.bf16.msra.mxu0 %v4140
        %4165 = vmatprep.subr.bf16.mxu0 0
        %4166 = vmatpush1.bf16.msra.mxu0 0
        %4167 = vmatprep.subr.bf16.mxu0 0
        %4168 = vmatpush1.bf16.msra.mxu0 0
        %4169 = vmatprep.subr.bf16.mxu0 0
        %4170 = vmatpush1.bf16.msra.mxu0 0
        %4171 = vmatprep.subr.bf16.mxu0 0
        %4172 = vmatpush1.bf16.msra.mxu0 0
        %4173 = vmatprep.subr.bf16.mxu0 0
        %4174 = vmatpush1.bf16.msra.mxu0 0
        %4175 = vmatprep.subr.bf16.mxu0 0
        %4176 = vmatpush1.bf16.msra.mxu0 0
        %4177 = vmatprep.subr.bf16.mxu0 0
        %4178 = vmatpush1.bf16.msra.mxu0 0
        %4179 = vmatprep.subr.bf16.mxu0 0
        %4180 = vmatpush1.bf16.msra.mxu0 0
        %4181 = vmatprep.mubr.bf16.mxu0 0
        %4182 = vmatmul.mubr.bf16.gmra.mrb[0].mxu0 %v4076
        %v4183 = vpop.f32.mrb[0].mxu0
        %v4184 = vadd.f32 0.0, %v4183
        %v4185 = vpop.f32.mrb[0].mxu0
        %v4186 = vpop.f32.mrb[0].mxu0
        %v4187 = vadd.f32 0.0, %v4186
        %v4188 = vpop.f32.mrb[0].mxu0
        %4189 = vmatprep.mubr.bf16.mxu0 0
        %4190 = vmatmul.mubr.bf16.gmra.mrb[0].mxu0 %v4077
        %v4191 = vpop.f32.mrb[0].mxu0
        %v4192 = vadd.f32 0.0, %v4191
        %v4193 = vpop.f32.mrb[0].mxu0
        %v4194 = vpop.f32.mrb[0].mxu0
        %v4195 = vadd.f32 0.0, %v4194
        %v4196 = vpop.f32.mrb[0].mxu0
        %4197 = vmatprep.mubr.bf16.mxu0 0
        %4198 = vmatmul.mubr.bf16.gmra.mrb[0].mxu0 %v4078
        %v4199 = vpop.f32.mrb[0].mxu0
        %v4200 = vadd.f32 0.0, %v4199
        %v4201 = vpop.f32.mrb[0].mxu0
        %v4202 = vpop.f32.mrb[0].mxu0
        %v4203 = vadd.f32 0.0, %v4202
        %v4204 = vpop.f32.mrb[0].mxu0
        %4205 = vmatprep.mubr.bf16.mxu0 0
        %4206 = vmatmul.mubr.bf16.gmra.mrb[0].mxu0 %v4079
        %v4207 = vpop.f32.mrb[0].mxu0
        %v4208 = vadd.f32 0.0, %v4207
        %v4209 = vpop.f32.mrb[0].mxu0
        %v4210 = vpop.f32.mrb[0].mxu0
        %v4211 = vadd.f32 0.0, %v4210
        %v4212 = vpop.f32.mrb[0].mxu0
        %4213 = vmatprep.mubr.bf16.mxu0 0
        %4214 = vmatmul.mubr.bf16.gmra.mrb[0].mxu0 %v4080
        %v4215 = vpop.f32.mrb[0].mxu0
        %v4216 = vadd.f32 0.0, %v4215
        %v4217 = vpop.f32.mrb[0].mxu0
        %v4218 = vpop.f32.mrb[0].mxu0
        %v4219 = vadd.f32 0.0, %v4218
        %v4220 = vpop.f32.mrb[0].mxu0
        %4221 = vmatprep.mubr.bf16.mxu0 0
        %4222 = vmatmul.mubr.bf16.gmra.mrb[0].mxu0 %v4081
        %v4223 = vpop.f32.mrb[0].mxu0
        %v4224 = vadd.f32 0.0, %v4223
        %v4225 = vpop.f32.mrb[0].mxu0
        %v4226 = vpop.f32.mrb[0].mxu0
        %v4227 = vadd.f32 0.0, %v4226
        %v4228 = vpop.f32.mrb[0].mxu0
        %4229 = vmatprep.mubr.bf16.mxu0 0
        %4230 = vmatmul.mubr.bf16.gmra.mrb[0].mxu0 %v4082
        %v4231 = vpop.f32.mrb[0].mxu0
        %v4232 = vadd.f32 0.0, %v4231
        %v4233 = vpop.f32.mrb[0].mxu0
        %v4234 = vpop.f32.mrb[0].mxu0
        %v4235 = vadd.f32 0.0, %v4234
        %v4236 = vpop.f32.mrb[0].mxu0
        %4237 = vmatprep.mubr.bf16.mxu0 0
        %4238 = vmatmul.mubr.bf16.gmra.mrb[0].mxu0 %v4083
        %v4239 = vpop.f32.mrb[0].mxu0
        %v4240 = vadd.f32 0.0, %v4239
        %v4241 = vpop.f32.mrb[0].mxu0
        %v4242 = vpop.f32.mrb[0].mxu0
        %v4243 = vadd.f32 0.0, %v4242
        %v4244 = vpop.f32.mrb[0].mxu0
        %4245 = vdwg.mxu0
        %v4246 = vadd.f32 %v4060, %v4184
        %v4247 = vadd.f32 %v4061, %v4187
        %v4248 = vadd.f32 %v4062, %v4192
        %v4249 = vadd.f32 %v4063, %v4195
        %v4250 = vadd.f32 %v4064, %v4200
        %v4251 = vadd.f32 %v4065, %v4203
        %v4252 = vadd.f32 %v4066, %v4208
        %v4253 = vadd.f32 %v4067, %v4211
        %v4254 = vadd.f32 %v4068, %v4216
        %v4255 = vadd.f32 %v4069, %v4219
        %v4256 = vadd.f32 %v4070, %v4224
        %v4257 = vadd.f32 %v4071, %v4227
        %v4258 = vadd.f32 %v4072, %v4232
        %v4259 = vadd.f32 %v4073, %v4235
        %v4260 = vadd.f32 %v4074, %v4240
        %v4261 = vadd.f32 %v4075, %v4243
        %v4262 = vadd.f32 %v4246, %v410
        %v4263 = vadd.f32 %v4247, %v411
        %v4264 = vadd.f32 %v4248, %v412
        %v4265 = vadd.f32 %v4249, %v413
        %v4266 = vadd.f32 %v4250, %v414
        %v4267 = vadd.f32 %v4251, %v415
        %v4268 = vadd.f32 %v4252, %v416
        %v4269 = vadd.f32 %v4253, %v417
        %v4270 = vadd.f32 %v4254, %v418
        %v4271 = vadd.f32 %v4255, %v419
        %v4272 = vadd.f32 %v4256, %v420
        %v4273 = vadd.f32 %v4257, %v421
        %v4274 = vadd.f32 %v4258, %v422
        %v4275 = vadd.f32 %v4259, %v423
        %v4276 = vadd.f32 %v4260, %v424
        %v4277 = vadd.f32 %v4261, %v425
        %v4278 = vadd.f32 %v3058, %v410
        %v4279 = vadd.f32 %v3059, %v411
        %v4280 = vadd.f32 %v3060, %v412
        %v4281 = vadd.f32 %v3061, %v413
        %v4282 = vadd.f32 %v3062, %v414
        %v4283 = vadd.f32 %v3063, %v415
        %v4284 = vadd.f32 %v3064, %v416
        %v4285 = vadd.f32 %v3065, %v417
        %v4286 = vadd.f32 %v3066, %v418
        %v4287 = vadd.f32 %v3067, %v419
        %v4288 = vadd.f32 %v3068, %v420
        %v4289 = vadd.f32 %v3069, %v421
        %v4290 = vadd.f32 %v3070, %v422
        %v4291 = vadd.f32 %v3071, %v423
        %v4292 = vadd.f32 %v3072, %v424
        %v4293 = vadd.f32 %v3073, %v425
        %4294 = vst [vmem:[%s160] sm:$0xff] %v4278
        %4295 = vst [vmem:[%s160 + $0x8] sm:$0xff] %v4279
        %4296 = vst [vmem:[%s160 + $0x10] sm:$0xff] %v4280
        %4297 = vst [vmem:[%s160 + $0x18] sm:$0xff] %v4281
        %4298 = vst [vmem:[%s160 + $0x20] sm:$0xff] %v4282
        %4299 = vst [vmem:[%s160 + $0x28] sm:$0xff] %v4283
        %4300 = vst [vmem:[%s160 + $0x30] sm:$0xff] %v4284
        %4301 = vst [vmem:[%s160 + $0x38] sm:$0xff] %v4285
        %4302 = vst [vmem:[%s160 + $0x40] sm:$0xff] %v4286
        %4303 = vst [vmem:[%s160 + $0x48] sm:$0xff] %v4287
        %4304 = vst [vmem:[%s160 + $0x50] sm:$0xff] %v4288
        %4305 = vst [vmem:[%s160 + $0x58] sm:$0xff] %v4289
        %4306 = vst [vmem:[%s160 + $0x60] sm:$0xff] %v4290
        %4307 = vst [vmem:[%s160 + $0x68] sm:$0xff] %v4291
        %4308 = vst [vmem:[%s160 + $0x70] sm:$0xff] %v4292
        %4309 = vst [vmem:[%s160 + $0x78] sm:$0xff] %v4293
        %s4310 = scalar_lea.vmem %s160, 128 [#allocation2]
        %4311 = vst [vmem:[%s4310] sm:$0xff] %v4262
        %4312 = vst [vmem:[%s4310 + $0x8] sm:$0xff] %v4263
        %4313 = vst [vmem:[%s4310 + $0x10] sm:$0xff] %v4264
        %4314 = vst [vmem:[%s4310 + $0x18] sm:$0xff] %v4265
        %4315 = vst [vmem:[%s4310 + $0x20] sm:$0xff] %v4266
        %4316 = vst [vmem:[%s4310 + $0x28] sm:$0xff] %v4267
        %4317 = vst [vmem:[%s4310 + $0x30] sm:$0xff] %v4268
        %4318 = vst [vmem:[%s4310 + $0x38] sm:$0xff] %v4269
        %4319 = vst [vmem:[%s4310 + $0x40] sm:$0xff] %v4270
        %4320 = vst [vmem:[%s4310 + $0x48] sm:$0xff] %v4271
        %4321 = vst [vmem:[%s4310 + $0x50] sm:$0xff] %v4272
        %4322 = vst [vmem:[%s4310 + $0x58] sm:$0xff] %v4273
        %4323 = vst [vmem:[%s4310 + $0x60] sm:$0xff] %v4274
        %4324 = vst [vmem:[%s4310 + $0x68] sm:$0xff] %v4275
        %4325 = vst [vmem:[%s4310 + $0x70] sm:$0xff] %v4276
        %4326 = vst [vmem:[%s4310 + $0x78] sm:$0xff] %v4277
        %s4327 = sand.u32 %s90, 1
        %s4328 = sand.u32 %s90, 1
        %s4329 = smul.addr %s4328, 256
        %s4330 = scalar_lea.vmem [#allocation2], %s4329
        // Predicated region
        $region33: #{fractin2_pallas_nchw.1} parent=31 // pred_check
          %p4331 = pneg %p100
        $region34: #{fractin2_pallas_nchw.1} parent=31 // pred_check_branch
          %4333 = sbr.rel (%p4331) target = $region36
        $region35: #{fractin2_pallas_nchw.1} parent=31 // pred_region
          %s4334 = smul.u32 16, %s14
          %s4335 = smul.addr %s4334, 8
          %s4336 = scalar_lea.vmem %s3, %s4335
          // Predicated region
          $region37: #{fractin2_pallas_nchw.1} parent=35 // pred_check
            _
          $region38: #{fractin2_pallas_nchw.1} parent=35 // pred_check_branch
            %4338 = sbr.rel (0) target = $region40
          $region39: #{fractin2_pallas_nchw.1} parent=35 // pred_region
            // Predicated region
            $region41: #{fractin2_pallas_nchw.1} parent=39 // pred_check
              _
            $region42: #{fractin2_pallas_nchw.1} parent=39 // pred_check_branch
              %4340 = sbr.rel (0) target = $region44
            $region43: #{fractin2_pallas_nchw.1} parent=39 // pred_region
              // Predicated region
              $region56: #{fractin2_pallas_nchw.1} parent=43 // pred_check
                _
              $region57: #{fractin2_pallas_nchw.1} parent=43 // pred_check_branch
                %4417 = sbr.rel (0) target = $region59
              $region58: #{fractin2_pallas_nchw.1} parent=43 // pred_region
                loop: start=0, step=1, limit=1
                $region60: #{fractin2_pallas_nchw.1} parent=58 // loop_pre_header
                  _
                $region61: #{fractin2_pallas_nchw.1} parent=58 // loop_header
                  %s4419 = sphi 0, %s4423
                  %p4420 = scmp.ge.s32.totalorder %s4419, 1
                  %s4424 = sphi %s4330, %s4330
                  %s4425 = sphi %s4336, %s4336
                $region62: #{fractin2_pallas_nchw.1} parent=58 // loop_header_branch
                  %4422 = sbr.rel (%p4420) target = $region66
                $region63: #{fractin2_pallas_nchw.1} parent=58 // loop_body
                  %v4426 = vld [vmem:[%s4424] sm:$0xff]
                  %4427 = vst [vmem:[%s4425] sm:$0xff] %v4426
                  %v4428 = vld [vmem:[%s4424 + $0x8] sm:$0xff]
                  %4429 = vst [vmem:[%s4425 + $0x8] sm:$0xff] %v4428
                  %v4430 = vld [vmem:[%s4424 + $0x10] sm:$0xff]
                  %4431 = vst [vmem:[%s4425 + $0x10] sm:$0xff] %v4430
                  %v4432 = vld [vmem:[%s4424 + $0x18] sm:$0xff]
                  %4433 = vst [vmem:[%s4425 + $0x18] sm:$0xff] %v4432
                  %v4434 = vld [vmem:[%s4424 + $0x20] sm:$0xff]
                  %4435 = vst [vmem:[%s4425 + $0x20] sm:$0xff] %v4434
                  %v4436 = vld [vmem:[%s4424 + $0x28] sm:$0xff]
                  %4437 = vst [vmem:[%s4425 + $0x28] sm:$0xff] %v4436
                  %v4438 = vld [vmem:[%s4424 + $0x30] sm:$0xff]
                  %4439 = vst [vmem:[%s4425 + $0x30] sm:$0xff] %v4438
                  %v4440 = vld [vmem:[%s4424 + $0x38] sm:$0xff]
                  %4441 = vst [vmem:[%s4425 + $0x38] sm:$0xff] %v4440
                  %v4442 = vld [vmem:[%s4424 + $0x40] sm:$0xff]
                  %4443 = vst [vmem:[%s4425 + $0x40] sm:$0xff] %v4442
                  %v4444 = vld [vmem:[%s4424 + $0x48] sm:$0xff]
                  %4445 = vst [vmem:[%s4425 + $0x48] sm:$0xff] %v4444
                  %v4446 = vld [vmem:[%s4424 + $0x50] sm:$0xff]
                  %4447 = vst [vmem:[%s4425 + $0x50] sm:$0xff] %v4446
                  %v4448 = vld [vmem:[%s4424 + $0x58] sm:$0xff]
                  %4449 = vst [vmem:[%s4425 + $0x58] sm:$0xff] %v4448
                  %v4450 = vld [vmem:[%s4424 + $0x60] sm:$0xff]
                  %4451 = vst [vmem:[%s4425 + $0x60] sm:$0xff] %v4450
                  %v4452 = vld [vmem:[%s4424 + $0x68] sm:$0xff]
                  %4453 = vst [vmem:[%s4425 + $0x68] sm:$0xff] %v4452
                  %v4454 = vld [vmem:[%s4424 + $0x70] sm:$0xff]
                  %4455 = vst [vmem:[%s4425 + $0x70] sm:$0xff] %v4454
                  %v4456 = vld [vmem:[%s4424 + $0x78] sm:$0xff]
                  %4457 = vst [vmem:[%s4425 + $0x78] sm:$0xff] %v4456
                  %v4458 = vld [vmem:[%s4424 + $0x80] sm:$0xff]
                  %4459 = vst [vmem:[%s4425 + $0x100] sm:$0xff] %v4458
                  %v4460 = vld [vmem:[%s4424 + $0x88] sm:$0xff]
                  %4461 = vst [vmem:[%s4425 + $0x108] sm:$0xff] %v4460
                  %v4462 = vld [vmem:[%s4424 + $0x90] sm:$0xff]
                  %4463 = vst [vmem:[%s4425 + $0x110] sm:$0xff] %v4462
                  %v4464 = vld [vmem:[%s4424 + $0x98] sm:$0xff]
                  %4465 = vst [vmem:[%s4425 + $0x118] sm:$0xff] %v4464
                  %v4466 = vld [vmem:[%s4424 + $0xa0] sm:$0xff]
                  %4467 = vst [vmem:[%s4425 + $0x120] sm:$0xff] %v4466
                  %v4468 = vld [vmem:[%s4424 + $0xa8] sm:$0xff]
                  %4469 = vst [vmem:[%s4425 + $0x128] sm:$0xff] %v4468
                  %v4470 = vld [vmem:[%s4424 + $0xb0] sm:$0xff]
                  %4471 = vst [vmem:[%s4425 + $0x130] sm:$0xff] %v4470
                  %v4472 = vld [vmem:[%s4424 + $0xb8] sm:$0xff]
                  %4473 = vst [vmem:[%s4425 + $0x138] sm:$0xff] %v4472
                  %v4474 = vld [vmem:[%s4424 + $0xc0] sm:$0xff]
                  %4475 = vst [vmem:[%s4425 + $0x140] sm:$0xff] %v4474
                  %v4476 = vld [vmem:[%s4424 + $0xc8] sm:$0xff]
                  %4477 = vst [vmem:[%s4425 + $0x148] sm:$0xff] %v4476
                  %v4478 = vld [vmem:[%s4424 + $0xd0] sm:$0xff]
                  %4479 = vst [vmem:[%s4425 + $0x150] sm:$0xff] %v4478
                  %v4480 = vld [vmem:[%s4424 + $0xd8] sm:$0xff]
                  %4481 = vst [vmem:[%s4425 + $0x158] sm:$0xff] %v4480
                  %v4482 = vld [vmem:[%s4424 + $0xe0] sm:$0xff]
                  %4483 = vst [vmem:[%s4425 + $0x160] sm:$0xff] %v4482
                  %v4484 = vld [vmem:[%s4424 + $0xe8] sm:$0xff]
                  %4485 = vst [vmem:[%s4425 + $0x168] sm:$0xff] %v4484
                  %v4486 = vld [vmem:[%s4424 + $0xf0] sm:$0xff]
                  %4487 = vst [vmem:[%s4425 + $0x170] sm:$0xff] %v4486
                  %v4488 = vld [vmem:[%s4424 + $0xf8] sm:$0xff]
                  %4489 = vst [vmem:[%s4425 + $0x178] sm:$0xff] %v4488
                $region64: #{fractin2_pallas_nchw.1} parent=58 // loop_footer
                  %s4423 = sadd.s32 1, %s4419
                $region65: #{fractin2_pallas_nchw.1} parent=58 // loop_footer_branch
                  %4418 = sbr.rel target = $region61
                $region66: #{fractin2_pallas_nchw.1} parent=58 // loop_exit
                  _
              $region59: #{fractin2_pallas_nchw.1} parent=43 // pred_fallthru
                _
              // Predicated region
              $region67: #{fractin2_pallas_nchw.1} parent=43 // pred_check
                _
              $region68: #{fractin2_pallas_nchw.1} parent=43 // pred_check_branch
                %4491 = sbr.rel target = $region70
              $region69: #{fractin2_pallas_nchw.1} parent=43 // pred_region
                _
              $region70: #{fractin2_pallas_nchw.1} parent=43 // pred_fallthru
                _
            $region44: #{fractin2_pallas_nchw.1} parent=39 // pred_fallthru
              _
            // Predicated region
            $region45: #{fractin2_pallas_nchw.1} parent=39 // pred_check
              _
            $region46: #{fractin2_pallas_nchw.1} parent=39 // pred_check_branch
              %4342 = sbr.rel target = $region48
            $region47: #{fractin2_pallas_nchw.1} parent=39 // pred_region
              loop: start=0, step=1, limit=1
              $region49: #{fractin2_pallas_nchw.1} parent=47 // loop_pre_header
                _
              $region50: #{fractin2_pallas_nchw.1} parent=47 // loop_header
                %s4345 = sphi 0, %s4349
                %p4346 = scmp.ge.s32.totalorder %s4345, 1
                %s4350 = sphi %s4330, %s4330
                %s4351 = sphi %s4336, %s4336
              $region51: #{fractin2_pallas_nchw.1} parent=47 // loop_header_branch
                %4348 = sbr.rel (%p4346) target = $region55
              $region52: #{fractin2_pallas_nchw.1} parent=47 // loop_body
                %v4352 = vld [vmem:[%s4350] sm:$0xff]
                %4353 = vst [vmem:[%s4351] sm:$0xff] %v4352
                %v4354 = vld [vmem:[%s4350 + $0x8] sm:$0xff]
                %4355 = vst [vmem:[%s4351 + $0x8] sm:$0xff] %v4354
                %v4356 = vld [vmem:[%s4350 + $0x10] sm:$0xff]
                %4357 = vst [vmem:[%s4351 + $0x10] sm:$0xff] %v4356
                %v4358 = vld [vmem:[%s4350 + $0x18] sm:$0xff]
                %4359 = vst [vmem:[%s4351 + $0x18] sm:$0xff] %v4358
                %v4360 = vld [vmem:[%s4350 + $0x20] sm:$0xff]
                %4361 = vst [vmem:[%s4351 + $0x20] sm:$0xff] %v4360
                %v4362 = vld [vmem:[%s4350 + $0x28] sm:$0xff]
                %4363 = vst [vmem:[%s4351 + $0x28] sm:$0xff] %v4362
                %v4364 = vld [vmem:[%s4350 + $0x30] sm:$0xff]
                %4365 = vst [vmem:[%s4351 + $0x30] sm:$0xff] %v4364
                %v4366 = vld [vmem:[%s4350 + $0x38] sm:$0xff]
                %4367 = vst [vmem:[%s4351 + $0x38] sm:$0xff] %v4366
                %v4368 = vld [vmem:[%s4350 + $0x40] sm:$0xff]
                %4369 = vst [vmem:[%s4351 + $0x40] sm:$0xff] %v4368
                %v4370 = vld [vmem:[%s4350 + $0x48] sm:$0xff]
                %4371 = vst [vmem:[%s4351 + $0x48] sm:$0xff] %v4370
                %v4372 = vld [vmem:[%s4350 + $0x50] sm:$0xff]
                %4373 = vst [vmem:[%s4351 + $0x50] sm:$0xff] %v4372
                %v4374 = vld [vmem:[%s4350 + $0x58] sm:$0xff]
                %4375 = vst [vmem:[%s4351 + $0x58] sm:$0xff] %v4374
                %v4376 = vld [vmem:[%s4350 + $0x60] sm:$0xff]
                %4377 = vst [vmem:[%s4351 + $0x60] sm:$0xff] %v4376
                %v4378 = vld [vmem:[%s4350 + $0x68] sm:$0xff]
                %4379 = vst [vmem:[%s4351 + $0x68] sm:$0xff] %v4378
                %v4380 = vld [vmem:[%s4350 + $0x70] sm:$0xff]
                %4381 = vst [vmem:[%s4351 + $0x70] sm:$0xff] %v4380
                %v4382 = vld [vmem:[%s4350 + $0x78] sm:$0xff]
                %4383 = vst [vmem:[%s4351 + $0x78] sm:$0xff] %v4382
                %v4384 = vld [vmem:[%s4350 + $0x80] sm:$0xff]
                %4385 = vst [vmem:[%s4351 + $0x100] sm:$0xff] %v4384
                %v4386 = vld [vmem:[%s4350 + $0x88] sm:$0xff]
                %4387 = vst [vmem:[%s4351 + $0x108] sm:$0xff] %v4386
                %v4388 = vld [vmem:[%s4350 + $0x90] sm:$0xff]
                %4389 = vst [vmem:[%s4351 + $0x110] sm:$0xff] %v4388
                %v4390 = vld [vmem:[%s4350 + $0x98] sm:$0xff]
                %4391 = vst [vmem:[%s4351 + $0x118] sm:$0xff] %v4390
                %v4392 = vld [vmem:[%s4350 + $0xa0] sm:$0xff]
                %4393 = vst [vmem:[%s4351 + $0x120] sm:$0xff] %v4392
                %v4394 = vld [vmem:[%s4350 + $0xa8] sm:$0xff]
                %4395 = vst [vmem:[%s4351 + $0x128] sm:$0xff] %v4394
                %v4396 = vld [vmem:[%s4350 + $0xb0] sm:$0xff]
                %4397 = vst [vmem:[%s4351 + $0x130] sm:$0xff] %v4396
                %v4398 = vld [vmem:[%s4350 + $0xb8] sm:$0xff]
                %4399 = vst [vmem:[%s4351 + $0x138] sm:$0xff] %v4398
                %v4400 = vld [vmem:[%s4350 + $0xc0] sm:$0xff]
                %4401 = vst [vmem:[%s4351 + $0x140] sm:$0xff] %v4400
                %v4402 = vld [vmem:[%s4350 + $0xc8] sm:$0xff]
                %4403 = vst [vmem:[%s4351 + $0x148] sm:$0xff] %v4402
                %v4404 = vld [vmem:[%s4350 + $0xd0] sm:$0xff]
                %4405 = vst [vmem:[%s4351 + $0x150] sm:$0xff] %v4404
                %v4406 = vld [vmem:[%s4350 + $0xd8] sm:$0xff]
                %4407 = vst [vmem:[%s4351 + $0x158] sm:$0xff] %v4406
                %v4408 = vld [vmem:[%s4350 + $0xe0] sm:$0xff]
                %4409 = vst [vmem:[%s4351 + $0x160] sm:$0xff] %v4408
                %v4410 = vld [vmem:[%s4350 + $0xe8] sm:$0xff]
                %4411 = vst [vmem:[%s4351 + $0x168] sm:$0xff] %v4410
                %v4412 = vld [vmem:[%s4350 + $0xf0] sm:$0xff]
                %4413 = vst [vmem:[%s4351 + $0x170] sm:$0xff] %v4412
                %v4414 = vld [vmem:[%s4350 + $0xf8] sm:$0xff]
                %4415 = vst [vmem:[%s4351 + $0x178] sm:$0xff] %v4414
              $region53: #{fractin2_pallas_nchw.1} parent=47 // loop_footer
                %s4349 = sadd.s32 1, %s4345
              $region54: #{fractin2_pallas_nchw.1} parent=47 // loop_footer_branch
                %4344 = sbr.rel target = $region50
              $region55: #{fractin2_pallas_nchw.1} parent=47 // loop_exit
                _
            $region48: #{fractin2_pallas_nchw.1} parent=39 // pred_fallthru
              _
          $region40: #{fractin2_pallas_nchw.1} parent=35 // pred_fallthru
            _
          %4492 = vnop
        $region36: #{fractin2_pallas_nchw.1} parent=31 // pred_fallthru
          _
      $region32: #{fractin2_pallas_nchw.1} parent=5 // pred_fallthru
        _
      %p4493 = scmp.le.s32.totalorder 2, %s9
      // Predicated region
      $region71: #{fractin2_pallas_nchw.1} parent=5 // pred_check
        %p4494 = pneg %p4493
      $region72: #{fractin2_pallas_nchw.1} parent=5 // pred_check_branch
        %4496 = sbr.rel (%p4494) target = $region74
      $region73: #{fractin2_pallas_nchw.1} parent=5 // pred_region
        %s4497 = ssub.s32 %s9, 2
        // Predicated region
        $region75: #{fractin2_pallas_nchw.1} parent=73 // pred_check
          %p4498 = pneg %p106
        $region76: #{fractin2_pallas_nchw.1} parent=73 // pred_check_branch
          %4500 = sbr.rel (%p4498) target = $region78
        $region77: #{fractin2_pallas_nchw.1} parent=73 // pred_region
          %s4501 = sand.u32 %s91, 1
          %s4502 = sand.u32 %s91, 1
          %s4503 = smul.addr %s4502, 256
          %s4504 = scalar_lea.vmem [#allocation2], %s4503
        $region78: #{fractin2_pallas_nchw.1} parent=73 // pred_fallthru
          _
      $region74: #{fractin2_pallas_nchw.1} parent=5 // pred_fallthru
        _
    $region6: #{fractin2_pallas_nchw.1} parent=1 // loop_footer
      %s13 = sadd.s32 1, %s9
    $region7: #{fractin2_pallas_nchw.1} parent=1 // loop_footer_branch
      %8 = sbr.rel target = $region3
    $region8: #{fractin2_pallas_nchw.1} parent=1 // loop_exit
      _

</llo_original>
